<compile_context>
chip_gen: v7x
topology: tpu7x:2x2x1
jax: 0.10.0
libtpu: 0.0.40
codegen_flags: <defaults>
</compile_context>

<pallas_src>
import math

import jax
import jax.numpy as jnp
from jax import lax
from jax.experimental import pallas as pl
from jax.experimental.pallas import tpu as pltpu

# Small shapes consistent with the module.
B, L, D = 2, 8, 32            # batch, seq len, hid_dim
N_HEADS = 4
HEAD_DIM = D // N_HEADS
PF_DIM = 64
INV_SCALE = 1.0 / math.sqrt(HEAD_DIM)
LN_EPS = 1e-5
BT = B * L                    # total tokens

LANES = 128                   # lane-dense packed parameter width
# Row offsets inside the packed weight buffer (each slab starts at lane 0).
R_QKV1, R_KV2, R_Q2 = 0, D, 2 * D
R_O1, R_O2, R_F1, R_F2 = 3 * D, 4 * D, 5 * D, 6 * D
W_ROWS = 6 * D + PF_DIM       # 256
B_ROWS = 16                   # 13 rows used, padded to a full sublane tile


def _layer_norm(x, gamma, beta):
    mean = jnp.mean(x, axis=-1, keepdims=True)
    var = jnp.mean((x - mean) ** 2, axis=-1, keepdims=True)
    return (x - mean) * lax.rsqrt(var + LN_EPS) * gamma + beta


def decoder_layer_kernel(trg_ref, enc_ref, tmask_ref, smask_ref, w_ref, b_ref,
                         out_ref, attn_ref):
    x = trg_ref[...]                       # [BT, D]
    enc = enc_ref[...]                     # [BT, D]
    neg_t = tmask_ref[...] == 0.0          # [B, 1, L] key mask (self-attn)
    neg_s = smask_ref[...] == 0.0          # [B, 1, L] key mask (cross-attn)

    # 128-lane-dense parameter rows -> unmasked full-lane loads for the big RHS.
    w_qkv1 = w_ref[R_QKV1:R_QKV1 + D, :]   # [D, 128] cols 0:96 = Q|K|V (self)
    w_kv2 = w_ref[R_KV2:R_KV2 + D, :]      # [D, 128] cols 0:64 = K|V (cross)
    w_q2 = w_ref[R_Q2:R_Q2 + D, :]         # [D, 128] cols 0:32
    w_f1 = w_ref[R_F1:R_F1 + D, :]         # [D, 128] cols 0:64
    w_f2 = w_ref[R_F2:R_F2 + PF_DIM, 0:D]  # [PF_DIM, D]

    def brow(i):                           # full 128-wide bias row
        return b_ref[i:i + 1, :]

    def brow_d(i):                         # D-wide bias / LN row
        return b_ref[i:i + 1, 0:D]

    b_qkv1, b_kv2, b_q2, b_f1 = brow(0), brow(1), brow(2), brow(5)
    b_o1, b_o2, b_f2 = brow_d(3), brow_d(4), brow_d(6)
    g1, be1 = brow_d(7), brow_d(8)
    g2, be2 = brow_d(9), brow_d(10)
    g3, be3 = brow_d(11), brow_d(12)

    def mha(q_slab, k_slab, v_slab, q_off, k_off, v_off, neg_mask, wo_row, bo):
        # q/k/v slabs: [B, L, 128]; per-head Q/K/V are 8-lane column blocks.
        # B lives in the dot_general batch dim (no per-batch Python unroll);
        # heads stay lane blocks, so no sublane<->lane transposes / stacks.
        e, vh = [], []
        for h in range(N_HEADS):
            c = h * HEAD_DIM
            qh = q_slab[:, :, q_off + c:q_off + c + HEAD_DIM]      # [B, L, hd]
            kh = k_slab[:, :, k_off + c:k_off + c + HEAD_DIM]
            vh.append(v_slab[:, :, v_off + c:v_off + c + HEAD_DIM])
            eh = lax.dot_general(qh, kh, (((2,), (2,)), ((0,), (0,))),
                                 preferred_element_type=jnp.float32) * INV_SCALE
            # masked_fill(mask == 0, -inf): a fully masked key gives NaN exactly
            # like torch does (softmax is over heads); callers keep keys visible.
            e.append(jnp.where(neg_mask, -jnp.inf, eh))            # [B, L, L]
        # Softmax over the HEAD axis (faithful to the torch module, dim=1):
        # elementwise across per-head tiles + one EUP reciprocal.
        m = e[0]
        for eh in e[1:]:
            m = jnp.maximum(m, eh)
        p = [jnp.exp(eh - m) for eh in e]
        denom = p[0]
        for ph in p[1:]:
            denom = denom + ph
        inv = pl.reciprocal(denom, approx=True)
        attn = [ph * inv for ph in p]
        # Head merge folded into the output projection:
        #   concat_h(ctx_h) @ Wo == sum_h ctx_h @ Wo[h*hd:(h+1)*hd, :]
        out = None
        for h in range(N_HEADS):
            ctx = lax.dot_general(attn[h], vh[h], (((2,), (1,)), ((0,), (0,))),
                                  preferred_element_type=jnp.float32)  # [B,L,hd]
            wo_h = w_ref[wo_row + h * HEAD_DIM:wo_row + (h + 1) * HEAD_DIM, 0:D]
            part = lax.dot_general(ctx, wo_h, (((2,), (0,)), ((), ())),
                                   preferred_element_type=jnp.float32)  # [B,L,D]
            out = part if out is None else out + part
        return out.reshape(BT, D) + bo, attn

    # ---- fused projections over all B*L tokens (full-lane RHS, one MXU op) ----
    qkv1 = (jnp.dot(x, w_qkv1, preferred_element_type=jnp.float32)
            + b_qkv1).reshape(B, L, LANES)
    kv2 = (jnp.dot(enc, w_kv2, preferred_element_type=jnp.float32)
           + b_kv2).reshape(B, L, LANES)

    # ---- self attention (trg, trg, trg, trg_mask) ----
    # TODO(synk): dropout layers are identity at inference; no RNG/training path.
    a1, _ = mha(qkv1, qkv1, qkv1, 0, D, 2 * D, neg_t, R_O1, b_o1)
    t1 = _layer_norm(x + a1, g1, be1)

    # ---- encoder (cross) attention (t1, enc_src, enc_src, src_mask) ----
    q2 = (jnp.dot(t1, w_q2, preferred_element_type=jnp.float32)
          + b_q2).reshape(B, L, LANES)
    a2, attn2 = mha(q2, kv2, kv2, 0, 0, D, neg_s, R_O2, b_o2)
    t2 = _layer_norm(t1 + a2, g2, be2)
    attn_ref[...] = jnp.stack(attn2, axis=1)                       # [B, H, L, L]

    # ---- position-wise feed-forward ----
    hid = jnp.maximum(jnp.dot(t2, w_f1, preferred_element_type=jnp.float32)
                      + b_f1, 0.0)                                 # [BT, 128]
    ffn = jnp.dot(hid[:, 0:PF_DIM], w_f2,
                  preferred_element_type=jnp.float32) + b_f2       # [BT, D]
    out_ref[...] = _layer_norm(t2 + ffn, g3, be3)


@jax.jit
def decoder_layer(trg, enc_src, trg_mask, src_mask, w_pack, b_pack):
    # Single invocation, whole-array blocks in VMEM (< 0.3 MiB footprint).
    out_flat, attention = pl.pallas_call(
        decoder_layer_kernel,
        out_shape=(jax.ShapeDtypeStruct((BT, D), jnp.float32),
                   jax.ShapeDtypeStruct((B, N_HEADS, L, L), jnp.float32)),
        compiler_params=pltpu.CompilerParams(vmem_limit_bytes=4 * 1024 * 1024),
    )(trg.reshape(BT, D), enc_src.reshape(BT, D), trg_mask, src_mask,
      w_pack, b_pack)
    return out_flat.reshape(B, L, D), attention


def pack_params(params):
    """Row-pack all weights into one [256, 128] lane-dense buffer and all
    biases/LN params into one [16, 128] buffer (host-side layout plumbing)."""
    (wq1, bq1, wk1, bk1, wv1, bv1, wo1, bo1, g1, be1,
     wq2, bq2, wk2, bk2, wv2, bv2, wo2, bo2, g2, be2,
     w1, bf1, w2, bf2, g3, be3) = params

    w_pack = jnp.zeros((W_ROWS, LANES), jnp.float32)

    def put(buf, row, mat):
        r, c = mat.shape
        return buf.at[row:row + r, 0:c].set(mat)

    w_pack = put(w_pack, R_QKV1, jnp.concatenate([wq1, wk1, wv1], axis=1))
    w_pack = put(w_pack, R_KV2, jnp.concatenate([wk2, wv2], axis=1))
    w_pack = put(w_pack, R_Q2, wq2)
    w_pack = put(w_pack, R_O1, wo1)
    w_pack = put(w_pack, R_O2, wo2)
    w_pack = put(w_pack, R_F1, w1)
    w_pack = put(w_pack, R_F2, w2)

    rows = [jnp.concatenate([bq1, bk1, bv1]), jnp.concatenate([bk2, bv2]),
            bq2, bo1, bo2, bf1, bf2, g1, be1, g2, be2, g3, be3]
    b_pack = jnp.zeros((B_ROWS, LANES), jnp.float32)
    for i, r in enumerate(rows):
        b_pack = b_pack.at[i, 0:r.shape[0]].set(r)
    return w_pack, b_pack


def reference(trg, enc_src, trg_mask, src_mask, params):
    """Pure-JAX replica of the PyTorch DecoderLayer forward (eval mode)."""
    (wq1, bq1, wk1, bk1, wv1, bv1, wo1, bo1, g1, be1,
     wq2, bq2, wk2, bk2, wv2, bv2, wo2, bo2, g2, be2,
     w1, bf1, w2, bf2, g3, be3) = params

    def mha(q_in, k_in, v_in, mask, wq, bq, wk, bk, wv, bv, wo, bo):
        Q, K, V = q_in @ wq + bq, k_in @ wk + bk, v_in @ wv + bv

        def split(t):
            return t.reshape(B, L, N_HEADS, HEAD_DIM).transpose(0, 2, 1, 3)

        Qh, Kh, Vh = split(Q), split(K), split(V)
        energy = jnp.einsum('bhqd,bhkd->bhqk', Qh, Kh) / math.sqrt(HEAD_DIM)
        energy = jnp.where(mask[:, None, :, :] == 0, -jnp.inf, energy)
        attn = jax.nn.softmax(energy, axis=1)      # over heads, as in the torch code
        ctx = jnp.einsum('bhqk,bhkd->bhqd', attn, Vh)
        ctx = ctx.transpose(0, 2, 1, 3).reshape(B, L, D)
        return ctx @ wo + bo, attn

    a1, _ = mha(trg, trg, trg, trg_mask, wq1, bq1, wk1, bk1, wv1, bv1, wo1, bo1)
    t1 = _layer_norm(trg + a1, g1, be1)
    a2, attention = mha(t1, enc_src, enc_src, src_mask,
                        wq2, bq2, wk2, bk2, wv2, bv2, wo2, bo2)
    t2 = _layer_norm(t1 + a2, g2, be2)
    f = jnp.maximum(t2 @ w1 + bf1, 0.0) @ w2 + bf2
    return _layer_norm(t2 + f, g3, be3), attention


def init_params(key):
    def init_linear(k, fan_in, fan_out):
        kw, kb = jax.random.split(k)
        bound = 1.0 / math.sqrt(fan_in)
        w = jax.random.uniform(kw, (fan_in, fan_out), jnp.float32, -bound, bound)
        b = jax.random.uniform(kb, (fan_out,), jnp.float32, -bound, bound)
        return w, b

    ks = jax.random.split(key, 10)
    wq1, bq1 = init_linear(ks[0], D, D)
    wk1, bk1 = init_linear(ks[1], D, D)
    wv1, bv1 = init_linear(ks[2], D, D)
    wo1, bo1 = init_linear(ks[3], D, D)
    wq2, bq2 = init_linear(ks[4], D, D)
    wk2, bk2 = init_linear(ks[5], D, D)
    wv2, bv2 = init_linear(ks[6], D, D)
    wo2, bo2 = init_linear(ks[7], D, D)
    w1, bf1 = init_linear(ks[8], D, PF_DIM)
    w2, bf2 = init_linear(ks[9], PF_DIM, D)
    ones = jnp.ones((D,), jnp.float32)
    zeros = jnp.zeros((D,), jnp.float32)
    return (wq1, bq1, wk1, bk1, wv1, bv1, wo1, bo1, ones, zeros,
            wq2, bq2, wk2, bk2, wv2, bv2, wo2, bo2, ones, zeros,
            w1, bf1, w2, bf2, ones, zeros)


if __name__ == "__main__":
    root = jax.random.PRNGKey(0)
    kp, kt, ke = jax.random.split(root, 3)
    params = init_params(kp)
    trg = jax.random.normal(kt, (B, L, D), jnp.float32)
    enc_src = jax.random.normal(ke, (B, L, D), jnp.float32)
    # All-ones masks: with the module's softmax over the HEAD axis, any fully
    # masked key position would produce NaN (same as PyTorch), so keep visible.
    trg_mask = jnp.ones((B, 1, L), jnp.float32)
    src_mask = jnp.ones((B, 1, L), jnp.float32)

    w_pack, b_pack = pack_params(params)
    out, attn = decoder_layer(trg, enc_src, trg_mask, src_mask, w_pack, b_pack)
    jax.block_until_ready((out, attn))

    ref_out, ref_attn = reference(trg, enc_src, trg_mask, src_mask, params)
    assert out.shape == (B, L, D) and attn.shape == (B, N_HEADS, L, L)
    assert jnp.allclose(out, ref_out, atol=1e-2, rtol=1e-2), \
        float(jnp.max(jnp.abs(out - ref_out)))
    assert jnp.allclose(attn, ref_attn, atol=1e-2, rtol=1e-2), \
        float(jnp.max(jnp.abs(attn - ref_attn)))
    print("KERNEL_OK")
</pallas_src>

<mosaic_0001>
module attributes {stable_mosaic.version = 11 : i64} {
  func.func @decoder_layer_kernel(%arg0: memref<16x32xf32, #tpu.memory_space<vmem>>, %arg1: memref<16x32xf32, #tpu.memory_space<vmem>>, %arg2: memref<2x1x8xf32, #tpu.memory_space<vmem>>, %arg3: memref<2x1x8xf32, #tpu.memory_space<vmem>>, %arg4: memref<256x128xf32, #tpu.memory_space<vmem>>, %arg5: memref<16x128xf32, #tpu.memory_space<vmem>>, %arg6: memref<16x32xf32, #tpu.memory_space<vmem>>, %arg7: memref<2x4x8x8xf32, #tpu.memory_space<vmem>>) attributes {dimension_semantics = [], scalar_prefetch = 0 : i64, scratch_operands = 0 : i64, tpu.core_type = #tpu.core_type<tc>} {
    %c0 = arith.constant 0 : index
    %c0_0 = arith.constant 0 : index
    %0 = vector.load %arg0[%c0, %c0_0] : memref<16x32xf32, #tpu.memory_space<vmem>>, vector<16x32xf32>
    %c0_1 = arith.constant 0 : index
    %c0_2 = arith.constant 0 : index
    %1 = vector.load %arg1[%c0_1, %c0_2] : memref<16x32xf32, #tpu.memory_space<vmem>>, vector<16x32xf32>
    %c0_3 = arith.constant 0 : index
    %c0_4 = arith.constant 0 : index
    %c0_5 = arith.constant 0 : index
    %2 = vector.load %arg2[%c0_3, %c0_4, %c0_5] : memref<2x1x8xf32, #tpu.memory_space<vmem>>, vector<2x1x8xf32>
    %cst = arith.constant 0.000000e+00 : f32
    %3 = vector.broadcast %cst : f32 to vector<2x1x8xf32>
    %4 = arith.cmpf oeq, %2, %3 : vector<2x1x8xf32>
    %c0_6 = arith.constant 0 : index
    %c0_7 = arith.constant 0 : index
    %c0_8 = arith.constant 0 : index
    %5 = vector.load %arg3[%c0_6, %c0_7, %c0_8] : memref<2x1x8xf32, #tpu.memory_space<vmem>>, vector<2x1x8xf32>
    %cst_9 = arith.constant 0.000000e+00 : f32
    %6 = vector.broadcast %cst_9 : f32 to vector<2x1x8xf32>
    %7 = arith.cmpf oeq, %5, %6 : vector<2x1x8xf32>
    %c0_10 = arith.constant 0 : index
    %c0_11 = arith.constant 0 : index
    %8 = vector.load %arg4[%c0_10, %c0_11] : memref<256x128xf32, #tpu.memory_space<vmem>>, vector<32x128xf32>
    %c32 = arith.constant 32 : index
    %c0_12 = arith.constant 0 : index
    %9 = vector.load %arg4[%c32, %c0_12] : memref<256x128xf32, #tpu.memory_space<vmem>>, vector<32x128xf32>
    %c64 = arith.constant 64 : index
    %c0_13 = arith.constant 0 : index
    %10 = vector.load %arg4[%c64, %c0_13] : memref<256x128xf32, #tpu.memory_space<vmem>>, vector<32x128xf32>
    %c160 = arith.constant 160 : index
    %c0_14 = arith.constant 0 : index
    %11 = vector.load %arg4[%c160, %c0_14] : memref<256x128xf32, #tpu.memory_space<vmem>>, vector<32x128xf32>
    %c192 = arith.constant 192 : index
    %c0_15 = arith.constant 0 : index
    %12 = vector.load %arg4[%c192, %c0_15] : memref<256x128xf32, #tpu.memory_space<vmem>>, vector<64x32xf32>
    %c0_16 = arith.constant 0 : index
    %c0_17 = arith.constant 0 : index
    %13 = vector.load %arg5[%c0_16, %c0_17] : memref<16x128xf32, #tpu.memory_space<vmem>>, vector<1x128xf32>
    %c1 = arith.constant 1 : index
    %c0_18 = arith.constant 0 : index
    %14 = vector.load %arg5[%c1, %c0_18] : memref<16x128xf32, #tpu.memory_space<vmem>>, vector<1x128xf32>
    %c2 = arith.constant 2 : index
    %c0_19 = arith.constant 0 : index
    %15 = vector.load %arg5[%c2, %c0_19] : memref<16x128xf32, #tpu.memory_space<vmem>>, vector<1x128xf32>
    %c5 = arith.constant 5 : index
    %c0_20 = arith.constant 0 : index
    %16 = vector.load %arg5[%c5, %c0_20] : memref<16x128xf32, #tpu.memory_space<vmem>>, vector<1x128xf32>
    %c3 = arith.constant 3 : index
    %c0_21 = arith.constant 0 : index
    %17 = vector.load %arg5[%c3, %c0_21] : memref<16x128xf32, #tpu.memory_space<vmem>>, vector<1x32xf32>
    %c4 = arith.constant 4 : index
    %c0_22 = arith.constant 0 : index
    %18 = vector.load %arg5[%c4, %c0_22] : memref<16x128xf32, #tpu.memory_space<vmem>>, vector<1x32xf32>
    %c6 = arith.constant 6 : index
    %c0_23 = arith.constant 0 : index
    %19 = vector.load %arg5[%c6, %c0_23] : memref<16x128xf32, #tpu.memory_space<vmem>>, vector<1x32xf32>
    %c7 = arith.constant 7 : index
    %c0_24 = arith.constant 0 : index
    %20 = vector.load %arg5[%c7, %c0_24] : memref<16x128xf32, #tpu.memory_space<vmem>>, vector<1x32xf32>
    %c8 = arith.constant 8 : index
    %c0_25 = arith.constant 0 : index
    %21 = vector.load %arg5[%c8, %c0_25] : memref<16x128xf32, #tpu.memory_space<vmem>>, vector<1x32xf32>
    %c9 = arith.constant 9 : index
    %c0_26 = arith.constant 0 : index
    %22 = vector.load %arg5[%c9, %c0_26] : memref<16x128xf32, #tpu.memory_space<vmem>>, vector<1x32xf32>
    %c10 = arith.constant 10 : index
    %c0_27 = arith.constant 0 : index
    %23 = vector.load %arg5[%c10, %c0_27] : memref<16x128xf32, #tpu.memory_space<vmem>>, vector<1x32xf32>
    %c11 = arith.constant 11 : index
    %c0_28 = arith.constant 0 : index
    %24 = vector.load %arg5[%c11, %c0_28] : memref<16x128xf32, #tpu.memory_space<vmem>>, vector<1x32xf32>
    %c12 = arith.constant 12 : index
    %c0_29 = arith.constant 0 : index
    %25 = vector.load %arg5[%c12, %c0_29] : memref<16x128xf32, #tpu.memory_space<vmem>>, vector<1x32xf32>
    %cst_30 = arith.constant dense<0.000000e+00> : vector<16x128xf32>
    %26 = tpu.matmul %0, %8, %cst_30 {dimension_numbers = #tpu.dot_dimension_numbers<[1], [0], [0], [1], [0, 0, 1, 1], [], []>} : vector<16x32xf32>, vector<32x128xf32>, vector<16x128xf32> -> vector<16x128xf32>
    %27 = vector.broadcast %13 : vector<1x128xf32> to vector<16x128xf32>
    %28 = arith.addf %26, %27 : vector<16x128xf32>
    %29 = vector.shape_cast %28 : vector<16x128xf32> to vector<2x8x128xf32>
    %cst_31 = arith.constant dense<0.000000e+00> : vector<16x128xf32>
    %30 = tpu.matmul %1, %9, %cst_31 {dimension_numbers = #tpu.dot_dimension_numbers<[1], [0], [0], [1], [0, 0, 1, 1], [], []>} : vector<16x32xf32>, vector<32x128xf32>, vector<16x128xf32> -> vector<16x128xf32>
    %31 = vector.broadcast %14 : vector<1x128xf32> to vector<16x128xf32>
    %32 = arith.addf %30, %31 : vector<16x128xf32>
    %33 = vector.shape_cast %32 : vector<16x128xf32> to vector<2x8x128xf32>
    %34 = vector.extract_strided_slice %29 {offsets = [0, 0, 0], sizes = [2, 8, 8], strides = [1, 1, 1]} : vector<2x8x128xf32> to vector<2x8x8xf32>
    %35 = vector.extract_strided_slice %29 {offsets = [0, 0, 32], sizes = [2, 8, 8], strides = [1, 1, 1]} : vector<2x8x128xf32> to vector<2x8x8xf32>
    %36 = vector.extract_strided_slice %29 {offsets = [0, 0, 64], sizes = [2, 8, 8], strides = [1, 1, 1]} : vector<2x8x128xf32> to vector<2x8x8xf32>
    %cst_32 = arith.constant dense<0.000000e+00> : vector<2x8x8xf32>
    %37 = tpu.matmul %34, %35, %cst_32 {dimension_numbers = #tpu.dot_dimension_numbers<[2], [2], [1], [1], [0, 0, 0, 1, 1, 1], [0], [0]>} : vector<2x8x8xf32>, vector<2x8x8xf32>, vector<2x8x8xf32> -> vector<2x8x8xf32>
    %cst_33 = arith.constant 0.353553385 : f32
    %38 = vector.broadcast %cst_33 : f32 to vector<2x8x8xf32>
    %39 = arith.mulf %37, %38 : vector<2x8x8xf32>
    %cst_34 = arith.constant 0xFF800000 : f32
    %40 = vector.shape_cast %4 : vector<2x1x8xi1> to vector<2x1x8xi1>
    %41 = vector.broadcast %40 : vector<2x1x8xi1> to vector<2x8x8xi1>
    %42 = vector.broadcast %cst_34 : f32 to vector<2x8x8xf32>
    %43 = arith.select %41, %42, %39 : vector<2x8x8xi1>, vector<2x8x8xf32>
    %44 = vector.extract_strided_slice %29 {offsets = [0, 0, 8], sizes = [2, 8, 8], strides = [1, 1, 1]} : vector<2x8x128xf32> to vector<2x8x8xf32>
    %45 = vector.extract_strided_slice %29 {offsets = [0, 0, 40], sizes = [2, 8, 8], strides = [1, 1, 1]} : vector<2x8x128xf32> to vector<2x8x8xf32>
    %46 = vector.extract_strided_slice %29 {offsets = [0, 0, 72], sizes = [2, 8, 8], strides = [1, 1, 1]} : vector<2x8x128xf32> to vector<2x8x8xf32>
    %cst_35 = arith.constant dense<0.000000e+00> : vector<2x8x8xf32>
    %47 = tpu.matmul %44, %45, %cst_35 {dimension_numbers = #tpu.dot_dimension_numbers<[2], [2], [1], [1], [0, 0, 0, 1, 1, 1], [0], [0]>} : vector<2x8x8xf32>, vector<2x8x8xf32>, vector<2x8x8xf32> -> vector<2x8x8xf32>
    %cst_36 = arith.constant 0.353553385 : f32
    %48 = vector.broadcast %cst_36 : f32 to vector<2x8x8xf32>
    %49 = arith.mulf %47, %48 : vector<2x8x8xf32>
    %cst_37 = arith.constant 0xFF800000 : f32
    %50 = vector.shape_cast %4 : vector<2x1x8xi1> to vector<2x1x8xi1>
    %51 = vector.broadcast %50 : vector<2x1x8xi1> to vector<2x8x8xi1>
    %52 = vector.broadcast %cst_37 : f32 to vector<2x8x8xf32>
    %53 = arith.select %51, %52, %49 : vector<2x8x8xi1>, vector<2x8x8xf32>
    %54 = vector.extract_strided_slice %29 {offsets = [0, 0, 16], sizes = [2, 8, 8], strides = [1, 1, 1]} : vector<2x8x128xf32> to vector<2x8x8xf32>
    %55 = vector.extract_strided_slice %29 {offsets = [0, 0, 48], sizes = [2, 8, 8], strides = [1, 1, 1]} : vector<2x8x128xf32> to vector<2x8x8xf32>
    %56 = vector.extract_strided_slice %29 {offsets = [0, 0, 80], sizes = [2, 8, 8], strides = [1, 1, 1]} : vector<2x8x128xf32> to vector<2x8x8xf32>
    %cst_38 = arith.constant dense<0.000000e+00> : vector<2x8x8xf32>
    %57 = tpu.matmul %54, %55, %cst_38 {dimension_numbers = #tpu.dot_dimension_numbers<[2], [2], [1], [1], [0, 0, 0, 1, 1, 1], [0], [0]>} : vector<2x8x8xf32>, vector<2x8x8xf32>, vector<2x8x8xf32> -> vector<2x8x8xf32>
    %cst_39 = arith.constant 0.353553385 : f32
    %58 = vector.broadcast %cst_39 : f32 to vector<2x8x8xf32>
    %59 = arith.mulf %57, %58 : vector<2x8x8xf32>
    %cst_40 = arith.constant 0xFF800000 : f32
    %60 = vector.shape_cast %4 : vector<2x1x8xi1> to vector<2x1x8xi1>
    %61 = vector.broadcast %60 : vector<2x1x8xi1> to vector<2x8x8xi1>
    %62 = vector.broadcast %cst_40 : f32 to vector<2x8x8xf32>
    %63 = arith.select %61, %62, %59 : vector<2x8x8xi1>, vector<2x8x8xf32>
    %64 = vector.extract_strided_slice %29 {offsets = [0, 0, 24], sizes = [2, 8, 8], strides = [1, 1, 1]} : vector<2x8x128xf32> to vector<2x8x8xf32>
    %65 = vector.extract_strided_slice %29 {offsets = [0, 0, 56], sizes = [2, 8, 8], strides = [1, 1, 1]} : vector<2x8x128xf32> to vector<2x8x8xf32>
    %66 = vector.extract_strided_slice %29 {offsets = [0, 0, 88], sizes = [2, 8, 8], strides = [1, 1, 1]} : vector<2x8x128xf32> to vector<2x8x8xf32>
    %cst_41 = arith.constant dense<0.000000e+00> : vector<2x8x8xf32>
    %67 = tpu.matmul %64, %65, %cst_41 {dimension_numbers = #tpu.dot_dimension_numbers<[2], [2], [1], [1], [0, 0, 0, 1, 1, 1], [0], [0]>} : vector<2x8x8xf32>, vector<2x8x8xf32>, vector<2x8x8xf32> -> vector<2x8x8xf32>
    %cst_42 = arith.constant 0.353553385 : f32
    %68 = vector.broadcast %cst_42 : f32 to vector<2x8x8xf32>
    %69 = arith.mulf %67, %68 : vector<2x8x8xf32>
    %cst_43 = arith.constant 0xFF800000 : f32
    %70 = vector.shape_cast %4 : vector<2x1x8xi1> to vector<2x1x8xi1>
    %71 = vector.broadcast %70 : vector<2x1x8xi1> to vector<2x8x8xi1>
    %72 = vector.broadcast %cst_43 : f32 to vector<2x8x8xf32>
    %73 = arith.select %71, %72, %69 : vector<2x8x8xi1>, vector<2x8x8xf32>
    %74 = arith.maximumf %43, %53 : vector<2x8x8xf32>
    %75 = arith.maximumf %74, %63 : vector<2x8x8xf32>
    %76 = arith.maximumf %75, %73 : vector<2x8x8xf32>
    %77 = arith.subf %43, %76 : vector<2x8x8xf32>
    %78 = math.exp %77 : vector<2x8x8xf32>
    %79 = arith.subf %53, %76 : vector<2x8x8xf32>
    %80 = math.exp %79 : vector<2x8x8xf32>
    %81 = arith.subf %63, %76 : vector<2x8x8xf32>
    %82 = math.exp %81 : vector<2x8x8xf32>
    %83 = arith.subf %73, %76 : vector<2x8x8xf32>
    %84 = math.exp %83 : vector<2x8x8xf32>
    %85 = arith.addf %78, %80 : vector<2x8x8xf32>
    %86 = arith.addf %85, %82 : vector<2x8x8xf32>
    %87 = arith.addf %86, %84 : vector<2x8x8xf32>
    %88 = tpu.reciprocal %87 {approx = true} : vector<2x8x8xf32> -> vector<2x8x8xf32>
    %89 = arith.mulf %78, %88 : vector<2x8x8xf32>
    %90 = arith.mulf %80, %88 : vector<2x8x8xf32>
    %91 = arith.mulf %82, %88 : vector<2x8x8xf32>
    %92 = arith.mulf %84, %88 : vector<2x8x8xf32>
    %cst_44 = arith.constant dense<0.000000e+00> : vector<2x8x8xf32>
    %93 = tpu.matmul %89, %36, %cst_44 {dimension_numbers = #tpu.dot_dimension_numbers<[2], [1], [1], [2], [0, 0, 0, 1, 1, 2], [0], [0]>} : vector<2x8x8xf32>, vector<2x8x8xf32>, vector<2x8x8xf32> -> vector<2x8x8xf32>
    %c96 = arith.constant 96 : index
    %c0_45 = arith.constant 0 : index
    %94 = vector.load %arg4[%c96, %c0_45] : memref<256x128xf32, #tpu.memory_space<vmem>>, vector<8x32xf32>
    %cst_46 = arith.constant dense<0.000000e+00> : vector<2x8x32xf32>
    %95 = tpu.matmul %93, %94, %cst_46 {dimension_numbers = #tpu.dot_dimension_numbers<[2], [0], [0, 1], [1], [0, 0, 0, 1, 1, 1], [], []>} : vector<2x8x8xf32>, vector<8x32xf32>, vector<2x8x32xf32> -> vector<2x8x32xf32>
    %cst_47 = arith.constant dense<0.000000e+00> : vector<2x8x8xf32>
    %96 = tpu.matmul %90, %46, %cst_47 {dimension_numbers = #tpu.dot_dimension_numbers<[2], [1], [1], [2], [0, 0, 0, 1, 1, 2], [0], [0]>} : vector<2x8x8xf32>, vector<2x8x8xf32>, vector<2x8x8xf32> -> vector<2x8x8xf32>
    %c104 = arith.constant 104 : index
    %c0_48 = arith.constant 0 : index
    %97 = vector.load %arg4[%c104, %c0_48] : memref<256x128xf32, #tpu.memory_space<vmem>>, vector<8x32xf32>
    %cst_49 = arith.constant dense<0.000000e+00> : vector<2x8x32xf32>
    %98 = tpu.matmul %96, %97, %cst_49 {dimension_numbers = #tpu.dot_dimension_numbers<[2], [0], [0, 1], [1], [0, 0, 0, 1, 1, 1], [], []>} : vector<2x8x8xf32>, vector<8x32xf32>, vector<2x8x32xf32> -> vector<2x8x32xf32>
    %99 = arith.addf %95, %98 : vector<2x8x32xf32>
    %cst_50 = arith.constant dense<0.000000e+00> : vector<2x8x8xf32>
    %100 = tpu.matmul %91, %56, %cst_50 {dimension_numbers = #tpu.dot_dimension_numbers<[2], [1], [1], [2], [0, 0, 0, 1, 1, 2], [0], [0]>} : vector<2x8x8xf32>, vector<2x8x8xf32>, vector<2x8x8xf32> -> vector<2x8x8xf32>
    %c112 = arith.constant 112 : index
    %c0_51 = arith.constant 0 : index
    %101 = vector.load %arg4[%c112, %c0_51] : memref<256x128xf32, #tpu.memory_space<vmem>>, vector<8x32xf32>
    %cst_52 = arith.constant dense<0.000000e+00> : vector<2x8x32xf32>
    %102 = tpu.matmul %100, %101, %cst_52 {dimension_numbers = #tpu.dot_dimension_numbers<[2], [0], [0, 1], [1], [0, 0, 0, 1, 1, 1], [], []>} : vector<2x8x8xf32>, vector<8x32xf32>, vector<2x8x32xf32> -> vector<2x8x32xf32>
    %103 = arith.addf %99, %102 : vector<2x8x32xf32>
    %cst_53 = arith.constant dense<0.000000e+00> : vector<2x8x8xf32>
    %104 = tpu.matmul %92, %66, %cst_53 {dimension_numbers = #tpu.dot_dimension_numbers<[2], [1], [1], [2], [0, 0, 0, 1, 1, 2], [0], [0]>} : vector<2x8x8xf32>, vector<2x8x8xf32>, vector<2x8x8xf32> -> vector<2x8x8xf32>
    %c120 = arith.constant 120 : index
    %c0_54 = arith.constant 0 : index
    %105 = vector.load %arg4[%c120, %c0_54] : memref<256x128xf32, #tpu.memory_space<vmem>>, vector<8x32xf32>
    %cst_55 = arith.constant dense<0.000000e+00> : vector<2x8x32xf32>
    %106 = tpu.matmul %104, %105, %cst_55 {dimension_numbers = #tpu.dot_dimension_numbers<[2], [0], [0, 1], [1], [0, 0, 0, 1, 1, 1], [], []>} : vector<2x8x8xf32>, vector<8x32xf32>, vector<2x8x32xf32> -> vector<2x8x32xf32>
    %107 = arith.addf %103, %106 : vector<2x8x32xf32>
    %108 = vector.shape_cast %107 : vector<2x8x32xf32> to vector<16x32xf32>
    %109 = vector.broadcast %17 : vector<1x32xf32> to vector<16x32xf32>
    %110 = arith.addf %108, %109 : vector<16x32xf32>
    %111 = arith.addf %0, %110 : vector<16x32xf32>
    %cst_56 = arith.constant dense<0.000000e+00> : vector<16xf32>
    %112 = vector.multi_reduction <add>, %111, %cst_56 [1] : vector<16x32xf32> to vector<16xf32>
    %113 = vector.shape_cast %112 : vector<16xf32> to vector<16x1xf32>
    %cst_57 = arith.constant 3.200000e+01 : f32
    %114 = vector.broadcast %cst_57 : f32 to vector<16x1xf32>
    %115 = arith.divf %113, %114 : vector<16x1xf32>
    %116 = vector.broadcast %115 : vector<16x1xf32> to vector<16x32xf32>
    %117 = arith.subf %111, %116 : vector<16x32xf32>
    %118 = arith.mulf %117, %117 : vector<16x32xf32>
    %cst_58 = arith.constant dense<0.000000e+00> : vector<16xf32>
    %119 = vector.multi_reduction <add>, %118, %cst_58 [1] : vector<16x32xf32> to vector<16xf32>
    %120 = vector.shape_cast %119 : vector<16xf32> to vector<16x1xf32>
    %cst_59 = arith.constant 3.200000e+01 : f32
    %121 = vector.broadcast %cst_59 : f32 to vector<16x1xf32>
    %122 = arith.divf %120, %121 : vector<16x1xf32>
    %123 = vector.broadcast %115 : vector<16x1xf32> to vector<16x32xf32>
    %124 = arith.subf %111, %123 : vector<16x32xf32>
    %cst_60 = arith.constant 9.99999974E-6 : f32
    %125 = vector.broadcast %cst_60 : f32 to vector<16x1xf32>
    %126 = arith.addf %122, %125 : vector<16x1xf32>
    %127 = math.rsqrt %126 : vector<16x1xf32>
    %128 = vector.broadcast %127 : vector<16x1xf32> to vector<16x32xf32>
    %129 = arith.mulf %124, %128 : vector<16x32xf32>
    %130 = vector.broadcast %20 : vector<1x32xf32> to vector<16x32xf32>
    %131 = arith.mulf %129, %130 : vector<16x32xf32>
    %132 = vector.broadcast %21 : vector<1x32xf32> to vector<16x32xf32>
    %133 = arith.addf %131, %132 : vector<16x32xf32>
    %cst_61 = arith.constant dense<0.000000e+00> : vector<16x128xf32>
    %134 = tpu.matmul %133, %10, %cst_61 {dimension_numbers = #tpu.dot_dimension_numbers<[1], [0], [0], [1], [0, 0, 1, 1], [], []>} : vector<16x32xf32>, vector<32x128xf32>, vector<16x128xf32> -> vector<16x128xf32>
    %135 = vector.broadcast %15 : vector<1x128xf32> to vector<16x128xf32>
    %136 = arith.addf %134, %135 : vector<16x128xf32>
    %137 = vector.shape_cast %136 : vector<16x128xf32> to vector<2x8x128xf32>
    %138 = vector.extract_strided_slice %137 {offsets = [0, 0, 0], sizes = [2, 8, 8], strides = [1, 1, 1]} : vector<2x8x128xf32> to vector<2x8x8xf32>
    %139 = vector.extract_strided_slice %33 {offsets = [0, 0, 0], sizes = [2, 8, 8], strides = [1, 1, 1]} : vector<2x8x128xf32> to vector<2x8x8xf32>
    %140 = vector.extract_strided_slice %33 {offsets = [0, 0, 32], sizes = [2, 8, 8], strides = [1, 1, 1]} : vector<2x8x128xf32> to vector<2x8x8xf32>
    %cst_62 = arith.constant dense<0.000000e+00> : vector<2x8x8xf32>
    %141 = tpu.matmul %138, %139, %cst_62 {dimension_numbers = #tpu.dot_dimension_numbers<[2], [2], [1], [1], [0, 0, 0, 1, 1, 1], [0], [0]>} : vector<2x8x8xf32>, vector<2x8x8xf32>, vector<2x8x8xf32> -> vector<2x8x8xf32>
    %cst_63 = arith.constant 0.353553385 : f32
    %142 = vector.broadcast %cst_63 : f32 to vector<2x8x8xf32>
    %143 = arith.mulf %141, %142 : vector<2x8x8xf32>
    %cst_64 = arith.constant 0xFF800000 : f32
    %144 = vector.shape_cast %7 : vector<2x1x8xi1> to vector<2x1x8xi1>
    %145 = vector.broadcast %144 : vector<2x1x8xi1> to vector<2x8x8xi1>
    %146 = vector.broadcast %cst_64 : f32 to vector<2x8x8xf32>
    %147 = arith.select %145, %146, %143 : vector<2x8x8xi1>, vector<2x8x8xf32>
    %148 = vector.extract_strided_slice %137 {offsets = [0, 0, 8], sizes = [2, 8, 8], strides = [1, 1, 1]} : vector<2x8x128xf32> to vector<2x8x8xf32>
    %149 = vector.extract_strided_slice %33 {offsets = [0, 0, 8], sizes = [2, 8, 8], strides = [1, 1, 1]} : vector<2x8x128xf32> to vector<2x8x8xf32>
    %150 = vector.extract_strided_slice %33 {offsets = [0, 0, 40], sizes = [2, 8, 8], strides = [1, 1, 1]} : vector<2x8x128xf32> to vector<2x8x8xf32>
    %cst_65 = arith.constant dense<0.000000e+00> : vector<2x8x8xf32>
    %151 = tpu.matmul %148, %149, %cst_65 {dimension_numbers = #tpu.dot_dimension_numbers<[2], [2], [1], [1], [0, 0, 0, 1, 1, 1], [0], [0]>} : vector<2x8x8xf32>, vector<2x8x8xf32>, vector<2x8x8xf32> -> vector<2x8x8xf32>
    %cst_66 = arith.constant 0.353553385 : f32
    %152 = vector.broadcast %cst_66 : f32 to vector<2x8x8xf32>
    %153 = arith.mulf %151, %152 : vector<2x8x8xf32>
    %cst_67 = arith.constant 0xFF800000 : f32
    %154 = vector.shape_cast %7 : vector<2x1x8xi1> to vector<2x1x8xi1>
    %155 = vector.broadcast %154 : vector<2x1x8xi1> to vector<2x8x8xi1>
    %156 = vector.broadcast %cst_67 : f32 to vector<2x8x8xf32>
    %157 = arith.select %155, %156, %153 : vector<2x8x8xi1>, vector<2x8x8xf32>
    %158 = vector.extract_strided_slice %137 {offsets = [0, 0, 16], sizes = [2, 8, 8], strides = [1, 1, 1]} : vector<2x8x128xf32> to vector<2x8x8xf32>
    %159 = vector.extract_strided_slice %33 {offsets = [0, 0, 16], sizes = [2, 8, 8], strides = [1, 1, 1]} : vector<2x8x128xf32> to vector<2x8x8xf32>
    %160 = vector.extract_strided_slice %33 {offsets = [0, 0, 48], sizes = [2, 8, 8], strides = [1, 1, 1]} : vector<2x8x128xf32> to vector<2x8x8xf32>
    %cst_68 = arith.constant dense<0.000000e+00> : vector<2x8x8xf32>
    %161 = tpu.matmul %158, %159, %cst_68 {dimension_numbers = #tpu.dot_dimension_numbers<[2], [2], [1], [1], [0, 0, 0, 1, 1, 1], [0], [0]>} : vector<2x8x8xf32>, vector<2x8x8xf32>, vector<2x8x8xf32> -> vector<2x8x8xf32>
    %cst_69 = arith.constant 0.353553385 : f32
    %162 = vector.broadcast %cst_69 : f32 to vector<2x8x8xf32>
    %163 = arith.mulf %161, %162 : vector<2x8x8xf32>
    %cst_70 = arith.constant 0xFF800000 : f32
    %164 = vector.shape_cast %7 : vector<2x1x8xi1> to vector<2x1x8xi1>
    %165 = vector.broadcast %164 : vector<2x1x8xi1> to vector<2x8x8xi1>
    %166 = vector.broadcast %cst_70 : f32 to vector<2x8x8xf32>
    %167 = arith.select %165, %166, %163 : vector<2x8x8xi1>, vector<2x8x8xf32>
    %168 = vector.extract_strided_slice %137 {offsets = [0, 0, 24], sizes = [2, 8, 8], strides = [1, 1, 1]} : vector<2x8x128xf32> to vector<2x8x8xf32>
    %169 = vector.extract_strided_slice %33 {offsets = [0, 0, 24], sizes = [2, 8, 8], strides = [1, 1, 1]} : vector<2x8x128xf32> to vector<2x8x8xf32>
    %170 = vector.extract_strided_slice %33 {offsets = [0, 0, 56], sizes = [2, 8, 8], strides = [1, 1, 1]} : vector<2x8x128xf32> to vector<2x8x8xf32>
    %cst_71 = arith.constant dense<0.000000e+00> : vector<2x8x8xf32>
    %171 = tpu.matmul %168, %169, %cst_71 {dimension_numbers = #tpu.dot_dimension_numbers<[2], [2], [1], [1], [0, 0, 0, 1, 1, 1], [0], [0]>} : vector<2x8x8xf32>, vector<2x8x8xf32>, vector<2x8x8xf32> -> vector<2x8x8xf32>
    %cst_72 = arith.constant 0.353553385 : f32
    %172 = vector.broadcast %cst_72 : f32 to vector<2x8x8xf32>
    %173 = arith.mulf %171, %172 : vector<2x8x8xf32>
    %cst_73 = arith.constant 0xFF800000 : f32
    %174 = vector.shape_cast %7 : vector<2x1x8xi1> to vector<2x1x8xi1>
    %175 = vector.broadcast %174 : vector<2x1x8xi1> to vector<2x8x8xi1>
    %176 = vector.broadcast %cst_73 : f32 to vector<2x8x8xf32>
    %177 = arith.select %175, %176, %173 : vector<2x8x8xi1>, vector<2x8x8xf32>
    %178 = arith.maximumf %147, %157 : vector<2x8x8xf32>
    %179 = arith.maximumf %178, %167 : vector<2x8x8xf32>
    %180 = arith.maximumf %179, %177 : vector<2x8x8xf32>
    %181 = arith.subf %147, %180 : vector<2x8x8xf32>
    %182 = math.exp %181 : vector<2x8x8xf32>
    %183 = arith.subf %157, %180 : vector<2x8x8xf32>
    %184 = math.exp %183 : vector<2x8x8xf32>
    %185 = arith.subf %167, %180 : vector<2x8x8xf32>
    %186 = math.exp %185 : vector<2x8x8xf32>
    %187 = arith.subf %177, %180 : vector<2x8x8xf32>
    %188 = math.exp %187 : vector<2x8x8xf32>
    %189 = arith.addf %182, %184 : vector<2x8x8xf32>
    %190 = arith.addf %189, %186 : vector<2x8x8xf32>
    %191 = arith.addf %190, %188 : vector<2x8x8xf32>
    %192 = tpu.reciprocal %191 {approx = true} : vector<2x8x8xf32> -> vector<2x8x8xf32>
    %193 = arith.mulf %182, %192 : vector<2x8x8xf32>
    %194 = arith.mulf %184, %192 : vector<2x8x8xf32>
    %195 = arith.mulf %186, %192 : vector<2x8x8xf32>
    %196 = arith.mulf %188, %192 : vector<2x8x8xf32>
    %cst_74 = arith.constant dense<0.000000e+00> : vector<2x8x8xf32>
    %197 = tpu.matmul %193, %140, %cst_74 {dimension_numbers = #tpu.dot_dimension_numbers<[2], [1], [1], [2], [0, 0, 0, 1, 1, 2], [0], [0]>} : vector<2x8x8xf32>, vector<2x8x8xf32>, vector<2x8x8xf32> -> vector<2x8x8xf32>
    %c128 = arith.constant 128 : index
    %c0_75 = arith.constant 0 : index
    %198 = vector.load %arg4[%c128, %c0_75] : memref<256x128xf32, #tpu.memory_space<vmem>>, vector<8x32xf32>
    %cst_76 = arith.constant dense<0.000000e+00> : vector<2x8x32xf32>
    %199 = tpu.matmul %197, %198, %cst_76 {dimension_numbers = #tpu.dot_dimension_numbers<[2], [0], [0, 1], [1], [0, 0, 0, 1, 1, 1], [], []>} : vector<2x8x8xf32>, vector<8x32xf32>, vector<2x8x32xf32> -> vector<2x8x32xf32>
    %cst_77 = arith.constant dense<0.000000e+00> : vector<2x8x8xf32>
    %200 = tpu.matmul %194, %150, %cst_77 {dimension_numbers = #tpu.dot_dimension_numbers<[2], [1], [1], [2], [0, 0, 0, 1, 1, 2], [0], [0]>} : vector<2x8x8xf32>, vector<2x8x8xf32>, vector<2x8x8xf32> -> vector<2x8x8xf32>
    %c136 = arith.constant 136 : index
    %c0_78 = arith.constant 0 : index
    %201 = vector.load %arg4[%c136, %c0_78] : memref<256x128xf32, #tpu.memory_space<vmem>>, vector<8x32xf32>
    %cst_79 = arith.constant dense<0.000000e+00> : vector<2x8x32xf32>
    %202 = tpu.matmul %200, %201, %cst_79 {dimension_numbers = #tpu.dot_dimension_numbers<[2], [0], [0, 1], [1], [0, 0, 0, 1, 1, 1], [], []>} : vector<2x8x8xf32>, vector<8x32xf32>, vector<2x8x32xf32> -> vector<2x8x32xf32>
    %203 = arith.addf %199, %202 : vector<2x8x32xf32>
    %cst_80 = arith.constant dense<0.000000e+00> : vector<2x8x8xf32>
    %204 = tpu.matmul %195, %160, %cst_80 {dimension_numbers = #tpu.dot_dimension_numbers<[2], [1], [1], [2], [0, 0, 0, 1, 1, 2], [0], [0]>} : vector<2x8x8xf32>, vector<2x8x8xf32>, vector<2x8x8xf32> -> vector<2x8x8xf32>
    %c144 = arith.constant 144 : index
    %c0_81 = arith.constant 0 : index
    %205 = vector.load %arg4[%c144, %c0_81] : memref<256x128xf32, #tpu.memory_space<vmem>>, vector<8x32xf32>
    %cst_82 = arith.constant dense<0.000000e+00> : vector<2x8x32xf32>
    %206 = tpu.matmul %204, %205, %cst_82 {dimension_numbers = #tpu.dot_dimension_numbers<[2], [0], [0, 1], [1], [0, 0, 0, 1, 1, 1], [], []>} : vector<2x8x8xf32>, vector<8x32xf32>, vector<2x8x32xf32> -> vector<2x8x32xf32>
    %207 = arith.addf %203, %206 : vector<2x8x32xf32>
    %cst_83 = arith.constant dense<0.000000e+00> : vector<2x8x8xf32>
    %208 = tpu.matmul %196, %170, %cst_83 {dimension_numbers = #tpu.dot_dimension_numbers<[2], [1], [1], [2], [0, 0, 0, 1, 1, 2], [0], [0]>} : vector<2x8x8xf32>, vector<2x8x8xf32>, vector<2x8x8xf32> -> vector<2x8x8xf32>
    %c152 = arith.constant 152 : index
    %c0_84 = arith.constant 0 : index
    %209 = vector.load %arg4[%c152, %c0_84] : memref<256x128xf32, #tpu.memory_space<vmem>>, vector<8x32xf32>
    %cst_85 = arith.constant dense<0.000000e+00> : vector<2x8x32xf32>
    %210 = tpu.matmul %208, %209, %cst_85 {dimension_numbers = #tpu.dot_dimension_numbers<[2], [0], [0, 1], [1], [0, 0, 0, 1, 1, 1], [], []>} : vector<2x8x8xf32>, vector<8x32xf32>, vector<2x8x32xf32> -> vector<2x8x32xf32>
    %211 = arith.addf %207, %210 : vector<2x8x32xf32>
    %212 = vector.shape_cast %211 : vector<2x8x32xf32> to vector<16x32xf32>
    %213 = vector.broadcast %18 : vector<1x32xf32> to vector<16x32xf32>
    %214 = arith.addf %212, %213 : vector<16x32xf32>
    %215 = arith.addf %133, %214 : vector<16x32xf32>
    %cst_86 = arith.constant dense<0.000000e+00> : vector<16xf32>
    %216 = vector.multi_reduction <add>, %215, %cst_86 [1] : vector<16x32xf32> to vector<16xf32>
    %217 = vector.shape_cast %216 : vector<16xf32> to vector<16x1xf32>
    %cst_87 = arith.constant 3.200000e+01 : f32
    %218 = vector.broadcast %cst_87 : f32 to vector<16x1xf32>
    %219 = arith.divf %217, %218 : vector<16x1xf32>
    %220 = vector.broadcast %219 : vector<16x1xf32> to vector<16x32xf32>
    %221 = arith.subf %215, %220 : vector<16x32xf32>
    %222 = arith.mulf %221, %221 : vector<16x32xf32>
    %cst_88 = arith.constant dense<0.000000e+00> : vector<16xf32>
    %223 = vector.multi_reduction <add>, %222, %cst_88 [1] : vector<16x32xf32> to vector<16xf32>
    %224 = vector.shape_cast %223 : vector<16xf32> to vector<16x1xf32>
    %cst_89 = arith.constant 3.200000e+01 : f32
    %225 = vector.broadcast %cst_89 : f32 to vector<16x1xf32>
    %226 = arith.divf %224, %225 : vector<16x1xf32>
    %227 = vector.broadcast %219 : vector<16x1xf32> to vector<16x32xf32>
    %228 = arith.subf %215, %227 : vector<16x32xf32>
    %cst_90 = arith.constant 9.99999974E-6 : f32
    %229 = vector.broadcast %cst_90 : f32 to vector<16x1xf32>
    %230 = arith.addf %226, %229 : vector<16x1xf32>
    %231 = math.rsqrt %230 : vector<16x1xf32>
    %232 = vector.broadcast %231 : vector<16x1xf32> to vector<16x32xf32>
    %233 = arith.mulf %228, %232 : vector<16x32xf32>
    %234 = vector.broadcast %22 : vector<1x32xf32> to vector<16x32xf32>
    %235 = arith.mulf %233, %234 : vector<16x32xf32>
    %236 = vector.broadcast %23 : vector<1x32xf32> to vector<16x32xf32>
    %237 = arith.addf %235, %236 : vector<16x32xf32>
    %238 = vector.shape_cast %193 : vector<2x8x8xf32> to vector<2x1x8x8xf32>
    %239 = vector.shape_cast %194 : vector<2x8x8xf32> to vector<2x1x8x8xf32>
    %240 = vector.shape_cast %195 : vector<2x8x8xf32> to vector<2x1x8x8xf32>
    %241 = vector.shape_cast %196 : vector<2x8x8xf32> to vector<2x1x8x8xf32>
    %242 = tpu.concatenate %238, %239, %240, %241 in 1 : vector<2x1x8x8xf32>, vector<2x1x8x8xf32>, vector<2x1x8x8xf32>, vector<2x1x8x8xf32> -> vector<2x4x8x8xf32>
    %c0_91 = arith.constant 0 : index
    %c0_92 = arith.constant 0 : index
    %c0_93 = arith.constant 0 : index
    %c0_94 = arith.constant 0 : index
    %243 = vector.load %arg7[%c0_91, %c0_92, %c0_93, %c0_94] : memref<2x4x8x8xf32, #tpu.memory_space<vmem>>, vector<2x4x8x8xf32>
    tpu.vector_store %arg7[%c0_91, %c0_92, %c0_93, %c0_94], %242 {strides = array<i32>} : memref<2x4x8x8xf32, #tpu.memory_space<vmem>>, vector<2x4x8x8xf32>,
    %cst_95 = arith.constant dense<0.000000e+00> : vector<16x128xf32>
    %244 = tpu.matmul %237, %11, %cst_95 {dimension_numbers = #tpu.dot_dimension_numbers<[1], [0], [0], [1], [0, 0, 1, 1], [], []>} : vector<16x32xf32>, vector<32x128xf32>, vector<16x128xf32> -> vector<16x128xf32>
    %245 = vector.broadcast %16 : vector<1x128xf32> to vector<16x128xf32>
    %246 = arith.addf %244, %245 : vector<16x128xf32>
    %cst_96 = arith.constant 0.000000e+00 : f32
    %247 = vector.broadcast %cst_96 : f32 to vector<16x128xf32>
    %248 = arith.maximumf %246, %247 : vector<16x128xf32>
    %249 = vector.extract_strided_slice %248 {offsets = [0, 0], sizes = [16, 64], strides = [1, 1]} : vector<16x128xf32> to vector<16x64xf32>
    %cst_97 = arith.constant dense<0.000000e+00> : vector<16x32xf32>
    %250 = tpu.matmul %249, %12, %cst_97 {dimension_numbers = #tpu.dot_dimension_numbers<[1], [0], [0], [1], [0, 0, 1, 1], [], []>} : vector<16x64xf32>, vector<64x32xf32>, vector<16x32xf32> -> vector<16x32xf32>
    %251 = vector.broadcast %19 : vector<1x32xf32> to vector<16x32xf32>
    %252 = arith.addf %250, %251 : vector<16x32xf32>
    %253 = arith.addf %237, %252 : vector<16x32xf32>
    %cst_98 = arith.constant dense<0.000000e+00> : vector<16xf32>
    %254 = vector.multi_reduction <add>, %253, %cst_98 [1] : vector<16x32xf32> to vector<16xf32>
    %255 = vector.shape_cast %254 : vector<16xf32> to vector<16x1xf32>
    %cst_99 = arith.constant 3.200000e+01 : f32
    %256 = vector.broadcast %cst_99 : f32 to vector<16x1xf32>
    %257 = arith.divf %255, %256 : vector<16x1xf32>
    %258 = vector.broadcast %257 : vector<16x1xf32> to vector<16x32xf32>
    %259 = arith.subf %253, %258 : vector<16x32xf32>
    %260 = arith.mulf %259, %259 : vector<16x32xf32>
    %cst_100 = arith.constant dense<0.000000e+00> : vector<16xf32>
    %261 = vector.multi_reduction <add>, %260, %cst_100 [1] : vector<16x32xf32> to vector<16xf32>
    %262 = vector.shape_cast %261 : vector<16xf32> to vector<16x1xf32>
    %cst_101 = arith.constant 3.200000e+01 : f32
    %263 = vector.broadcast %cst_101 : f32 to vector<16x1xf32>
    %264 = arith.divf %262, %263 : vector<16x1xf32>
    %265 = vector.broadcast %257 : vector<16x1xf32> to vector<16x32xf32>
    %266 = arith.subf %253, %265 : vector<16x32xf32>
    %cst_102 = arith.constant 9.99999974E-6 : f32
    %267 = vector.broadcast %cst_102 : f32 to vector<16x1xf32>
    %268 = arith.addf %264, %267 : vector<16x1xf32>
    %269 = math.rsqrt %268 : vector<16x1xf32>
    %270 = vector.broadcast %269 : vector<16x1xf32> to vector<16x32xf32>
    %271 = arith.mulf %266, %270 : vector<16x32xf32>
    %272 = vector.broadcast %24 : vector<1x32xf32> to vector<16x32xf32>
    %273 = arith.mulf %271, %272 : vector<16x32xf32>
    %274 = vector.broadcast %25 : vector<1x32xf32> to vector<16x32xf32>
    %275 = arith.addf %273, %274 : vector<16x32xf32>
    %c0_103 = arith.constant 0 : index
    %c0_104 = arith.constant 0 : index
    %276 = vector.load %arg6[%c0_103, %c0_104] : memref<16x32xf32, #tpu.memory_space<vmem>>, vector<16x32xf32>
    tpu.vector_store %arg6[%c0_103, %c0_104], %275 {strides = array<i32>} : memref<16x32xf32, #tpu.memory_space<vmem>>, vector<16x32xf32>,
    return
  }
}

</mosaic_0001>

<llo_original>
// kernel: decoder_layer.1
$region0: #{decoder_layer.1}
  #allocation0 [shape = 'u32[]', space=smem, size = 0x4, offset = 0x4, fixed_abs, tag = 'smem constant byte address 0x4 - core index']
  #allocation1 [shape = 'u32[144,128]{1,0:T(1,128)}', space=vmem, size = 0x12000, scoped, tag = 'internal scratch']
  %s0 = inlined_call_operand.hbm [shape: f32[16,32], index: 0, kind: input, shape index: {}]
  %s1 = inlined_call_operand.hbm [shape: f32[16,32], index: 1, kind: input, shape index: {}]
  %s2 = inlined_call_operand.vmem [shape: f32[2,1,8], index: 2, kind: input, shape index: {}]
  %s3 = inlined_call_operand.vmem [shape: f32[2,1,8], index: 3, kind: input, shape index: {}]
  %s4 = inlined_call_operand.hbm [shape: f32[256,128], index: 4, kind: input, shape index: {}]
  %s5 = inlined_call_operand.vmem [shape: f32[16,128], index: 5, kind: input, shape index: {}]
  %s6 = inlined_call_operand.hbm [shape: f32[16,32], index: 6, kind: output, shape index: {0}]
  %s7 = inlined_call_operand.hbm [shape: f32[2,4,8,8], index: 7, kind: output, shape index: {1}]
  %8 = xla_tuple %s6, %s7
  %s9 = sld [smem:[#allocation0]]
  $region54: #{decoder_layer.1} parent=0
    _
  %s11 = ssub.s32 1, %s9
  %s12 = scalar_select 0, %s11, %s9
  $region1: #{decoder_layer.1} parent=0
    #allocation2 [shape = 'u8[8192]{0}', space=vmem, size = 0x2000, scoped, tag = 'input window, operand 0, single buffered']
    #allocation3 [shape = 's32[1]{0}', space=sflag, size = 0x4, scoped, tag = 'scoped memory for decoder_layer.1']
    #allocation4 [shape = 's32[1]{0}', space=sflag, size = 0x4, scoped, tag = 'scoped memory for decoder_layer.1']
    #allocation5 [shape = 'u8[8192]{0}', space=vmem, size = 0x2000, scoped, tag = 'input window, operand 1, single buffered']
    #allocation6 [shape = 's32[1]{0}', space=sflag, size = 0x4, scoped, tag = 'scoped memory for decoder_layer.1']
    #allocation7 [shape = 'u8[131072]{0}', space=vmem, size = 0x20000, scoped, tag = 'input window, operand 4, single buffered']
    #allocation8 [shape = 'u8[8192]{0}', space=vmem, size = 0x2000, scoped, tag = 'output window, operand 0, single buffered']
    #allocation9 [shape = 'u8[32768]{0}', space=vmem, size = 0x8000, scoped, tag = 'output window, operand 1, single buffered']
    #allocation10 [shape = 's32[1]{0}', space=sflag, size = 0x4, scoped, tag = 'scoped memory for decoder_layer.1']
    %13 = vsyncpa [#allocation3], 0
    %14 = vsyncpa [#allocation6], 0
    %15 = vsyncpa [#allocation4], 0
    %16 = vsyncpa [#allocation10], 0
    // Predicated region
    $region2: #{decoder_layer.1} parent=1 // pred_check
      _
    $region3: #{decoder_layer.1} parent=1 // pred_check_branch
      %18 = sbr.rel (0) target = $region5
    $region4: #{decoder_layer.1} parent=1 // pred_region
      %s20 = ssub.s32 256, 256
      %21 = vsyncadd [#allocation3], %s20
      %s22 = sshll.u32 [#allocation2], 4
      %s23 = int_to_ptr.vmem [resolvable:$true] %s22
      %28 = dma.hbm_to_vmem [thread:$0]  %s0, 256, %s23, [#allocation3], 128, 128, 8
    $region5: #{decoder_layer.1} parent=1 // pred_fallthru
      _
    // Predicated region
    $region6: #{decoder_layer.1} parent=1 // pred_check
      _
    $region7: #{decoder_layer.1} parent=1 // pred_check_branch
      %30 = sbr.rel (0) target = $region9
    $region8: #{decoder_layer.1} parent=1 // pred_region
      %s32 = ssub.s32 256, 256
      %33 = vsyncadd [#allocation6], %s32
      %s34 = sshll.u32 [#allocation5], 4
      %s35 = int_to_ptr.vmem [resolvable:$true] %s34
      %40 = dma.hbm_to_vmem [thread:$0]  %s1, 256, %s35, [#allocation6], 128, 128, 8
    $region9: #{decoder_layer.1} parent=1 // pred_fallthru
      _
    // Predicated region
    $region10: #{decoder_layer.1} parent=1 // pred_check
      _
    $region11: #{decoder_layer.1} parent=1 // pred_check_branch
      %42 = sbr.rel (0) target = $region13
    $region12: #{decoder_layer.1} parent=1 // pred_region
      _
    $region13: #{decoder_layer.1} parent=1 // pred_fallthru
      _
    // Predicated region
    $region14: #{decoder_layer.1} parent=1 // pred_check
      _
    $region15: #{decoder_layer.1} parent=1 // pred_check_branch
      %44 = sbr.rel (0) target = $region17
    $region16: #{decoder_layer.1} parent=1 // pred_region
      _
    $region17: #{decoder_layer.1} parent=1 // pred_fallthru
      _
    // Predicated region
    $region18: #{decoder_layer.1} parent=1 // pred_check
      _
    $region19: #{decoder_layer.1} parent=1 // pred_check_branch
      %46 = sbr.rel (0) target = $region21
    $region20: #{decoder_layer.1} parent=1 // pred_region
      %s48 = ssub.s32 4096, 4096
      %49 = vsyncadd [#allocation6], %s48
      %s50 = sshll.u32 [#allocation7], 4
      %s51 = int_to_ptr.vmem [resolvable:$true] %s50
      %56 = dma.hbm_to_vmem [thread:$0]  %s4, 4096, %s51, [#allocation6], 128, 128, 8
    $region21: #{decoder_layer.1} parent=1 // pred_fallthru
      _
    // Predicated region
    $region22: #{decoder_layer.1} parent=1 // pred_check
      _
    $region23: #{decoder_layer.1} parent=1 // pred_check_branch
      %58 = sbr.rel (0) target = $region25
    $region24: #{decoder_layer.1} parent=1 // pred_region
      _
    $region25: #{decoder_layer.1} parent=1 // pred_fallthru
      _
    // Predicated region
    $region26: #{decoder_layer.1} parent=1 // pred_check
      _
    $region27: #{decoder_layer.1} parent=1 // pred_check_branch
      %60 = sbr.rel (0) target = $region29
    $region28: #{decoder_layer.1} parent=1 // pred_region
      %61 = dma.done [#allocation3], 256
    $region29: #{decoder_layer.1} parent=1 // pred_fallthru
      _
    // Predicated region
    $region30: #{decoder_layer.1} parent=1 // pred_check
      _
    $region31: #{decoder_layer.1} parent=1 // pred_check_branch
      %63 = sbr.rel (0) target = $region33
    $region32: #{decoder_layer.1} parent=1 // pred_region
      %64 = dma.done [#allocation6], 256
    $region33: #{decoder_layer.1} parent=1 // pred_fallthru
      _
    // Predicated region
    $region34: #{decoder_layer.1} parent=1 // pred_check
      _
    $region35: #{decoder_layer.1} parent=1 // pred_check_branch
      %66 = sbr.rel (0) target = $region37
    $region36: #{decoder_layer.1} parent=1 // pred_region
      %67 = dma.done [#allocation6], 4096
    $region37: #{decoder_layer.1} parent=1 // pred_fallthru
      _
    %v68 = vld [vmem:[#allocation2] sm:$0xff]
    %v69 = vld [vmem:[#allocation2 + $0x8] sm:$0xff]
    %v70 = vld [vmem:[#allocation5] sm:$0xff]
    %v71 = vld [vmem:[#allocation5 + $0x8] sm:$0xff]
    %v72 = vld [vmem:[%s2] sm:$0x1]
    %v73 = vld [vmem:[%s2 + $0x1] sm:$0x1]
    %vm74 = vcmp.eq.f32.partialorder %v72, 0.0
    %vm75 = vcmp.eq.f32.partialorder %v73, 0.0
    %v76 = vld [vmem:[%s3] sm:$0x1]
    %v77 = vld [vmem:[%s3 + $0x1] sm:$0x1]
    %vm78 = vcmp.eq.f32.partialorder %v76, 0.0
    %vm79 = vcmp.eq.f32.partialorder %v77, 0.0
    %v80 = vld [vmem:[#allocation7] sm:$0xff]
    %v81 = vld [vmem:[#allocation7 + $0x8] sm:$0xff]
    %v82 = vld [vmem:[#allocation7 + $0x10] sm:$0xff]
    %v83 = vld [vmem:[#allocation7 + $0x18] sm:$0xff]
    %v84 = vld [vmem:[#allocation7 + $0x20] sm:$0xff]
    %v85 = vld [vmem:[#allocation7 + $0x28] sm:$0xff]
    %v86 = vld [vmem:[#allocation7 + $0x30] sm:$0xff]
    %v87 = vld [vmem:[#allocation7 + $0x38] sm:$0xff]
    %v88 = vld [vmem:[#allocation7 + $0x40] sm:$0xff]
    %v89 = vld [vmem:[#allocation7 + $0x48] sm:$0xff]
    %v90 = vld [vmem:[#allocation7 + $0x50] sm:$0xff]
    %v91 = vld [vmem:[#allocation7 + $0x58] sm:$0xff]
    %v92 = vld [vmem:[#allocation7 + $0xa0] sm:$0xff]
    %v93 = vld [vmem:[#allocation7 + $0xa8] sm:$0xff]
    %v94 = vld [vmem:[#allocation7 + $0xb0] sm:$0xff]
    %v95 = vld [vmem:[#allocation7 + $0xb8] sm:$0xff]
    %v96 = vld [vmem:[#allocation7 + $0xc0] sm:$0xff]
    %v97 = vld [vmem:[#allocation7 + $0xc8] sm:$0xff]
    %v98 = vld [vmem:[#allocation7 + $0xd0] sm:$0xff]
    %v99 = vld [vmem:[#allocation7 + $0xd8] sm:$0xff]
    %v100 = vld [vmem:[#allocation7 + $0xe0] sm:$0xff]
    %v101 = vld [vmem:[#allocation7 + $0xe8] sm:$0xff]
    %v102 = vld [vmem:[#allocation7 + $0xf0] sm:$0xff]
    %v103 = vld [vmem:[#allocation7 + $0xf8] sm:$0xff]
    %v104 = vld [vmem:[%s5] sm:$0x1]
    %v105 = vld [vmem:[%s5 + $0x1] sm:$0x1]
    %v106 = vld [vmem:[%s5 + $0x2] sm:$0x1]
    %v107 = vld [vmem:[%s5 + $0x5] sm:$0x1]
    %v108 = vld [vmem:[%s5 + $0x3] sm:$0x1]
    %v109 = vld [vmem:[%s5 + $0x4] sm:$0x1]
    %v110 = vld [vmem:[%s5 + $0x6] sm:$0x1]
    %v111 = vld [vmem:[%s5 + $0x7] sm:$0x1]
    %v112 = vld [vmem:[%s5 + $0x8] sm:$0x1]
    %v113 = vld [vmem:[%s5 + $0x9] sm:$0x1]
    %v114 = vld [vmem:[%s5 + $0xa] sm:$0x1]
    %v115 = vld [vmem:[%s5 + $0xb] sm:$0x1]
    %v116 = vld [vmem:[%s5 + $0xc] sm:$0x1]
    %v117 = vlaneseq
    %v118 = vshrl.u32 %v117, 7
    %v119 = vsub.s32 0, %v118
    %v120 = vrot.slane %v104, %v119
    %vm121 = vcmask 261120
    %v123 = vsel %vm121, %v68, 0
    %v126 = vsel %vm121, %v69, 0
    %128 = vmatprep.subr.mxu0 0.0
    %129 = vmatpush1.msra.mxu0 %v80
    %130 = vmatprep.subr.mxu0 0.0
    %131 = vmatpush1.msra.mxu0 %v81
    %132 = vmatprep.subr.mxu0 0.0
    %133 = vmatpush1.msra.mxu0 %v82
    %134 = vmatprep.subr.mxu0 0.0
    %135 = vmatpush1.msra.mxu0 %v83
    %136 = vmatprep.subr.mxu0 0.0
    %137 = vmatpush1.msra.mxu0 0.0
    %138 = vmatprep.subr.mxu0 0.0
    %139 = vmatpush1.msra.mxu0 0.0
    %140 = vmatprep.subr.mxu0 0.0
    %141 = vmatpush1.msra.mxu0 0.0
    %142 = vmatprep.subr.mxu0 0.0
    %143 = vmatpush1.msra.mxu0 0.0
    %144 = vmatprep.subr.mxu0 0.0
    %145 = vmatpush1.msra.mxu0 0.0
    %146 = vmatprep.subr.mxu0 0.0
    %147 = vmatpush1.msra.mxu0 0.0
    %148 = vmatprep.subr.mxu0 0.0
    %149 = vmatpush1.msra.mxu0 0.0
    %150 = vmatprep.subr.mxu0 0.0
    %151 = vmatpush1.msra.mxu0 0.0
    %152 = vmatprep.subr.mxu0 0.0
    %153 = vmatpush1.msra.mxu0 0.0
    %154 = vmatprep.subr.mxu0 0.0
    %155 = vmatpush1.msra.mxu0 0.0
    %156 = vmatprep.subr.mxu0 0.0
    %157 = vmatpush1.msra.mxu0 0.0
    %158 = vmatprep.subr.mxu0 0.0
    %159 = vmatpush1.msra.mxu0 0.0
    %160 = vmatprep.subr.mxu0 0.0
    %161 = vmatpush1.msra.mxu0 0.0
    %162 = vmatprep.subr.mxu0 0.0
    %163 = vmatpush1.msra.mxu0 0.0
    %164 = vmatprep.subr.mxu0 0.0
    %165 = vmatpush1.msra.mxu0 0.0
    %166 = vmatprep.subr.mxu0 0.0
    %167 = vmatpush1.msra.mxu0 0.0
    %168 = vmatprep.subr.mxu0 0.0
    %169 = vmatpush1.msra.mxu0 0.0
    %170 = vmatprep.subr.mxu0 0.0
    %171 = vmatpush1.msra.mxu0 0.0
    %172 = vmatprep.subr.mxu0 0.0
    %173 = vmatpush1.msra.mxu0 0.0
    %174 = vmatprep.subr.mxu0 0.0
    %175 = vmatpush1.msra.mxu0 0.0
    %176 = vmatprep.subr.mxu0 0.0
    %177 = vmatpush1.msra.mxu0 0.0
    %178 = vmatprep.subr.mxu0 0.0
    %179 = vmatpush1.msra.mxu0 0.0
    %180 = vmatprep.subr.mxu0 0.0
    %181 = vmatpush1.msra.mxu0 0.0
    %182 = vmatprep.subr.mxu0 0.0
    %183 = vmatpush1.msra.mxu0 0.0
    %184 = vmatprep.subr.mxu0 0.0
    %185 = vmatpush1.msra.mxu0 0.0
    %186 = vmatprep.subr.mxu0 0.0
    %187 = vmatpush1.msra.mxu0 0.0
    %188 = vmatprep.subr.mxu0 0.0
    %189 = vmatpush1.msra.mxu0 0.0
    %190 = vmatprep.subr.mxu0 0.0
    %191 = vmatpush1.msra.mxu0 0.0
    %192 = vmatprep.mubr.f32.mxu0 0.0
    %193 = vmatmul.mubr.f32.gmra.mrb[0].mxu0 %v123
    %v194 = vpop.f32.mrb[0].mxu0
    %v195 = vadd.f32 %v120, %v194
    %v196 = vpop.f32.mrb[0].mxu0
    %197 = vmatprep.mubr.f32.mxu0 0.0
    %198 = vmatmul.mubr.f32.gmra.mrb[0].mxu0 %v126
    %v199 = vpop.f32.mrb[0].mxu0
    %v200 = vadd.f32 %v120, %v199
    %v201 = vpop.f32.mrb[0].mxu0
    %202 = vdwg.mxu0
    %v203 = vlaneseq
    %v204 = vshrl.u32 %v203, 7
    %v205 = vsub.s32 0, %v204
    %v206 = vrot.slane %v105, %v205
    %v208 = vsel %vm121, %v70, 0
    %v211 = vsel %vm121, %v71, 0
    %213 = vmatprep.subr.mxu0 0.0
    %214 = vmatpush1.msra.mxu0 %v84
    %215 = vmatprep.subr.mxu0 0.0
    %216 = vmatpush1.msra.mxu0 %v85
    %217 = vmatprep.subr.mxu0 0.0
    %218 = vmatpush1.msra.mxu0 %v86
    %219 = vmatprep.subr.mxu0 0.0
    %220 = vmatpush1.msra.mxu0 %v87
    %221 = vmatprep.subr.mxu0 0.0
    %222 = vmatpush1.msra.mxu0 0.0
    %223 = vmatprep.subr.mxu0 0.0
    %224 = vmatpush1.msra.mxu0 0.0
    %225 = vmatprep.subr.mxu0 0.0
    %226 = vmatpush1.msra.mxu0 0.0
    %227 = vmatprep.subr.mxu0 0.0
    %228 = vmatpush1.msra.mxu0 0.0
    %229 = vmatprep.subr.mxu0 0.0
    %230 = vmatpush1.msra.mxu0 0.0
    %231 = vmatprep.subr.mxu0 0.0
    %232 = vmatpush1.msra.mxu0 0.0
    %233 = vmatprep.subr.mxu0 0.0
    %234 = vmatpush1.msra.mxu0 0.0
    %235 = vmatprep.subr.mxu0 0.0
    %236 = vmatpush1.msra.mxu0 0.0
    %237 = vmatprep.subr.mxu0 0.0
    %238 = vmatpush1.msra.mxu0 0.0
    %239 = vmatprep.subr.mxu0 0.0
    %240 = vmatpush1.msra.mxu0 0.0
    %241 = vmatprep.subr.mxu0 0.0
    %242 = vmatpush1.msra.mxu0 0.0
    %243 = vmatprep.subr.mxu0 0.0
    %244 = vmatpush1.msra.mxu0 0.0
    %245 = vmatprep.subr.mxu0 0.0
    %246 = vmatpush1.msra.mxu0 0.0
    %247 = vmatprep.subr.mxu0 0.0
    %248 = vmatpush1.msra.mxu0 0.0
    %249 = vmatprep.subr.mxu0 0.0
    %250 = vmatpush1.msra.mxu0 0.0
    %251 = vmatprep.subr.mxu0 0.0
    %252 = vmatpush1.msra.mxu0 0.0
    %253 = vmatprep.subr.mxu0 0.0
    %254 = vmatpush1.msra.mxu0 0.0
    %255 = vmatprep.subr.mxu0 0.0
    %256 = vmatpush1.msra.mxu0 0.0
    %257 = vmatprep.subr.mxu0 0.0
    %258 = vmatpush1.msra.mxu0 0.0
    %259 = vmatprep.subr.mxu0 0.0
    %260 = vmatpush1.msra.mxu0 0.0
    %261 = vmatprep.subr.mxu0 0.0
    %262 = vmatpush1.msra.mxu0 0.0
    %263 = vmatprep.subr.mxu0 0.0
    %264 = vmatpush1.msra.mxu0 0.0
    %265 = vmatprep.subr.mxu0 0.0
    %266 = vmatpush1.msra.mxu0 0.0
    %267 = vmatprep.subr.mxu0 0.0
    %268 = vmatpush1.msra.mxu0 0.0
    %269 = vmatprep.subr.mxu0 0.0
    %270 = vmatpush1.msra.mxu0 0.0
    %271 = vmatprep.subr.mxu0 0.0
    %272 = vmatpush1.msra.mxu0 0.0
    %273 = vmatprep.subr.mxu0 0.0
    %274 = vmatpush1.msra.mxu0 0.0
    %275 = vmatprep.subr.mxu0 0.0
    %276 = vmatpush1.msra.mxu0 0.0
    %277 = vmatprep.mubr.f32.mxu0 0.0
    %278 = vmatmul.mubr.f32.gmra.mrb[0].mxu0 %v208
    %v279 = vpop.f32.mrb[0].mxu0
    %v280 = vadd.f32 %v206, %v279
    %v281 = vpop.f32.mrb[0].mxu0
    %282 = vmatprep.mubr.f32.mxu0 0.0
    %283 = vmatmul.mubr.f32.gmra.mrb[0].mxu0 %v211
    %v284 = vpop.f32.mrb[0].mxu0
    %v285 = vadd.f32 %v206, %v284
    %v286 = vpop.f32.mrb[0].mxu0
    %287 = vdwg.mxu0
    %289 = vrot.lane.b32.xlu0 %v195, 96
    %v290 = vpop.permute.xlu0 %289
    %vm291 = vcmask 64512
    %v292 = vsel %vm291, %v195, 0
    %v294 = vsel %vm291, %v290, 0
    %296 = vmatprep.subr.mxu0 0.0
    %297 = vmatpush1.xpose.msra.mxu0 %v294
    %298 = vmatprep.subr.mxu0 0.0
    %299 = vmatpush1.xpose.msra.mxu0 0.0
    %300 = vmatprep.subr.mxu0 0.0
    %301 = vmatpush1.xpose.msra.mxu0 0.0
    %302 = vmatprep.subr.mxu0 0.0
    %303 = vmatpush1.xpose.msra.mxu0 0.0
    %304 = vmatprep.subr.mxu0 0.0
    %305 = vmatpush1.xpose.msra.mxu0 0.0
    %306 = vmatprep.subr.mxu0 0.0
    %307 = vmatpush1.xpose.msra.mxu0 0.0
    %308 = vmatprep.subr.mxu0 0.0
    %309 = vmatpush1.xpose.msra.mxu0 0.0
    %310 = vmatprep.subr.mxu0 0.0
    %311 = vmatpush1.xpose.msra.mxu0 0.0
    %312 = vmatprep.subr.mxu0 0.0
    %313 = vmatpush1.xpose.msra.mxu0 0.0
    %314 = vmatprep.subr.mxu0 0.0
    %315 = vmatpush1.xpose.msra.mxu0 0.0
    %316 = vmatprep.subr.mxu0 0.0
    %317 = vmatpush1.xpose.msra.mxu0 0.0
    %318 = vmatprep.subr.mxu0 0.0
    %319 = vmatpush1.xpose.msra.mxu0 0.0
    %320 = vmatprep.subr.mxu0 0.0
    %321 = vmatpush1.xpose.msra.mxu0 0.0
    %322 = vmatprep.subr.mxu0 0.0
    %323 = vmatpush1.xpose.msra.mxu0 0.0
    %324 = vmatprep.subr.mxu0 0.0
    %325 = vmatpush1.xpose.msra.mxu0 0.0
    %326 = vmatprep.subr.mxu0 0.0
    %327 = vmatpush1.xpose.msra.mxu0 0.0
    %328 = vmatprep.subr.mxu0 0.0
    %329 = vmatpush1.xpose.msra.mxu0 0.0
    %330 = vmatprep.subr.mxu0 0.0
    %331 = vmatpush1.xpose.msra.mxu0 0.0
    %332 = vmatprep.subr.mxu0 0.0
    %333 = vmatpush1.xpose.msra.mxu0 0.0
    %334 = vmatprep.subr.mxu0 0.0
    %335 = vmatpush1.xpose.msra.mxu0 0.0
    %336 = vmatprep.subr.mxu0 0.0
    %337 = vmatpush1.xpose.msra.mxu0 0.0
    %338 = vmatprep.subr.mxu0 0.0
    %339 = vmatpush1.xpose.msra.mxu0 0.0
    %340 = vmatprep.subr.mxu0 0.0
    %341 = vmatpush1.xpose.msra.mxu0 0.0
    %342 = vmatprep.subr.mxu0 0.0
    %343 = vmatpush1.xpose.msra.mxu0 0.0
    %344 = vmatprep.subr.mxu0 0.0
    %345 = vmatpush1.xpose.msra.mxu0 0.0
    %346 = vmatprep.subr.mxu0 0.0
    %347 = vmatpush1.xpose.msra.mxu0 0.0
    %348 = vmatprep.subr.mxu0 0.0
    %349 = vmatpush1.xpose.msra.mxu0 0.0
    %350 = vmatprep.subr.mxu0 0.0
    %351 = vmatpush1.xpose.msra.mxu0 0.0
    %352 = vmatprep.subr.mxu0 0.0
    %353 = vmatpush1.xpose.msra.mxu0 0.0
    %354 = vmatprep.subr.mxu0 0.0
    %355 = vmatpush1.xpose.msra.mxu0 0.0
    %356 = vmatprep.subr.mxu0 0.0
    %357 = vmatpush1.xpose.msra.mxu0 0.0
    %358 = vmatprep.subr.mxu0 0.0
    %359 = vmatpush1.xpose.msra.mxu0 0.0
    %360 = vmatprep.mubr.f32.mxu0 0.0
    %361 = vmatmul.mubr.f32.gmra.mrb[0].mxu0 %v292
    %v362 = vpop.f32.mrb[0].mxu0
    %v363 = vadd.f32 0.0, %v362
    %v364 = vpop.f32.mrb[0].mxu0
    %365 = vdwg.mxu0
    %367 = vrot.lane.b32.xlu0 %v200, 96
    %v368 = vpop.permute.xlu0 %367
    %v369 = vsel %vm291, %v200, 0
    %v371 = vsel %vm291, %v368, 0
    %373 = vmatprep.subr.mxu0 0.0
    %374 = vmatpush1.xpose.msra.mxu0 %v371
    %375 = vmatprep.subr.mxu0 0.0
    %376 = vmatpush1.xpose.msra.mxu0 0.0
    %377 = vmatprep.subr.mxu0 0.0
    %378 = vmatpush1.xpose.msra.mxu0 0.0
    %379 = vmatprep.subr.mxu0 0.0
    %380 = vmatpush1.xpose.msra.mxu0 0.0
    %381 = vmatprep.subr.mxu0 0.0
    %382 = vmatpush1.xpose.msra.mxu0 0.0
    %383 = vmatprep.subr.mxu0 0.0
    %384 = vmatpush1.xpose.msra.mxu0 0.0
    %385 = vmatprep.subr.mxu0 0.0
    %386 = vmatpush1.xpose.msra.mxu0 0.0
    %387 = vmatprep.subr.mxu0 0.0
    %388 = vmatpush1.xpose.msra.mxu0 0.0
    %389 = vmatprep.subr.mxu0 0.0
    %390 = vmatpush1.xpose.msra.mxu0 0.0
    %391 = vmatprep.subr.mxu0 0.0
    %392 = vmatpush1.xpose.msra.mxu0 0.0
    %393 = vmatprep.subr.mxu0 0.0
    %394 = vmatpush1.xpose.msra.mxu0 0.0
    %395 = vmatprep.subr.mxu0 0.0
    %396 = vmatpush1.xpose.msra.mxu0 0.0
    %397 = vmatprep.subr.mxu0 0.0
    %398 = vmatpush1.xpose.msra.mxu0 0.0
    %399 = vmatprep.subr.mxu0 0.0
    %400 = vmatpush1.xpose.msra.mxu0 0.0
    %401 = vmatprep.subr.mxu0 0.0
    %402 = vmatpush1.xpose.msra.mxu0 0.0
    %403 = vmatprep.subr.mxu0 0.0
    %404 = vmatpush1.xpose.msra.mxu0 0.0
    %405 = vmatprep.subr.mxu0 0.0
    %406 = vmatpush1.xpose.msra.mxu0 0.0
    %407 = vmatprep.subr.mxu0 0.0
    %408 = vmatpush1.xpose.msra.mxu0 0.0
    %409 = vmatprep.subr.mxu0 0.0
    %410 = vmatpush1.xpose.msra.mxu0 0.0
    %411 = vmatprep.subr.mxu0 0.0
    %412 = vmatpush1.xpose.msra.mxu0 0.0
    %413 = vmatprep.subr.mxu0 0.0
    %414 = vmatpush1.xpose.msra.mxu0 0.0
    %415 = vmatprep.subr.mxu0 0.0
    %416 = vmatpush1.xpose.msra.mxu0 0.0
    %417 = vmatprep.subr.mxu0 0.0
    %418 = vmatpush1.xpose.msra.mxu0 0.0
    %419 = vmatprep.subr.mxu0 0.0
    %420 = vmatpush1.xpose.msra.mxu0 0.0
    %421 = vmatprep.subr.mxu0 0.0
    %422 = vmatpush1.xpose.msra.mxu0 0.0
    %423 = vmatprep.subr.mxu0 0.0
    %424 = vmatpush1.xpose.msra.mxu0 0.0
    %425 = vmatprep.subr.mxu0 0.0
    %426 = vmatpush1.xpose.msra.mxu0 0.0
    %427 = vmatprep.subr.mxu0 0.0
    %428 = vmatpush1.xpose.msra.mxu0 0.0
    %429 = vmatprep.subr.mxu0 0.0
    %430 = vmatpush1.xpose.msra.mxu0 0.0
    %431 = vmatprep.subr.mxu0 0.0
    %432 = vmatpush1.xpose.msra.mxu0 0.0
    %433 = vmatprep.subr.mxu0 0.0
    %434 = vmatpush1.xpose.msra.mxu0 0.0
    %435 = vmatprep.subr.mxu0 0.0
    %436 = vmatpush1.xpose.msra.mxu0 0.0
    %437 = vmatprep.mubr.f32.mxu0 0.0
    %438 = vmatmul.mubr.f32.gmra.mrb[0].mxu0 %v369
    %v439 = vpop.f32.mrb[0].mxu0
    %v440 = vadd.f32 0.0, %v439
    %v441 = vpop.f32.mrb[0].mxu0
    %442 = vdwg.mxu0
    %v443 = vmul.f32 %v363, 0.35355338
    %v444 = vmul.f32 %v440, 0.35355338
    %v445 = vsel %vm74, 1, 0
    %v446 = vsel %vm75, 1, 0
    %v447 = vlaneseq
    %v448 = vshrl.u32 %v447, 7
    %v449 = vsub.s32 0, %v448
    %v450 = vrot.slane %v445, %v449
    %v451 = vlaneseq
    %v452 = vshrl.u32 %v451, 7
    %v453 = vsub.s32 0, %v452
    %v454 = vrot.slane %v446, %v453
    %vm455 = vcmp.eq.s32.totalorder %v450, 1
    %vm456 = vcmp.eq.s32.totalorder %v454, 1
    %v457 = vsel %vm455, -inf, %v443
    %v458 = vsel %vm456, -inf, %v444
    %459 = vrot.lane.b32.xlu0 %v195, 120
    %v460 = vpop.permute.xlu0 %459
    %461 = vrot.lane.b32.xlu0 %v195, 88
    %v462 = vpop.permute.xlu0 %461
    %v463 = vsel %vm291, %v460, 0
    %v465 = vsel %vm291, %v462, 0
    %467 = vmatprep.subr.mxu0 0.0
    %468 = vmatpush1.xpose.msra.mxu0 %v465
    %469 = vmatprep.subr.mxu0 0.0
    %470 = vmatpush1.xpose.msra.mxu0 0.0
    %471 = vmatprep.subr.mxu0 0.0
    %472 = vmatpush1.xpose.msra.mxu0 0.0
    %473 = vmatprep.subr.mxu0 0.0
    %474 = vmatpush1.xpose.msra.mxu0 0.0
    %475 = vmatprep.subr.mxu0 0.0
    %476 = vmatpush1.xpose.msra.mxu0 0.0
    %477 = vmatprep.subr.mxu0 0.0
    %478 = vmatpush1.xpose.msra.mxu0 0.0
    %479 = vmatprep.subr.mxu0 0.0
    %480 = vmatpush1.xpose.msra.mxu0 0.0
    %481 = vmatprep.subr.mxu0 0.0
    %482 = vmatpush1.xpose.msra.mxu0 0.0
    %483 = vmatprep.subr.mxu0 0.0
    %484 = vmatpush1.xpose.msra.mxu0 0.0
    %485 = vmatprep.subr.mxu0 0.0
    %486 = vmatpush1.xpose.msra.mxu0 0.0
    %487 = vmatprep.subr.mxu0 0.0
    %488 = vmatpush1.xpose.msra.mxu0 0.0
    %489 = vmatprep.subr.mxu0 0.0
    %490 = vmatpush1.xpose.msra.mxu0 0.0
    %491 = vmatprep.subr.mxu0 0.0
    %492 = vmatpush1.xpose.msra.mxu0 0.0
    %493 = vmatprep.subr.mxu0 0.0
    %494 = vmatpush1.xpose.msra.mxu0 0.0
    %495 = vmatprep.subr.mxu0 0.0
    %496 = vmatpush1.xpose.msra.mxu0 0.0
    %497 = vmatprep.subr.mxu0 0.0
    %498 = vmatpush1.xpose.msra.mxu0 0.0
    %499 = vmatprep.subr.mxu0 0.0
    %500 = vmatpush1.xpose.msra.mxu0 0.0
    %501 = vmatprep.subr.mxu0 0.0
    %502 = vmatpush1.xpose.msra.mxu0 0.0
    %503 = vmatprep.subr.mxu0 0.0
    %504 = vmatpush1.xpose.msra.mxu0 0.0
    %505 = vmatprep.subr.mxu0 0.0
    %506 = vmatpush1.xpose.msra.mxu0 0.0
    %507 = vmatprep.subr.mxu0 0.0
    %508 = vmatpush1.xpose.msra.mxu0 0.0
    %509 = vmatprep.subr.mxu0 0.0
    %510 = vmatpush1.xpose.msra.mxu0 0.0
    %511 = vmatprep.subr.mxu0 0.0
    %512 = vmatpush1.xpose.msra.mxu0 0.0
    %513 = vmatprep.subr.mxu0 0.0
    %514 = vmatpush1.xpose.msra.mxu0 0.0
    %515 = vmatprep.subr.mxu0 0.0
    %516 = vmatpush1.xpose.msra.mxu0 0.0
    %517 = vmatprep.subr.mxu0 0.0
    %518 = vmatpush1.xpose.msra.mxu0 0.0
    %519 = vmatprep.subr.mxu0 0.0
    %520 = vmatpush1.xpose.msra.mxu0 0.0
    %521 = vmatprep.subr.mxu0 0.0
    %522 = vmatpush1.xpose.msra.mxu0 0.0
    %523 = vmatprep.subr.mxu0 0.0
    %524 = vmatpush1.xpose.msra.mxu0 0.0
    %525 = vmatprep.subr.mxu0 0.0
    %526 = vmatpush1.xpose.msra.mxu0 0.0
    %527 = vmatprep.subr.mxu0 0.0
    %528 = vmatpush1.xpose.msra.mxu0 0.0
    %529 = vmatprep.subr.mxu0 0.0
    %530 = vmatpush1.xpose.msra.mxu0 0.0
    %531 = vmatprep.mubr.f32.mxu0 0.0
    %532 = vmatmul.mubr.f32.gmra.mrb[0].mxu0 %v463
    %v533 = vpop.f32.mrb[0].mxu0
    %v534 = vadd.f32 0.0, %v533
    %v535 = vpop.f32.mrb[0].mxu0
    %536 = vdwg.mxu0
    %537 = vrot.lane.b32.xlu0 %v200, 120
    %v538 = vpop.permute.xlu0 %537
    %539 = vrot.lane.b32.xlu0 %v200, 88
    %v540 = vpop.permute.xlu0 %539
    %v541 = vsel %vm291, %v538, 0
    %v543 = vsel %vm291, %v540, 0
    %545 = vmatprep.subr.mxu0 0.0
    %546 = vmatpush1.xpose.msra.mxu0 %v543
    %547 = vmatprep.subr.mxu0 0.0
    %548 = vmatpush1.xpose.msra.mxu0 0.0
    %549 = vmatprep.subr.mxu0 0.0
    %550 = vmatpush1.xpose.msra.mxu0 0.0
    %551 = vmatprep.subr.mxu0 0.0
    %552 = vmatpush1.xpose.msra.mxu0 0.0
    %553 = vmatprep.subr.mxu0 0.0
    %554 = vmatpush1.xpose.msra.mxu0 0.0
    %555 = vmatprep.subr.mxu0 0.0
    %556 = vmatpush1.xpose.msra.mxu0 0.0
    %557 = vmatprep.subr.mxu0 0.0
    %558 = vmatpush1.xpose.msra.mxu0 0.0
    %559 = vmatprep.subr.mxu0 0.0
    %560 = vmatpush1.xpose.msra.mxu0 0.0
    %561 = vmatprep.subr.mxu0 0.0
    %562 = vmatpush1.xpose.msra.mxu0 0.0
    %563 = vmatprep.subr.mxu0 0.0
    %564 = vmatpush1.xpose.msra.mxu0 0.0
    %565 = vmatprep.subr.mxu0 0.0
    %566 = vmatpush1.xpose.msra.mxu0 0.0
    %567 = vmatprep.subr.mxu0 0.0
    %568 = vmatpush1.xpose.msra.mxu0 0.0
    %569 = vmatprep.subr.mxu0 0.0
    %570 = vmatpush1.xpose.msra.mxu0 0.0
    %571 = vmatprep.subr.mxu0 0.0
    %572 = vmatpush1.xpose.msra.mxu0 0.0
    %573 = vmatprep.subr.mxu0 0.0
    %574 = vmatpush1.xpose.msra.mxu0 0.0
    %575 = vmatprep.subr.mxu0 0.0
    %576 = vmatpush1.xpose.msra.mxu0 0.0
    %577 = vmatprep.subr.mxu0 0.0
    %578 = vmatpush1.xpose.msra.mxu0 0.0
    %579 = vmatprep.subr.mxu0 0.0
    %580 = vmatpush1.xpose.msra.mxu0 0.0
    %581 = vmatprep.subr.mxu0 0.0
    %582 = vmatpush1.xpose.msra.mxu0 0.0
    %583 = vmatprep.subr.mxu0 0.0
    %584 = vmatpush1.xpose.msra.mxu0 0.0
    %585 = vmatprep.subr.mxu0 0.0
    %586 = vmatpush1.xpose.msra.mxu0 0.0
    %587 = vmatprep.subr.mxu0 0.0
    %588 = vmatpush1.xpose.msra.mxu0 0.0
    %589 = vmatprep.subr.mxu0 0.0
    %590 = vmatpush1.xpose.msra.mxu0 0.0
    %591 = vmatprep.subr.mxu0 0.0
    %592 = vmatpush1.xpose.msra.mxu0 0.0
    %593 = vmatprep.subr.mxu0 0.0
    %594 = vmatpush1.xpose.msra.mxu0 0.0
    %595 = vmatprep.subr.mxu0 0.0
    %596 = vmatpush1.xpose.msra.mxu0 0.0
    %597 = vmatprep.subr.mxu0 0.0
    %598 = vmatpush1.xpose.msra.mxu0 0.0
    %599 = vmatprep.subr.mxu0 0.0
    %600 = vmatpush1.xpose.msra.mxu0 0.0
    %601 = vmatprep.subr.mxu0 0.0
    %602 = vmatpush1.xpose.msra.mxu0 0.0
    %603 = vmatprep.subr.mxu0 0.0
    %604 = vmatpush1.xpose.msra.mxu0 0.0
    %605 = vmatprep.subr.mxu0 0.0
    %606 = vmatpush1.xpose.msra.mxu0 0.0
    %607 = vmatprep.subr.mxu0 0.0
    %608 = vmatpush1.xpose.msra.mxu0 0.0
    %609 = vmatprep.mubr.f32.mxu0 0.0
    %610 = vmatmul.mubr.f32.gmra.mrb[0].mxu0 %v541
    %v611 = vpop.f32.mrb[0].mxu0
    %v612 = vadd.f32 0.0, %v611
    %v613 = vpop.f32.mrb[0].mxu0
    %614 = vdwg.mxu0
    %v615 = vmul.f32 %v534, 0.35355338
    %v616 = vmul.f32 %v612, 0.35355338
    %v617 = vsel %vm455, -inf, %v615
    %v618 = vsel %vm456, -inf, %v616
    %619 = vrot.lane.b32.xlu0 %v195, 112
    %v620 = vpop.permute.xlu0 %619
    %621 = vrot.lane.b32.xlu0 %v195, 80
    %v622 = vpop.permute.xlu0 %621
    %v623 = vsel %vm291, %v620, 0
    %v625 = vsel %vm291, %v622, 0
    %627 = vmatprep.subr.mxu0 0.0
    %628 = vmatpush1.xpose.msra.mxu0 %v625
    %629 = vmatprep.subr.mxu0 0.0
    %630 = vmatpush1.xpose.msra.mxu0 0.0
    %631 = vmatprep.subr.mxu0 0.0
    %632 = vmatpush1.xpose.msra.mxu0 0.0
    %633 = vmatprep.subr.mxu0 0.0
    %634 = vmatpush1.xpose.msra.mxu0 0.0
    %635 = vmatprep.subr.mxu0 0.0
    %636 = vmatpush1.xpose.msra.mxu0 0.0
    %637 = vmatprep.subr.mxu0 0.0
    %638 = vmatpush1.xpose.msra.mxu0 0.0
    %639 = vmatprep.subr.mxu0 0.0
    %640 = vmatpush1.xpose.msra.mxu0 0.0
    %641 = vmatprep.subr.mxu0 0.0
    %642 = vmatpush1.xpose.msra.mxu0 0.0
    %643 = vmatprep.subr.mxu0 0.0
    %644 = vmatpush1.xpose.msra.mxu0 0.0
    %645 = vmatprep.subr.mxu0 0.0
    %646 = vmatpush1.xpose.msra.mxu0 0.0
    %647 = vmatprep.subr.mxu0 0.0
    %648 = vmatpush1.xpose.msra.mxu0 0.0
    %649 = vmatprep.subr.mxu0 0.0
    %650 = vmatpush1.xpose.msra.mxu0 0.0
    %651 = vmatprep.subr.mxu0 0.0
    %652 = vmatpush1.xpose.msra.mxu0 0.0
    %653 = vmatprep.subr.mxu0 0.0
    %654 = vmatpush1.xpose.msra.mxu0 0.0
    %655 = vmatprep.subr.mxu0 0.0
    %656 = vmatpush1.xpose.msra.mxu0 0.0
    %657 = vmatprep.subr.mxu0 0.0
    %658 = vmatpush1.xpose.msra.mxu0 0.0
    %659 = vmatprep.subr.mxu0 0.0
    %660 = vmatpush1.xpose.msra.mxu0 0.0
    %661 = vmatprep.subr.mxu0 0.0
    %662 = vmatpush1.xpose.msra.mxu0 0.0
    %663 = vmatprep.subr.mxu0 0.0
    %664 = vmatpush1.xpose.msra.mxu0 0.0
    %665 = vmatprep.subr.mxu0 0.0
    %666 = vmatpush1.xpose.msra.mxu0 0.0
    %667 = vmatprep.subr.mxu0 0.0
    %668 = vmatpush1.xpose.msra.mxu0 0.0
    %669 = vmatprep.subr.mxu0 0.0
    %670 = vmatpush1.xpose.msra.mxu0 0.0
    %671 = vmatprep.subr.mxu0 0.0
    %672 = vmatpush1.xpose.msra.mxu0 0.0
    %673 = vmatprep.subr.mxu0 0.0
    %674 = vmatpush1.xpose.msra.mxu0 0.0
    %675 = vmatprep.subr.mxu0 0.0
    %676 = vmatpush1.xpose.msra.mxu0 0.0
    %677 = vmatprep.subr.mxu0 0.0
    %678 = vmatpush1.xpose.msra.mxu0 0.0
    %679 = vmatprep.subr.mxu0 0.0
    %680 = vmatpush1.xpose.msra.mxu0 0.0
    %681 = vmatprep.subr.mxu0 0.0
    %682 = vmatpush1.xpose.msra.mxu0 0.0
    %683 = vmatprep.subr.mxu0 0.0
    %684 = vmatpush1.xpose.msra.mxu0 0.0
    %685 = vmatprep.subr.mxu0 0.0
    %686 = vmatpush1.xpose.msra.mxu0 0.0
    %687 = vmatprep.subr.mxu0 0.0
    %688 = vmatpush1.xpose.msra.mxu0 0.0
    %689 = vmatprep.subr.mxu0 0.0
    %690 = vmatpush1.xpose.msra.mxu0 0.0
    %691 = vmatprep.mubr.f32.mxu0 0.0
    %692 = vmatmul.mubr.f32.gmra.mrb[0].mxu0 %v623
    %v693 = vpop.f32.mrb[0].mxu0
    %v694 = vadd.f32 0.0, %v693
    %v695 = vpop.f32.mrb[0].mxu0
    %696 = vdwg.mxu0
    %697 = vrot.lane.b32.xlu0 %v200, 112
    %v698 = vpop.permute.xlu0 %697
    %699 = vrot.lane.b32.xlu0 %v200, 80
    %v700 = vpop.permute.xlu0 %699
    %v701 = vsel %vm291, %v698, 0
    %v703 = vsel %vm291, %v700, 0
    %705 = vmatprep.subr.mxu0 0.0
    %706 = vmatpush1.xpose.msra.mxu0 %v703
    %707 = vmatprep.subr.mxu0 0.0
    %708 = vmatpush1.xpose.msra.mxu0 0.0
    %709 = vmatprep.subr.mxu0 0.0
    %710 = vmatpush1.xpose.msra.mxu0 0.0
    %711 = vmatprep.subr.mxu0 0.0
    %712 = vmatpush1.xpose.msra.mxu0 0.0
    %713 = vmatprep.subr.mxu0 0.0
    %714 = vmatpush1.xpose.msra.mxu0 0.0
    %715 = vmatprep.subr.mxu0 0.0
    %716 = vmatpush1.xpose.msra.mxu0 0.0
    %717 = vmatprep.subr.mxu0 0.0
    %718 = vmatpush1.xpose.msra.mxu0 0.0
    %719 = vmatprep.subr.mxu0 0.0
    %720 = vmatpush1.xpose.msra.mxu0 0.0
    %721 = vmatprep.subr.mxu0 0.0
    %722 = vmatpush1.xpose.msra.mxu0 0.0
    %723 = vmatprep.subr.mxu0 0.0
    %724 = vmatpush1.xpose.msra.mxu0 0.0
    %725 = vmatprep.subr.mxu0 0.0
    %726 = vmatpush1.xpose.msra.mxu0 0.0
    %727 = vmatprep.subr.mxu0 0.0
    %728 = vmatpush1.xpose.msra.mxu0 0.0
    %729 = vmatprep.subr.mxu0 0.0
    %730 = vmatpush1.xpose.msra.mxu0 0.0
    %731 = vmatprep.subr.mxu0 0.0
    %732 = vmatpush1.xpose.msra.mxu0 0.0
    %733 = vmatprep.subr.mxu0 0.0
    %734 = vmatpush1.xpose.msra.mxu0 0.0
    %735 = vmatprep.subr.mxu0 0.0
    %736 = vmatpush1.xpose.msra.mxu0 0.0
    %737 = vmatprep.subr.mxu0 0.0
    %738 = vmatpush1.xpose.msra.mxu0 0.0
    %739 = vmatprep.subr.mxu0 0.0
    %740 = vmatpush1.xpose.msra.mxu0 0.0
    %741 = vmatprep.subr.mxu0 0.0
    %742 = vmatpush1.xpose.msra.mxu0 0.0
    %743 = vmatprep.subr.mxu0 0.0
    %744 = vmatpush1.xpose.msra.mxu0 0.0
    %745 = vmatprep.subr.mxu0 0.0
    %746 = vmatpush1.xpose.msra.mxu0 0.0
    %747 = vmatprep.subr.mxu0 0.0
    %748 = vmatpush1.xpose.msra.mxu0 0.0
    %749 = vmatprep.subr.mxu0 0.0
    %750 = vmatpush1.xpose.msra.mxu0 0.0
    %751 = vmatprep.subr.mxu0 0.0
    %752 = vmatpush1.xpose.msra.mxu0 0.0
    %753 = vmatprep.subr.mxu0 0.0
    %754 = vmatpush1.xpose.msra.mxu0 0.0
    %755 = vmatprep.subr.mxu0 0.0
    %756 = vmatpush1.xpose.msra.mxu0 0.0
    %757 = vmatprep.subr.mxu0 0.0
    %758 = vmatpush1.xpose.msra.mxu0 0.0
    %759 = vmatprep.subr.mxu0 0.0
    %760 = vmatpush1.xpose.msra.mxu0 0.0
    %761 = vmatprep.subr.mxu0 0.0
    %762 = vmatpush1.xpose.msra.mxu0 0.0
    %763 = vmatprep.subr.mxu0 0.0
    %764 = vmatpush1.xpose.msra.mxu0 0.0
    %765 = vmatprep.subr.mxu0 0.0
    %766 = vmatpush1.xpose.msra.mxu0 0.0
    %767 = vmatprep.subr.mxu0 0.0
    %768 = vmatpush1.xpose.msra.mxu0 0.0
    %769 = vmatprep.mubr.f32.mxu0 0.0
    %770 = vmatmul.mubr.f32.gmra.mrb[0].mxu0 %v701
    %v771 = vpop.f32.mrb[0].mxu0
    %v772 = vadd.f32 0.0, %v771
    %v773 = vpop.f32.mrb[0].mxu0
    %774 = vdwg.mxu0
    %v775 = vmul.f32 %v694, 0.35355338
    %v776 = vmul.f32 %v772, 0.35355338
    %v777 = vsel %vm455, -inf, %v775
    %v778 = vsel %vm456, -inf, %v776
    %779 = vrot.lane.b32.xlu0 %v195, 104
    %v780 = vpop.permute.xlu0 %779
    %781 = vrot.lane.b32.xlu0 %v195, 72
    %v782 = vpop.permute.xlu0 %781
    %v783 = vsel %vm291, %v780, 0
    %v785 = vsel %vm291, %v782, 0
    %787 = vmatprep.subr.mxu0 0.0
    %788 = vmatpush1.xpose.msra.mxu0 %v785
    %789 = vmatprep.subr.mxu0 0.0
    %790 = vmatpush1.xpose.msra.mxu0 0.0
    %791 = vmatprep.subr.mxu0 0.0
    %792 = vmatpush1.xpose.msra.mxu0 0.0
    %793 = vmatprep.subr.mxu0 0.0
    %794 = vmatpush1.xpose.msra.mxu0 0.0
    %795 = vmatprep.subr.mxu0 0.0
    %796 = vmatpush1.xpose.msra.mxu0 0.0
    %797 = vmatprep.subr.mxu0 0.0
    %798 = vmatpush1.xpose.msra.mxu0 0.0
    %799 = vmatprep.subr.mxu0 0.0
    %800 = vmatpush1.xpose.msra.mxu0 0.0
    %801 = vmatprep.subr.mxu0 0.0
    %802 = vmatpush1.xpose.msra.mxu0 0.0
    %803 = vmatprep.subr.mxu0 0.0
    %804 = vmatpush1.xpose.msra.mxu0 0.0
    %805 = vmatprep.subr.mxu0 0.0
    %806 = vmatpush1.xpose.msra.mxu0 0.0
    %807 = vmatprep.subr.mxu0 0.0
    %808 = vmatpush1.xpose.msra.mxu0 0.0
    %809 = vmatprep.subr.mxu0 0.0
    %810 = vmatpush1.xpose.msra.mxu0 0.0
    %811 = vmatprep.subr.mxu0 0.0
    %812 = vmatpush1.xpose.msra.mxu0 0.0
    %813 = vmatprep.subr.mxu0 0.0
    %814 = vmatpush1.xpose.msra.mxu0 0.0
    %815 = vmatprep.subr.mxu0 0.0
    %816 = vmatpush1.xpose.msra.mxu0 0.0
    %817 = vmatprep.subr.mxu0 0.0
    %818 = vmatpush1.xpose.msra.mxu0 0.0
    %819 = vmatprep.subr.mxu0 0.0
    %820 = vmatpush1.xpose.msra.mxu0 0.0
    %821 = vmatprep.subr.mxu0 0.0
    %822 = vmatpush1.xpose.msra.mxu0 0.0
    %823 = vmatprep.subr.mxu0 0.0
    %824 = vmatpush1.xpose.msra.mxu0 0.0
    %825 = vmatprep.subr.mxu0 0.0
    %826 = vmatpush1.xpose.msra.mxu0 0.0
    %827 = vmatprep.subr.mxu0 0.0
    %828 = vmatpush1.xpose.msra.mxu0 0.0
    %829 = vmatprep.subr.mxu0 0.0
    %830 = vmatpush1.xpose.msra.mxu0 0.0
    %831 = vmatprep.subr.mxu0 0.0
    %832 = vmatpush1.xpose.msra.mxu0 0.0
    %833 = vmatprep.subr.mxu0 0.0
    %834 = vmatpush1.xpose.msra.mxu0 0.0
    %835 = vmatprep.subr.mxu0 0.0
    %836 = vmatpush1.xpose.msra.mxu0 0.0
    %837 = vmatprep.subr.mxu0 0.0
    %838 = vmatpush1.xpose.msra.mxu0 0.0
    %839 = vmatprep.subr.mxu0 0.0
    %840 = vmatpush1.xpose.msra.mxu0 0.0
    %841 = vmatprep.subr.mxu0 0.0
    %842 = vmatpush1.xpose.msra.mxu0 0.0
    %843 = vmatprep.subr.mxu0 0.0
    %844 = vmatpush1.xpose.msra.mxu0 0.0
    %845 = vmatprep.subr.mxu0 0.0
    %846 = vmatpush1.xpose.msra.mxu0 0.0
    %847 = vmatprep.subr.mxu0 0.0
    %848 = vmatpush1.xpose.msra.mxu0 0.0
    %849 = vmatprep.subr.mxu0 0.0
    %850 = vmatpush1.xpose.msra.mxu0 0.0
    %851 = vmatprep.mubr.f32.mxu0 0.0
    %852 = vmatmul.mubr.f32.gmra.mrb[0].mxu0 %v783
    %v853 = vpop.f32.mrb[0].mxu0
    %v854 = vadd.f32 0.0, %v853
    %v855 = vpop.f32.mrb[0].mxu0
    %856 = vdwg.mxu0
    %857 = vrot.lane.b32.xlu0 %v200, 104
    %v858 = vpop.permute.xlu0 %857
    %859 = vrot.lane.b32.xlu0 %v200, 72
    %v860 = vpop.permute.xlu0 %859
    %v861 = vsel %vm291, %v858, 0
    %v863 = vsel %vm291, %v860, 0
    %865 = vmatprep.subr.mxu0 0.0
    %866 = vmatpush1.xpose.msra.mxu0 %v863
    %867 = vmatprep.subr.mxu0 0.0
    %868 = vmatpush1.xpose.msra.mxu0 0.0
    %869 = vmatprep.subr.mxu0 0.0
    %870 = vmatpush1.xpose.msra.mxu0 0.0
    %871 = vmatprep.subr.mxu0 0.0
    %872 = vmatpush1.xpose.msra.mxu0 0.0
    %873 = vmatprep.subr.mxu0 0.0
    %874 = vmatpush1.xpose.msra.mxu0 0.0
    %875 = vmatprep.subr.mxu0 0.0
    %876 = vmatpush1.xpose.msra.mxu0 0.0
    %877 = vmatprep.subr.mxu0 0.0
    %878 = vmatpush1.xpose.msra.mxu0 0.0
    %879 = vmatprep.subr.mxu0 0.0
    %880 = vmatpush1.xpose.msra.mxu0 0.0
    %881 = vmatprep.subr.mxu0 0.0
    %882 = vmatpush1.xpose.msra.mxu0 0.0
    %883 = vmatprep.subr.mxu0 0.0
    %884 = vmatpush1.xpose.msra.mxu0 0.0
    %885 = vmatprep.subr.mxu0 0.0
    %886 = vmatpush1.xpose.msra.mxu0 0.0
    %887 = vmatprep.subr.mxu0 0.0
    %888 = vmatpush1.xpose.msra.mxu0 0.0
    %889 = vmatprep.subr.mxu0 0.0
    %890 = vmatpush1.xpose.msra.mxu0 0.0
    %891 = vmatprep.subr.mxu0 0.0
    %892 = vmatpush1.xpose.msra.mxu0 0.0
    %893 = vmatprep.subr.mxu0 0.0
    %894 = vmatpush1.xpose.msra.mxu0 0.0
    %895 = vmatprep.subr.mxu0 0.0
    %896 = vmatpush1.xpose.msra.mxu0 0.0
    %897 = vmatprep.subr.mxu0 0.0
    %898 = vmatpush1.xpose.msra.mxu0 0.0
    %899 = vmatprep.subr.mxu0 0.0
    %900 = vmatpush1.xpose.msra.mxu0 0.0
    %901 = vmatprep.subr.mxu0 0.0
    %902 = vmatpush1.xpose.msra.mxu0 0.0
    %903 = vmatprep.subr.mxu0 0.0
    %904 = vmatpush1.xpose.msra.mxu0 0.0
    %905 = vmatprep.subr.mxu0 0.0
    %906 = vmatpush1.xpose.msra.mxu0 0.0
    %907 = vmatprep.subr.mxu0 0.0
    %908 = vmatpush1.xpose.msra.mxu0 0.0
    %909 = vmatprep.subr.mxu0 0.0
    %910 = vmatpush1.xpose.msra.mxu0 0.0
    %911 = vmatprep.subr.mxu0 0.0
    %912 = vmatpush1.xpose.msra.mxu0 0.0
    %913 = vmatprep.subr.mxu0 0.0
    %914 = vmatpush1.xpose.msra.mxu0 0.0
    %915 = vmatprep.subr.mxu0 0.0
    %916 = vmatpush1.xpose.msra.mxu0 0.0
    %917 = vmatprep.subr.mxu0 0.0
    %918 = vmatpush1.xpose.msra.mxu0 0.0
    %919 = vmatprep.subr.mxu0 0.0
    %920 = vmatpush1.xpose.msra.mxu0 0.0
    %921 = vmatprep.subr.mxu0 0.0
    %922 = vmatpush1.xpose.msra.mxu0 0.0
    %923 = vmatprep.subr.mxu0 0.0
    %924 = vmatpush1.xpose.msra.mxu0 0.0
    %925 = vmatprep.subr.mxu0 0.0
    %926 = vmatpush1.xpose.msra.mxu0 0.0
    %927 = vmatprep.subr.mxu0 0.0
    %928 = vmatpush1.xpose.msra.mxu0 0.0
    %929 = vmatprep.mubr.f32.mxu0 0.0
    %930 = vmatmul.mubr.f32.gmra.mrb[0].mxu0 %v861
    %v931 = vpop.f32.mrb[0].mxu0
    %v932 = vadd.f32 0.0, %v931
    %v933 = vpop.f32.mrb[0].mxu0
    %934 = vdwg.mxu0
    %v935 = vmul.f32 %v854, 0.35355338
    %v936 = vmul.f32 %v932, 0.35355338
    %v937 = vsel %vm455, -inf, %v935
    %v938 = vsel %vm456, -inf, %v936
    %v939 = vmax.f32 %v457, %v617
    %v940 = vmax.f32 %v458, %v618
    %v941 = vmax.f32 %v939, %v777
    %v942 = vmax.f32 %v940, %v778
    %v943 = vmax.f32 %v941, %v937
    %v944 = vmax.f32 %v942, %v938
    %v945 = vsub.f32 %v457, %v943
    %v946 = vsub.f32 %v458, %v944
    %v947 = vmul.f32 %v945, 1.442695
    %v948 = vpow.pop %v947
    %v949 = vmul.f32 %v946, 1.442695
    %v950 = vpow.pop %v949
    %v951 = vsub.f32 %v617, %v943
    %v952 = vsub.f32 %v618, %v944
    %v953 = vmul.f32 %v951, 1.442695
    %v954 = vpow.pop %v953
    %v955 = vmul.f32 %v952, 1.442695
    %v956 = vpow.pop %v955
    %v957 = vsub.f32 %v777, %v943
    %v958 = vsub.f32 %v778, %v944
    %v959 = vmul.f32 %v957, 1.442695
    %v960 = vpow.pop %v959
    %v961 = vmul.f32 %v958, 1.442695
    %v962 = vpow.pop %v961
    %v963 = vsub.f32 %v937, %v943
    %v964 = vsub.f32 %v938, %v944
    %v965 = vmul.f32 %v963, 1.442695
    %v966 = vpow.pop %v965
    %v967 = vmul.f32 %v964, 1.442695
    %v968 = vpow.pop %v967
    %v969 = vadd.f32 %v948, %v954
    %v970 = vadd.f32 %v950, %v956
    %v971 = vadd.f32 %v969, %v960
    %v972 = vadd.f32 %v970, %v962
    %v973 = vadd.f32 %v971, %v966
    %v974 = vadd.f32 %v972, %v968
    %v975 = vrcp.pop %v973
    %v976 = vrcp.pop %v974
    %v977 = vmul.f32 %v948, %v975
    %v978 = vmul.f32 %v950, %v976
    %v979 = vmul.f32 %v954, %v975
    %v980 = vmul.f32 %v956, %v976
    %v981 = vmul.f32 %v960, %v975
    %v982 = vmul.f32 %v962, %v976
    %v983 = vmul.f32 %v966, %v975
    %v984 = vmul.f32 %v968, %v976
    %985 = vrot.lane.b32.xlu0 %v195, 64
    %v986 = vpop.permute.xlu0 %985
    %v989 = vsel %vm291, %v977, 0
    %991 = vmatprep.subr.mxu0 0.0
    %992 = vmatpush1.msra.mxu0 %v986
    %993 = vmatprep.subr.mxu0 0.0
    %994 = vmatpush1.msra.mxu0 0.0
    %995 = vmatprep.subr.mxu0 0.0
    %996 = vmatpush1.msra.mxu0 0.0
    %997 = vmatprep.subr.mxu0 0.0
    %998 = vmatpush1.msra.mxu0 0.0
    %999 = vmatprep.subr.mxu0 0.0
    %1000 = vmatpush1.msra.mxu0 0.0
    %1001 = vmatprep.subr.mxu0 0.0
    %1002 = vmatpush1.msra.mxu0 0.0
    %1003 = vmatprep.subr.mxu0 0.0
    %1004 = vmatpush1.msra.mxu0 0.0
    %1005 = vmatprep.subr.mxu0 0.0
    %1006 = vmatpush1.msra.mxu0 0.0
    %1007 = vmatprep.subr.mxu0 0.0
    %1008 = vmatpush1.msra.mxu0 0.0
    %1009 = vmatprep.subr.mxu0 0.0
    %1010 = vmatpush1.msra.mxu0 0.0
    %1011 = vmatprep.subr.mxu0 0.0
    %1012 = vmatpush1.msra.mxu0 0.0
    %1013 = vmatprep.subr.mxu0 0.0
    %1014 = vmatpush1.msra.mxu0 0.0
    %1015 = vmatprep.subr.mxu0 0.0
    %1016 = vmatpush1.msra.mxu0 0.0
    %1017 = vmatprep.subr.mxu0 0.0
    %1018 = vmatpush1.msra.mxu0 0.0
    %1019 = vmatprep.subr.mxu0 0.0
    %1020 = vmatpush1.msra.mxu0 0.0
    %1021 = vmatprep.subr.mxu0 0.0
    %1022 = vmatpush1.msra.mxu0 0.0
    %1023 = vmatprep.subr.mxu0 0.0
    %1024 = vmatpush1.msra.mxu0 0.0
    %1025 = vmatprep.subr.mxu0 0.0
    %1026 = vmatpush1.msra.mxu0 0.0
    %1027 = vmatprep.subr.mxu0 0.0
    %1028 = vmatpush1.msra.mxu0 0.0
    %1029 = vmatprep.subr.mxu0 0.0
    %1030 = vmatpush1.msra.mxu0 0.0
    %1031 = vmatprep.subr.mxu0 0.0
    %1032 = vmatpush1.msra.mxu0 0.0
    %1033 = vmatprep.subr.mxu0 0.0
    %1034 = vmatpush1.msra.mxu0 0.0
    %1035 = vmatprep.subr.mxu0 0.0
    %1036 = vmatpush1.msra.mxu0 0.0
    %1037 = vmatprep.subr.mxu0 0.0
    %1038 = vmatpush1.msra.mxu0 0.0
    %1039 = vmatprep.subr.mxu0 0.0
    %1040 = vmatpush1.msra.mxu0 0.0
    %1041 = vmatprep.subr.mxu0 0.0
    %1042 = vmatpush1.msra.mxu0 0.0
    %1043 = vmatprep.subr.mxu0 0.0
    %1044 = vmatpush1.msra.mxu0 0.0
    %1045 = vmatprep.subr.mxu0 0.0
    %1046 = vmatpush1.msra.mxu0 0.0
    %1047 = vmatprep.subr.mxu0 0.0
    %1048 = vmatpush1.msra.mxu0 0.0
    %1049 = vmatprep.subr.mxu0 0.0
    %1050 = vmatpush1.msra.mxu0 0.0
    %1051 = vmatprep.subr.mxu0 0.0
    %1052 = vmatpush1.msra.mxu0 0.0
    %1053 = vmatprep.subr.mxu0 0.0
    %1054 = vmatpush1.msra.mxu0 0.0
    %1055 = vmatprep.mubr.f32.mxu0 0.0
    %1056 = vmatmul.mubr.f32.gmra.mrb[0].mxu0 %v989
    %v1057 = vpop.f32.mrb[0].mxu0
    %v1058 = vadd.f32 0.0, %v1057
    %v1059 = vpop.f32.mrb[0].mxu0
    %1060 = vdwg.mxu0
    %1061 = vrot.lane.b32.xlu0 %v200, 64
    %v1062 = vpop.permute.xlu0 %1061
    %v1065 = vsel %vm291, %v978, 0
    %1067 = vmatprep.subr.mxu0 0.0
    %1068 = vmatpush1.msra.mxu0 %v1062
    %1069 = vmatprep.subr.mxu0 0.0
    %1070 = vmatpush1.msra.mxu0 0.0
    %1071 = vmatprep.subr.mxu0 0.0
    %1072 = vmatpush1.msra.mxu0 0.0
    %1073 = vmatprep.subr.mxu0 0.0
    %1074 = vmatpush1.msra.mxu0 0.0
    %1075 = vmatprep.subr.mxu0 0.0
    %1076 = vmatpush1.msra.mxu0 0.0
    %1077 = vmatprep.subr.mxu0 0.0
    %1078 = vmatpush1.msra.mxu0 0.0
    %1079 = vmatprep.subr.mxu0 0.0
    %1080 = vmatpush1.msra.mxu0 0.0
    %1081 = vmatprep.subr.mxu0 0.0
    %1082 = vmatpush1.msra.mxu0 0.0
    %1083 = vmatprep.subr.mxu0 0.0
    %1084 = vmatpush1.msra.mxu0 0.0
    %1085 = vmatprep.subr.mxu0 0.0
    %1086 = vmatpush1.msra.mxu0 0.0
    %1087 = vmatprep.subr.mxu0 0.0
    %1088 = vmatpush1.msra.mxu0 0.0
    %1089 = vmatprep.subr.mxu0 0.0
    %1090 = vmatpush1.msra.mxu0 0.0
    %1091 = vmatprep.subr.mxu0 0.0
    %1092 = vmatpush1.msra.mxu0 0.0
    %1093 = vmatprep.subr.mxu0 0.0
    %1094 = vmatpush1.msra.mxu0 0.0
    %1095 = vmatprep.subr.mxu0 0.0
    %1096 = vmatpush1.msra.mxu0 0.0
    %1097 = vmatprep.subr.mxu0 0.0
    %1098 = vmatpush1.msra.mxu0 0.0
    %1099 = vmatprep.subr.mxu0 0.0
    %1100 = vmatpush1.msra.mxu0 0.0
    %1101 = vmatprep.subr.mxu0 0.0
    %1102 = vmatpush1.msra.mxu0 0.0
    %1103 = vmatprep.subr.mxu0 0.0
    %1104 = vmatpush1.msra.mxu0 0.0
    %1105 = vmatprep.subr.mxu0 0.0
    %1106 = vmatpush1.msra.mxu0 0.0
    %1107 = vmatprep.subr.mxu0 0.0
    %1108 = vmatpush1.msra.mxu0 0.0
    %1109 = vmatprep.subr.mxu0 0.0
    %1110 = vmatpush1.msra.mxu0 0.0
    %1111 = vmatprep.subr.mxu0 0.0
    %1112 = vmatpush1.msra.mxu0 0.0
    %1113 = vmatprep.subr.mxu0 0.0
    %1114 = vmatpush1.msra.mxu0 0.0
    %1115 = vmatprep.subr.mxu0 0.0
    %1116 = vmatpush1.msra.mxu0 0.0
    %1117 = vmatprep.subr.mxu0 0.0
    %1118 = vmatpush1.msra.mxu0 0.0
    %1119 = vmatprep.subr.mxu0 0.0
    %1120 = vmatpush1.msra.mxu0 0.0
    %1121 = vmatprep.subr.mxu0 0.0
    %1122 = vmatpush1.msra.mxu0 0.0
    %1123 = vmatprep.subr.mxu0 0.0
    %1124 = vmatpush1.msra.mxu0 0.0
    %1125 = vmatprep.subr.mxu0 0.0
    %1126 = vmatpush1.msra.mxu0 0.0
    %1127 = vmatprep.subr.mxu0 0.0
    %1128 = vmatpush1.msra.mxu0 0.0
    %1129 = vmatprep.subr.mxu0 0.0
    %1130 = vmatpush1.msra.mxu0 0.0
    %1131 = vmatprep.mubr.f32.mxu0 0.0
    %1132 = vmatmul.mubr.f32.gmra.mrb[0].mxu0 %v1065
    %v1133 = vpop.f32.mrb[0].mxu0
    %v1134 = vadd.f32 0.0, %v1133
    %v1135 = vpop.f32.mrb[0].mxu0
    %1136 = vdwg.mxu0
    %v1137 = vld [vmem:[#allocation7 + $0x60] sm:$0xff]
    %1138 = vrot.lane.b32.xlu0 %v195, 56
    %v1139 = vpop.permute.xlu0 %1138
    %v1142 = vsel %vm291, %v979, 0
    %1144 = vmatprep.subr.mxu0 0.0
    %1145 = vmatpush1.msra.mxu0 %v1139
    %1146 = vmatprep.subr.mxu0 0.0
    %1147 = vmatpush1.msra.mxu0 0.0
    %1148 = vmatprep.subr.mxu0 0.0
    %1149 = vmatpush1.msra.mxu0 0.0
    %1150 = vmatprep.subr.mxu0 0.0
    %1151 = vmatpush1.msra.mxu0 0.0
    %1152 = vmatprep.subr.mxu0 0.0
    %1153 = vmatpush1.msra.mxu0 0.0
    %1154 = vmatprep.subr.mxu0 0.0
    %1155 = vmatpush1.msra.mxu0 0.0
    %1156 = vmatprep.subr.mxu0 0.0
    %1157 = vmatpush1.msra.mxu0 0.0
    %1158 = vmatprep.subr.mxu0 0.0
    %1159 = vmatpush1.msra.mxu0 0.0
    %1160 = vmatprep.subr.mxu0 0.0
    %1161 = vmatpush1.msra.mxu0 0.0
    %1162 = vmatprep.subr.mxu0 0.0
    %1163 = vmatpush1.msra.mxu0 0.0
    %1164 = vmatprep.subr.mxu0 0.0
    %1165 = vmatpush1.msra.mxu0 0.0
    %1166 = vmatprep.subr.mxu0 0.0
    %1167 = vmatpush1.msra.mxu0 0.0
    %1168 = vmatprep.subr.mxu0 0.0
    %1169 = vmatpush1.msra.mxu0 0.0
    %1170 = vmatprep.subr.mxu0 0.0
    %1171 = vmatpush1.msra.mxu0 0.0
    %1172 = vmatprep.subr.mxu0 0.0
    %1173 = vmatpush1.msra.mxu0 0.0
    %1174 = vmatprep.subr.mxu0 0.0
    %1175 = vmatpush1.msra.mxu0 0.0
    %1176 = vmatprep.subr.mxu0 0.0
    %1177 = vmatpush1.msra.mxu0 0.0
    %1178 = vmatprep.subr.mxu0 0.0
    %1179 = vmatpush1.msra.mxu0 0.0
    %1180 = vmatprep.subr.mxu0 0.0
    %1181 = vmatpush1.msra.mxu0 0.0
    %1182 = vmatprep.subr.mxu0 0.0
    %1183 = vmatpush1.msra.mxu0 0.0
    %1184 = vmatprep.subr.mxu0 0.0
    %1185 = vmatpush1.msra.mxu0 0.0
    %1186 = vmatprep.subr.mxu0 0.0
    %1187 = vmatpush1.msra.mxu0 0.0
    %1188 = vmatprep.subr.mxu0 0.0
    %1189 = vmatpush1.msra.mxu0 0.0
    %1190 = vmatprep.subr.mxu0 0.0
    %1191 = vmatpush1.msra.mxu0 0.0
    %1192 = vmatprep.subr.mxu0 0.0
    %1193 = vmatpush1.msra.mxu0 0.0
    %1194 = vmatprep.subr.mxu0 0.0
    %1195 = vmatpush1.msra.mxu0 0.0
    %1196 = vmatprep.subr.mxu0 0.0
    %1197 = vmatpush1.msra.mxu0 0.0
    %1198 = vmatprep.subr.mxu0 0.0
    %1199 = vmatpush1.msra.mxu0 0.0
    %1200 = vmatprep.subr.mxu0 0.0
    %1201 = vmatpush1.msra.mxu0 0.0
    %1202 = vmatprep.subr.mxu0 0.0
    %1203 = vmatpush1.msra.mxu0 0.0
    %1204 = vmatprep.subr.mxu0 0.0
    %1205 = vmatpush1.msra.mxu0 0.0
    %1206 = vmatprep.subr.mxu0 0.0
    %1207 = vmatpush1.msra.mxu0 0.0
    %1208 = vmatprep.mubr.f32.mxu0 0.0
    %1209 = vmatmul.mubr.f32.gmra.mrb[0].mxu0 %v1142
    %v1210 = vpop.f32.mrb[0].mxu0
    %v1211 = vadd.f32 0.0, %v1210
    %v1212 = vpop.f32.mrb[0].mxu0
    %1213 = vdwg.mxu0
    %1214 = vrot.lane.b32.xlu0 %v200, 56
    %v1215 = vpop.permute.xlu0 %1214
    %v1218 = vsel %vm291, %v980, 0
    %1220 = vmatprep.subr.mxu0 0.0
    %1221 = vmatpush1.msra.mxu0 %v1215
    %1222 = vmatprep.subr.mxu0 0.0
    %1223 = vmatpush1.msra.mxu0 0.0
    %1224 = vmatprep.subr.mxu0 0.0
    %1225 = vmatpush1.msra.mxu0 0.0
    %1226 = vmatprep.subr.mxu0 0.0
    %1227 = vmatpush1.msra.mxu0 0.0
    %1228 = vmatprep.subr.mxu0 0.0
    %1229 = vmatpush1.msra.mxu0 0.0
    %1230 = vmatprep.subr.mxu0 0.0
    %1231 = vmatpush1.msra.mxu0 0.0
    %1232 = vmatprep.subr.mxu0 0.0
    %1233 = vmatpush1.msra.mxu0 0.0
    %1234 = vmatprep.subr.mxu0 0.0
    %1235 = vmatpush1.msra.mxu0 0.0
    %1236 = vmatprep.subr.mxu0 0.0
    %1237 = vmatpush1.msra.mxu0 0.0
    %1238 = vmatprep.subr.mxu0 0.0
    %1239 = vmatpush1.msra.mxu0 0.0
    %1240 = vmatprep.subr.mxu0 0.0
    %1241 = vmatpush1.msra.mxu0 0.0
    %1242 = vmatprep.subr.mxu0 0.0
    %1243 = vmatpush1.msra.mxu0 0.0
    %1244 = vmatprep.subr.mxu0 0.0
    %1245 = vmatpush1.msra.mxu0 0.0
    %1246 = vmatprep.subr.mxu0 0.0
    %1247 = vmatpush1.msra.mxu0 0.0
    %1248 = vmatprep.subr.mxu0 0.0
    %1249 = vmatpush1.msra.mxu0 0.0
    %1250 = vmatprep.subr.mxu0 0.0
    %1251 = vmatpush1.msra.mxu0 0.0
    %1252 = vmatprep.subr.mxu0 0.0
    %1253 = vmatpush1.msra.mxu0 0.0
    %1254 = vmatprep.subr.mxu0 0.0
    %1255 = vmatpush1.msra.mxu0 0.0
    %1256 = vmatprep.subr.mxu0 0.0
    %1257 = vmatpush1.msra.mxu0 0.0
    %1258 = vmatprep.subr.mxu0 0.0
    %1259 = vmatpush1.msra.mxu0 0.0
    %1260 = vmatprep.subr.mxu0 0.0
    %1261 = vmatpush1.msra.mxu0 0.0
    %1262 = vmatprep.subr.mxu0 0.0
    %1263 = vmatpush1.msra.mxu0 0.0
    %1264 = vmatprep.subr.mxu0 0.0
    %1265 = vmatpush1.msra.mxu0 0.0
    %1266 = vmatprep.subr.mxu0 0.0
    %1267 = vmatpush1.msra.mxu0 0.0
    %1268 = vmatprep.subr.mxu0 0.0
    %1269 = vmatpush1.msra.mxu0 0.0
    %1270 = vmatprep.subr.mxu0 0.0
    %1271 = vmatpush1.msra.mxu0 0.0
    %1272 = vmatprep.subr.mxu0 0.0
    %1273 = vmatpush1.msra.mxu0 0.0
    %1274 = vmatprep.subr.mxu0 0.0
    %1275 = vmatpush1.msra.mxu0 0.0
    %1276 = vmatprep.subr.mxu0 0.0
    %1277 = vmatpush1.msra.mxu0 0.0
    %1278 = vmatprep.subr.mxu0 0.0
    %1279 = vmatpush1.msra.mxu0 0.0
    %1280 = vmatprep.subr.mxu0 0.0
    %1281 = vmatpush1.msra.mxu0 0.0
    %1282 = vmatprep.subr.mxu0 0.0
    %1283 = vmatpush1.msra.mxu0 0.0
    %1284 = vmatprep.mubr.f32.mxu0 0.0
    %1285 = vmatmul.mubr.f32.gmra.mrb[0].mxu0 %v1218
    %v1286 = vpop.f32.mrb[0].mxu0
    %v1287 = vadd.f32 0.0, %v1286
    %v1288 = vpop.f32.mrb[0].mxu0
    %1289 = vdwg.mxu0
    %v1290 = vld [vmem:[#allocation7 + $0x68] sm:$0xff]
    %v1292 = vsel %vm291, %v1211, 0
    %v1295 = vsel %vm291, %v1287, 0
    %1297 = vmatprep.subr.mxu0 0.0
    %1298 = vmatpush1.msra.mxu0 %v1290
    %1299 = vmatprep.subr.mxu0 0.0
    %1300 = vmatpush1.msra.mxu0 0.0
    %1301 = vmatprep.subr.mxu0 0.0
    %1302 = vmatpush1.msra.mxu0 0.0
    %1303 = vmatprep.subr.mxu0 0.0
    %1304 = vmatpush1.msra.mxu0 0.0
    %1305 = vmatprep.subr.mxu0 0.0
    %1306 = vmatpush1.msra.mxu0 0.0
    %1307 = vmatprep.subr.mxu0 0.0
    %1308 = vmatpush1.msra.mxu0 0.0
    %1309 = vmatprep.subr.mxu0 0.0
    %1310 = vmatpush1.msra.mxu0 0.0
    %1311 = vmatprep.subr.mxu0 0.0
    %1312 = vmatpush1.msra.mxu0 0.0
    %1313 = vmatprep.subr.mxu0 0.0
    %1314 = vmatpush1.msra.mxu0 0.0
    %1315 = vmatprep.subr.mxu0 0.0
    %1316 = vmatpush1.msra.mxu0 0.0
    %1317 = vmatprep.subr.mxu0 0.0
    %1318 = vmatpush1.msra.mxu0 0.0
    %1319 = vmatprep.subr.mxu0 0.0
    %1320 = vmatpush1.msra.mxu0 0.0
    %1321 = vmatprep.subr.mxu0 0.0
    %1322 = vmatpush1.msra.mxu0 0.0
    %1323 = vmatprep.subr.mxu0 0.0
    %1324 = vmatpush1.msra.mxu0 0.0
    %1325 = vmatprep.subr.mxu0 0.0
    %1326 = vmatpush1.msra.mxu0 0.0
    %1327 = vmatprep.subr.mxu0 0.0
    %1328 = vmatpush1.msra.mxu0 0.0
    %1329 = vmatprep.subr.mxu0 0.0
    %1330 = vmatpush1.msra.mxu0 0.0
    %1331 = vmatprep.subr.mxu0 0.0
    %1332 = vmatpush1.msra.mxu0 0.0
    %1333 = vmatprep.subr.mxu0 0.0
    %1334 = vmatpush1.msra.mxu0 0.0
    %1335 = vmatprep.subr.mxu0 0.0
    %1336 = vmatpush1.msra.mxu0 0.0
    %1337 = vmatprep.subr.mxu0 0.0
    %1338 = vmatpush1.msra.mxu0 0.0
    %1339 = vmatprep.subr.mxu0 0.0
    %1340 = vmatpush1.msra.mxu0 0.0
    %1341 = vmatprep.subr.mxu0 0.0
    %1342 = vmatpush1.msra.mxu0 0.0
    %1343 = vmatprep.subr.mxu0 0.0
    %1344 = vmatpush1.msra.mxu0 0.0
    %1345 = vmatprep.subr.mxu0 0.0
    %1346 = vmatpush1.msra.mxu0 0.0
    %1347 = vmatprep.subr.mxu0 0.0
    %1348 = vmatpush1.msra.mxu0 0.0
    %1349 = vmatprep.subr.mxu0 0.0
    %1350 = vmatpush1.msra.mxu0 0.0
    %1351 = vmatprep.subr.mxu0 0.0
    %1352 = vmatpush1.msra.mxu0 0.0
    %1353 = vmatprep.subr.mxu0 0.0
    %1354 = vmatpush1.msra.mxu0 0.0
    %1355 = vmatprep.subr.mxu0 0.0
    %1356 = vmatpush1.msra.mxu0 0.0
    %1357 = vmatprep.subr.mxu0 0.0
    %1358 = vmatpush1.msra.mxu0 0.0
    %1359 = vmatprep.subr.mxu0 0.0
    %1360 = vmatpush1.msra.mxu0 0.0
    %1361 = vmatprep.mubr.f32.mxu0 0.0
    %1362 = vmatmul.mubr.f32.gmra.mrb[0].mxu0 %v1292
    %v1363 = vpop.f32.mrb[0].mxu0
    %v1364 = vadd.f32 0.0, %v1363
    %v1365 = vpop.f32.mrb[0].mxu0
    %1366 = vmatprep.mubr.f32.mxu0 0.0
    %1367 = vmatmul.mubr.f32.gmra.mrb[0].mxu0 %v1295
    %v1368 = vpop.f32.mrb[0].mxu0
    %v1369 = vadd.f32 0.0, %v1368
    %v1370 = vpop.f32.mrb[0].mxu0
    %1371 = vdwg.mxu0
    %v1373 = vsel %vm291, %v1058, 0
    %v1376 = vsel %vm291, %v1134, 0
    %1378 = vmatprep.subr.mxu0 0.0
    %1379 = vmatpush1.msra.mxu0 %v1137
    %1380 = vmatprep.subr.mxu0 0.0
    %1381 = vmatpush1.msra.mxu0 0.0
    %1382 = vmatprep.subr.mxu0 0.0
    %1383 = vmatpush1.msra.mxu0 0.0
    %1384 = vmatprep.subr.mxu0 0.0
    %1385 = vmatpush1.msra.mxu0 0.0
    %1386 = vmatprep.subr.mxu0 0.0
    %1387 = vmatpush1.msra.mxu0 0.0
    %1388 = vmatprep.subr.mxu0 0.0
    %1389 = vmatpush1.msra.mxu0 0.0
    %1390 = vmatprep.subr.mxu0 0.0
    %1391 = vmatpush1.msra.mxu0 0.0
    %1392 = vmatprep.subr.mxu0 0.0
    %1393 = vmatpush1.msra.mxu0 0.0
    %1394 = vmatprep.subr.mxu0 0.0
    %1395 = vmatpush1.msra.mxu0 0.0
    %1396 = vmatprep.subr.mxu0 0.0
    %1397 = vmatpush1.msra.mxu0 0.0
    %1398 = vmatprep.subr.mxu0 0.0
    %1399 = vmatpush1.msra.mxu0 0.0
    %1400 = vmatprep.subr.mxu0 0.0
    %1401 = vmatpush1.msra.mxu0 0.0
    %1402 = vmatprep.subr.mxu0 0.0
    %1403 = vmatpush1.msra.mxu0 0.0
    %1404 = vmatprep.subr.mxu0 0.0
    %1405 = vmatpush1.msra.mxu0 0.0
    %1406 = vmatprep.subr.mxu0 0.0
    %1407 = vmatpush1.msra.mxu0 0.0
    %1408 = vmatprep.subr.mxu0 0.0
    %1409 = vmatpush1.msra.mxu0 0.0
    %1410 = vmatprep.subr.mxu0 0.0
    %1411 = vmatpush1.msra.mxu0 0.0
    %1412 = vmatprep.subr.mxu0 0.0
    %1413 = vmatpush1.msra.mxu0 0.0
    %1414 = vmatprep.subr.mxu0 0.0
    %1415 = vmatpush1.msra.mxu0 0.0
    %1416 = vmatprep.subr.mxu0 0.0
    %1417 = vmatpush1.msra.mxu0 0.0
    %1418 = vmatprep.subr.mxu0 0.0
    %1419 = vmatpush1.msra.mxu0 0.0
    %1420 = vmatprep.subr.mxu0 0.0
    %1421 = vmatpush1.msra.mxu0 0.0
    %1422 = vmatprep.subr.mxu0 0.0
    %1423 = vmatpush1.msra.mxu0 0.0
    %1424 = vmatprep.subr.mxu0 0.0
    %1425 = vmatpush1.msra.mxu0 0.0
    %1426 = vmatprep.subr.mxu0 0.0
    %1427 = vmatpush1.msra.mxu0 0.0
    %1428 = vmatprep.subr.mxu0 0.0
    %1429 = vmatpush1.msra.mxu0 0.0
    %1430 = vmatprep.subr.mxu0 0.0
    %1431 = vmatpush1.msra.mxu0 0.0
    %1432 = vmatprep.subr.mxu0 0.0
    %1433 = vmatpush1.msra.mxu0 0.0
    %1434 = vmatprep.subr.mxu0 0.0
    %1435 = vmatpush1.msra.mxu0 0.0
    %1436 = vmatprep.subr.mxu0 0.0
    %1437 = vmatpush1.msra.mxu0 0.0
    %1438 = vmatprep.subr.mxu0 0.0
    %1439 = vmatpush1.msra.mxu0 0.0
    %1440 = vmatprep.subr.mxu0 0.0
    %1441 = vmatpush1.msra.mxu0 0.0
    %1442 = vmatprep.mubr.f32.mxu0 0.0
    %1443 = vmatmul.mubr.f32.gmra.mrb[0].mxu0 %v1373
    %v1444 = vpop.f32.mrb[0].mxu0
    %v1445 = vadd.f32 %v1364, %v1444
    %v1446 = vpop.f32.mrb[0].mxu0
    %1447 = vmatprep.mubr.f32.mxu0 0.0
    %1448 = vmatmul.mubr.f32.gmra.mrb[0].mxu0 %v1376
    %v1449 = vpop.f32.mrb[0].mxu0
    %v1450 = vadd.f32 %v1369, %v1449
    %v1451 = vpop.f32.mrb[0].mxu0
    %1452 = vdwg.mxu0
    %1453 = vrot.lane.b32.xlu0 %v195, 48
    %v1454 = vpop.permute.xlu0 %1453
    %v1457 = vsel %vm291, %v981, 0
    %1459 = vmatprep.subr.mxu0 0.0
    %1460 = vmatpush1.msra.mxu0 %v1454
    %1461 = vmatprep.subr.mxu0 0.0
    %1462 = vmatpush1.msra.mxu0 0.0
    %1463 = vmatprep.subr.mxu0 0.0
    %1464 = vmatpush1.msra.mxu0 0.0
    %1465 = vmatprep.subr.mxu0 0.0
    %1466 = vmatpush1.msra.mxu0 0.0
    %1467 = vmatprep.subr.mxu0 0.0
    %1468 = vmatpush1.msra.mxu0 0.0
    %1469 = vmatprep.subr.mxu0 0.0
    %1470 = vmatpush1.msra.mxu0 0.0
    %1471 = vmatprep.subr.mxu0 0.0
    %1472 = vmatpush1.msra.mxu0 0.0
    %1473 = vmatprep.subr.mxu0 0.0
    %1474 = vmatpush1.msra.mxu0 0.0
    %1475 = vmatprep.subr.mxu0 0.0
    %1476 = vmatpush1.msra.mxu0 0.0
    %1477 = vmatprep.subr.mxu0 0.0
    %1478 = vmatpush1.msra.mxu0 0.0
    %1479 = vmatprep.subr.mxu0 0.0
    %1480 = vmatpush1.msra.mxu0 0.0
    %1481 = vmatprep.subr.mxu0 0.0
    %1482 = vmatpush1.msra.mxu0 0.0
    %1483 = vmatprep.subr.mxu0 0.0
    %1484 = vmatpush1.msra.mxu0 0.0
    %1485 = vmatprep.subr.mxu0 0.0
    %1486 = vmatpush1.msra.mxu0 0.0
    %1487 = vmatprep.subr.mxu0 0.0
    %1488 = vmatpush1.msra.mxu0 0.0
    %1489 = vmatprep.subr.mxu0 0.0
    %1490 = vmatpush1.msra.mxu0 0.0
    %1491 = vmatprep.subr.mxu0 0.0
    %1492 = vmatpush1.msra.mxu0 0.0
    %1493 = vmatprep.subr.mxu0 0.0
    %1494 = vmatpush1.msra.mxu0 0.0
    %1495 = vmatprep.subr.mxu0 0.0
    %1496 = vmatpush1.msra.mxu0 0.0
    %1497 = vmatprep.subr.mxu0 0.0
    %1498 = vmatpush1.msra.mxu0 0.0
    %1499 = vmatprep.subr.mxu0 0.0
    %1500 = vmatpush1.msra.mxu0 0.0
    %1501 = vmatprep.subr.mxu0 0.0
    %1502 = vmatpush1.msra.mxu0 0.0
    %1503 = vmatprep.subr.mxu0 0.0
    %1504 = vmatpush1.msra.mxu0 0.0
    %1505 = vmatprep.subr.mxu0 0.0
    %1506 = vmatpush1.msra.mxu0 0.0
    %1507 = vmatprep.subr.mxu0 0.0
    %1508 = vmatpush1.msra.mxu0 0.0
    %1509 = vmatprep.subr.mxu0 0.0
    %1510 = vmatpush1.msra.mxu0 0.0
    %1511 = vmatprep.subr.mxu0 0.0
    %1512 = vmatpush1.msra.mxu0 0.0
    %1513 = vmatprep.subr.mxu0 0.0
    %1514 = vmatpush1.msra.mxu0 0.0
    %1515 = vmatprep.subr.mxu0 0.0
    %1516 = vmatpush1.msra.mxu0 0.0
    %1517 = vmatprep.subr.mxu0 0.0
    %1518 = vmatpush1.msra.mxu0 0.0
    %1519 = vmatprep.subr.mxu0 0.0
    %1520 = vmatpush1.msra.mxu0 0.0
    %1521 = vmatprep.subr.mxu0 0.0
    %1522 = vmatpush1.msra.mxu0 0.0
    %1523 = vmatprep.mubr.f32.mxu0 0.0
    %1524 = vmatmul.mubr.f32.gmra.mrb[0].mxu0 %v1457
    %v1525 = vpop.f32.mrb[0].mxu0
    %v1526 = vadd.f32 0.0, %v1525
    %v1527 = vpop.f32.mrb[0].mxu0
    %1528 = vdwg.mxu0
    %1529 = vrot.lane.b32.xlu0 %v200, 48
    %v1530 = vpop.permute.xlu0 %1529
    %v1533 = vsel %vm291, %v982, 0
    %1535 = vmatprep.subr.mxu0 0.0
    %1536 = vmatpush1.msra.mxu0 %v1530
    %1537 = vmatprep.subr.mxu0 0.0
    %1538 = vmatpush1.msra.mxu0 0.0
    %1539 = vmatprep.subr.mxu0 0.0
    %1540 = vmatpush1.msra.mxu0 0.0
    %1541 = vmatprep.subr.mxu0 0.0
    %1542 = vmatpush1.msra.mxu0 0.0
    %1543 = vmatprep.subr.mxu0 0.0
    %1544 = vmatpush1.msra.mxu0 0.0
    %1545 = vmatprep.subr.mxu0 0.0
    %1546 = vmatpush1.msra.mxu0 0.0
    %1547 = vmatprep.subr.mxu0 0.0
    %1548 = vmatpush1.msra.mxu0 0.0
    %1549 = vmatprep.subr.mxu0 0.0
    %1550 = vmatpush1.msra.mxu0 0.0
    %1551 = vmatprep.subr.mxu0 0.0
    %1552 = vmatpush1.msra.mxu0 0.0
    %1553 = vmatprep.subr.mxu0 0.0
    %1554 = vmatpush1.msra.mxu0 0.0
    %1555 = vmatprep.subr.mxu0 0.0
    %1556 = vmatpush1.msra.mxu0 0.0
    %1557 = vmatprep.subr.mxu0 0.0
    %1558 = vmatpush1.msra.mxu0 0.0
    %1559 = vmatprep.subr.mxu0 0.0
    %1560 = vmatpush1.msra.mxu0 0.0
    %1561 = vmatprep.subr.mxu0 0.0
    %1562 = vmatpush1.msra.mxu0 0.0
    %1563 = vmatprep.subr.mxu0 0.0
    %1564 = vmatpush1.msra.mxu0 0.0
    %1565 = vmatprep.subr.mxu0 0.0
    %1566 = vmatpush1.msra.mxu0 0.0
    %1567 = vmatprep.subr.mxu0 0.0
    %1568 = vmatpush1.msra.mxu0 0.0
    %1569 = vmatprep.subr.mxu0 0.0
    %1570 = vmatpush1.msra.mxu0 0.0
    %1571 = vmatprep.subr.mxu0 0.0
    %1572 = vmatpush1.msra.mxu0 0.0
    %1573 = vmatprep.subr.mxu0 0.0
    %1574 = vmatpush1.msra.mxu0 0.0
    %1575 = vmatprep.subr.mxu0 0.0
    %1576 = vmatpush1.msra.mxu0 0.0
    %1577 = vmatprep.subr.mxu0 0.0
    %1578 = vmatpush1.msra.mxu0 0.0
    %1579 = vmatprep.subr.mxu0 0.0
    %1580 = vmatpush1.msra.mxu0 0.0
    %1581 = vmatprep.subr.mxu0 0.0
    %1582 = vmatpush1.msra.mxu0 0.0
    %1583 = vmatprep.subr.mxu0 0.0
    %1584 = vmatpush1.msra.mxu0 0.0
    %1585 = vmatprep.subr.mxu0 0.0
    %1586 = vmatpush1.msra.mxu0 0.0
    %1587 = vmatprep.subr.mxu0 0.0
    %1588 = vmatpush1.msra.mxu0 0.0
    %1589 = vmatprep.subr.mxu0 0.0
    %1590 = vmatpush1.msra.mxu0 0.0
    %1591 = vmatprep.subr.mxu0 0.0
    %1592 = vmatpush1.msra.mxu0 0.0
    %1593 = vmatprep.subr.mxu0 0.0
    %1594 = vmatpush1.msra.mxu0 0.0
    %1595 = vmatprep.subr.mxu0 0.0
    %1596 = vmatpush1.msra.mxu0 0.0
    %1597 = vmatprep.subr.mxu0 0.0
    %1598 = vmatpush1.msra.mxu0 0.0
    %1599 = vmatprep.mubr.f32.mxu0 0.0
    %1600 = vmatmul.mubr.f32.gmra.mrb[0].mxu0 %v1533
    %v1601 = vpop.f32.mrb[0].mxu0
    %v1602 = vadd.f32 0.0, %v1601
    %v1603 = vpop.f32.mrb[0].mxu0
    %1604 = vdwg.mxu0
    %v1605 = vld [vmem:[#allocation7 + $0x70] sm:$0xff]
    %v1607 = vsel %vm291, %v1526, 0
    %v1610 = vsel %vm291, %v1602, 0
    %1612 = vmatprep.subr.mxu0 0.0
    %1613 = vmatpush1.msra.mxu0 %v1605
    %1614 = vmatprep.subr.mxu0 0.0
    %1615 = vmatpush1.msra.mxu0 0.0
    %1616 = vmatprep.subr.mxu0 0.0
    %1617 = vmatpush1.msra.mxu0 0.0
    %1618 = vmatprep.subr.mxu0 0.0
    %1619 = vmatpush1.msra.mxu0 0.0
    %1620 = vmatprep.subr.mxu0 0.0
    %1621 = vmatpush1.msra.mxu0 0.0
    %1622 = vmatprep.subr.mxu0 0.0
    %1623 = vmatpush1.msra.mxu0 0.0
    %1624 = vmatprep.subr.mxu0 0.0
    %1625 = vmatpush1.msra.mxu0 0.0
    %1626 = vmatprep.subr.mxu0 0.0
    %1627 = vmatpush1.msra.mxu0 0.0
    %1628 = vmatprep.subr.mxu0 0.0
    %1629 = vmatpush1.msra.mxu0 0.0
    %1630 = vmatprep.subr.mxu0 0.0
    %1631 = vmatpush1.msra.mxu0 0.0
    %1632 = vmatprep.subr.mxu0 0.0
    %1633 = vmatpush1.msra.mxu0 0.0
    %1634 = vmatprep.subr.mxu0 0.0
    %1635 = vmatpush1.msra.mxu0 0.0
    %1636 = vmatprep.subr.mxu0 0.0
    %1637 = vmatpush1.msra.mxu0 0.0
    %1638 = vmatprep.subr.mxu0 0.0
    %1639 = vmatpush1.msra.mxu0 0.0
    %1640 = vmatprep.subr.mxu0 0.0
    %1641 = vmatpush1.msra.mxu0 0.0
    %1642 = vmatprep.subr.mxu0 0.0
    %1643 = vmatpush1.msra.mxu0 0.0
    %1644 = vmatprep.subr.mxu0 0.0
    %1645 = vmatpush1.msra.mxu0 0.0
    %1646 = vmatprep.subr.mxu0 0.0
    %1647 = vmatpush1.msra.mxu0 0.0
    %1648 = vmatprep.subr.mxu0 0.0
    %1649 = vmatpush1.msra.mxu0 0.0
    %1650 = vmatprep.subr.mxu0 0.0
    %1651 = vmatpush1.msra.mxu0 0.0
    %1652 = vmatprep.subr.mxu0 0.0
    %1653 = vmatpush1.msra.mxu0 0.0
    %1654 = vmatprep.subr.mxu0 0.0
    %1655 = vmatpush1.msra.mxu0 0.0
    %1656 = vmatprep.subr.mxu0 0.0
    %1657 = vmatpush1.msra.mxu0 0.0
    %1658 = vmatprep.subr.mxu0 0.0
    %1659 = vmatpush1.msra.mxu0 0.0
    %1660 = vmatprep.subr.mxu0 0.0
    %1661 = vmatpush1.msra.mxu0 0.0
    %1662 = vmatprep.subr.mxu0 0.0
    %1663 = vmatpush1.msra.mxu0 0.0
    %1664 = vmatprep.subr.mxu0 0.0
    %1665 = vmatpush1.msra.mxu0 0.0
    %1666 = vmatprep.subr.mxu0 0.0
    %1667 = vmatpush1.msra.mxu0 0.0
    %1668 = vmatprep.subr.mxu0 0.0
    %1669 = vmatpush1.msra.mxu0 0.0
    %1670 = vmatprep.subr.mxu0 0.0
    %1671 = vmatpush1.msra.mxu0 0.0
    %1672 = vmatprep.subr.mxu0 0.0
    %1673 = vmatpush1.msra.mxu0 0.0
    %1674 = vmatprep.subr.mxu0 0.0
    %1675 = vmatpush1.msra.mxu0 0.0
    %1676 = vmatprep.mubr.f32.mxu0 0.0
    %1677 = vmatmul.mubr.f32.gmra.mrb[0].mxu0 %v1607
    %v1678 = vpop.f32.mrb[0].mxu0
    %v1679 = vadd.f32 0.0, %v1678
    %v1680 = vpop.f32.mrb[0].mxu0
    %1681 = vmatprep.mubr.f32.mxu0 0.0
    %1682 = vmatmul.mubr.f32.gmra.mrb[0].mxu0 %v1610
    %v1683 = vpop.f32.mrb[0].mxu0
    %v1684 = vadd.f32 0.0, %v1683
    %v1685 = vpop.f32.mrb[0].mxu0
    %1686 = vdwg.mxu0
    %v1687 = vadd.f32 %v1445, %v1679
    %v1688 = vadd.f32 %v1450, %v1684
    %1689 = vrot.lane.b32.xlu0 %v195, 40
    %v1690 = vpop.permute.xlu0 %1689
    %v1693 = vsel %vm291, %v983, 0
    %1695 = vmatprep.subr.mxu0 0.0
    %1696 = vmatpush1.msra.mxu0 %v1690
    %1697 = vmatprep.subr.mxu0 0.0
    %1698 = vmatpush1.msra.mxu0 0.0
    %1699 = vmatprep.subr.mxu0 0.0
    %1700 = vmatpush1.msra.mxu0 0.0
    %1701 = vmatprep.subr.mxu0 0.0
    %1702 = vmatpush1.msra.mxu0 0.0
    %1703 = vmatprep.subr.mxu0 0.0
    %1704 = vmatpush1.msra.mxu0 0.0
    %1705 = vmatprep.subr.mxu0 0.0
    %1706 = vmatpush1.msra.mxu0 0.0
    %1707 = vmatprep.subr.mxu0 0.0
    %1708 = vmatpush1.msra.mxu0 0.0
    %1709 = vmatprep.subr.mxu0 0.0
    %1710 = vmatpush1.msra.mxu0 0.0
    %1711 = vmatprep.subr.mxu0 0.0
    %1712 = vmatpush1.msra.mxu0 0.0
    %1713 = vmatprep.subr.mxu0 0.0
    %1714 = vmatpush1.msra.mxu0 0.0
    %1715 = vmatprep.subr.mxu0 0.0
    %1716 = vmatpush1.msra.mxu0 0.0
    %1717 = vmatprep.subr.mxu0 0.0
    %1718 = vmatpush1.msra.mxu0 0.0
    %1719 = vmatprep.subr.mxu0 0.0
    %1720 = vmatpush1.msra.mxu0 0.0
    %1721 = vmatprep.subr.mxu0 0.0
    %1722 = vmatpush1.msra.mxu0 0.0
    %1723 = vmatprep.subr.mxu0 0.0
    %1724 = vmatpush1.msra.mxu0 0.0
    %1725 = vmatprep.subr.mxu0 0.0
    %1726 = vmatpush1.msra.mxu0 0.0
    %1727 = vmatprep.subr.mxu0 0.0
    %1728 = vmatpush1.msra.mxu0 0.0
    %1729 = vmatprep.subr.mxu0 0.0
    %1730 = vmatpush1.msra.mxu0 0.0
    %1731 = vmatprep.subr.mxu0 0.0
    %1732 = vmatpush1.msra.mxu0 0.0
    %1733 = vmatprep.subr.mxu0 0.0
    %1734 = vmatpush1.msra.mxu0 0.0
    %1735 = vmatprep.subr.mxu0 0.0
    %1736 = vmatpush1.msra.mxu0 0.0
    %1737 = vmatprep.subr.mxu0 0.0
    %1738 = vmatpush1.msra.mxu0 0.0
    %1739 = vmatprep.subr.mxu0 0.0
    %1740 = vmatpush1.msra.mxu0 0.0
    %1741 = vmatprep.subr.mxu0 0.0
    %1742 = vmatpush1.msra.mxu0 0.0
    %1743 = vmatprep.subr.mxu0 0.0
    %1744 = vmatpush1.msra.mxu0 0.0
    %1745 = vmatprep.subr.mxu0 0.0
    %1746 = vmatpush1.msra.mxu0 0.0
    %1747 = vmatprep.subr.mxu0 0.0
    %1748 = vmatpush1.msra.mxu0 0.0
    %1749 = vmatprep.subr.mxu0 0.0
    %1750 = vmatpush1.msra.mxu0 0.0
    %1751 = vmatprep.subr.mxu0 0.0
    %1752 = vmatpush1.msra.mxu0 0.0
    %1753 = vmatprep.subr.mxu0 0.0
    %1754 = vmatpush1.msra.mxu0 0.0
    %1755 = vmatprep.subr.mxu0 0.0
    %1756 = vmatpush1.msra.mxu0 0.0
    %1757 = vmatprep.subr.mxu0 0.0
    %1758 = vmatpush1.msra.mxu0 0.0
    %1759 = vmatprep.mubr.f32.mxu0 0.0
    %1760 = vmatmul.mubr.f32.gmra.mrb[0].mxu0 %v1693
    %v1761 = vpop.f32.mrb[0].mxu0
    %v1762 = vadd.f32 0.0, %v1761
    %v1763 = vpop.f32.mrb[0].mxu0
    %1764 = vdwg.mxu0
    %1765 = vrot.lane.b32.xlu0 %v200, 40
    %v1766 = vpop.permute.xlu0 %1765
    %v1769 = vsel %vm291, %v984, 0
    %1771 = vmatprep.subr.mxu0 0.0
    %1772 = vmatpush1.msra.mxu0 %v1766
    %1773 = vmatprep.subr.mxu0 0.0
    %1774 = vmatpush1.msra.mxu0 0.0
    %1775 = vmatprep.subr.mxu0 0.0
    %1776 = vmatpush1.msra.mxu0 0.0
    %1777 = vmatprep.subr.mxu0 0.0
    %1778 = vmatpush1.msra.mxu0 0.0
    %1779 = vmatprep.subr.mxu0 0.0
    %1780 = vmatpush1.msra.mxu0 0.0
    %1781 = vmatprep.subr.mxu0 0.0
    %1782 = vmatpush1.msra.mxu0 0.0
    %1783 = vmatprep.subr.mxu0 0.0
    %1784 = vmatpush1.msra.mxu0 0.0
    %1785 = vmatprep.subr.mxu0 0.0
    %1786 = vmatpush1.msra.mxu0 0.0
    %1787 = vmatprep.subr.mxu0 0.0
    %1788 = vmatpush1.msra.mxu0 0.0
    %1789 = vmatprep.subr.mxu0 0.0
    %1790 = vmatpush1.msra.mxu0 0.0
    %1791 = vmatprep.subr.mxu0 0.0
    %1792 = vmatpush1.msra.mxu0 0.0
    %1793 = vmatprep.subr.mxu0 0.0
    %1794 = vmatpush1.msra.mxu0 0.0
    %1795 = vmatprep.subr.mxu0 0.0
    %1796 = vmatpush1.msra.mxu0 0.0
    %1797 = vmatprep.subr.mxu0 0.0
    %1798 = vmatpush1.msra.mxu0 0.0
    %1799 = vmatprep.subr.mxu0 0.0
    %1800 = vmatpush1.msra.mxu0 0.0
    %1801 = vmatprep.subr.mxu0 0.0
    %1802 = vmatpush1.msra.mxu0 0.0
    %1803 = vmatprep.subr.mxu0 0.0
    %1804 = vmatpush1.msra.mxu0 0.0
    %1805 = vmatprep.subr.mxu0 0.0
    %1806 = vmatpush1.msra.mxu0 0.0
    %1807 = vmatprep.subr.mxu0 0.0
    %1808 = vmatpush1.msra.mxu0 0.0
    %1809 = vmatprep.subr.mxu0 0.0
    %1810 = vmatpush1.msra.mxu0 0.0
    %1811 = vmatprep.subr.mxu0 0.0
    %1812 = vmatpush1.msra.mxu0 0.0
    %1813 = vmatprep.subr.mxu0 0.0
    %1814 = vmatpush1.msra.mxu0 0.0
    %1815 = vmatprep.subr.mxu0 0.0
    %1816 = vmatpush1.msra.mxu0 0.0
    %1817 = vmatprep.subr.mxu0 0.0
    %1818 = vmatpush1.msra.mxu0 0.0
    %1819 = vmatprep.subr.mxu0 0.0
    %1820 = vmatpush1.msra.mxu0 0.0
    %1821 = vmatprep.subr.mxu0 0.0
    %1822 = vmatpush1.msra.mxu0 0.0
    %1823 = vmatprep.subr.mxu0 0.0
    %1824 = vmatpush1.msra.mxu0 0.0
    %1825 = vmatprep.subr.mxu0 0.0
    %1826 = vmatpush1.msra.mxu0 0.0
    %1827 = vmatprep.subr.mxu0 0.0
    %1828 = vmatpush1.msra.mxu0 0.0
    %1829 = vmatprep.subr.mxu0 0.0
    %1830 = vmatpush1.msra.mxu0 0.0
    %1831 = vmatprep.subr.mxu0 0.0
    %1832 = vmatpush1.msra.mxu0 0.0
    %1833 = vmatprep.subr.mxu0 0.0
    %1834 = vmatpush1.msra.mxu0 0.0
    %1835 = vmatprep.mubr.f32.mxu0 0.0
    %1836 = vmatmul.mubr.f32.gmra.mrb[0].mxu0 %v1769
    %v1837 = vpop.f32.mrb[0].mxu0
    %v1838 = vadd.f32 0.0, %v1837
    %v1839 = vpop.f32.mrb[0].mxu0
    %1840 = vdwg.mxu0
    %v1841 = vld [vmem:[#allocation7 + $0x78] sm:$0xff]
    %v1843 = vsel %vm291, %v1762, 0
    %v1846 = vsel %vm291, %v1838, 0
    %1848 = vmatprep.subr.mxu0 0.0
    %1849 = vmatpush1.msra.mxu0 %v1841
    %1850 = vmatprep.subr.mxu0 0.0
    %1851 = vmatpush1.msra.mxu0 0.0
    %1852 = vmatprep.subr.mxu0 0.0
    %1853 = vmatpush1.msra.mxu0 0.0
    %1854 = vmatprep.subr.mxu0 0.0
    %1855 = vmatpush1.msra.mxu0 0.0
    %1856 = vmatprep.subr.mxu0 0.0
    %1857 = vmatpush1.msra.mxu0 0.0
    %1858 = vmatprep.subr.mxu0 0.0
    %1859 = vmatpush1.msra.mxu0 0.0
    %1860 = vmatprep.subr.mxu0 0.0
    %1861 = vmatpush1.msra.mxu0 0.0
    %1862 = vmatprep.subr.mxu0 0.0
    %1863 = vmatpush1.msra.mxu0 0.0
    %1864 = vmatprep.subr.mxu0 0.0
    %1865 = vmatpush1.msra.mxu0 0.0
    %1866 = vmatprep.subr.mxu0 0.0
    %1867 = vmatpush1.msra.mxu0 0.0
    %1868 = vmatprep.subr.mxu0 0.0
    %1869 = vmatpush1.msra.mxu0 0.0
    %1870 = vmatprep.subr.mxu0 0.0
    %1871 = vmatpush1.msra.mxu0 0.0
    %1872 = vmatprep.subr.mxu0 0.0
    %1873 = vmatpush1.msra.mxu0 0.0
    %1874 = vmatprep.subr.mxu0 0.0
    %1875 = vmatpush1.msra.mxu0 0.0
    %1876 = vmatprep.subr.mxu0 0.0
    %1877 = vmatpush1.msra.mxu0 0.0
    %1878 = vmatprep.subr.mxu0 0.0
    %1879 = vmatpush1.msra.mxu0 0.0
    %1880 = vmatprep.subr.mxu0 0.0
    %1881 = vmatpush1.msra.mxu0 0.0
    %1882 = vmatprep.subr.mxu0 0.0
    %1883 = vmatpush1.msra.mxu0 0.0
    %1884 = vmatprep.subr.mxu0 0.0
    %1885 = vmatpush1.msra.mxu0 0.0
    %1886 = vmatprep.subr.mxu0 0.0
    %1887 = vmatpush1.msra.mxu0 0.0
    %1888 = vmatprep.subr.mxu0 0.0
    %1889 = vmatpush1.msra.mxu0 0.0
    %1890 = vmatprep.subr.mxu0 0.0
    %1891 = vmatpush1.msra.mxu0 0.0
    %1892 = vmatprep.subr.mxu0 0.0
    %1893 = vmatpush1.msra.mxu0 0.0
    %1894 = vmatprep.subr.mxu0 0.0
    %1895 = vmatpush1.msra.mxu0 0.0
    %1896 = vmatprep.subr.mxu0 0.0
    %1897 = vmatpush1.msra.mxu0 0.0
    %1898 = vmatprep.subr.mxu0 0.0
    %1899 = vmatpush1.msra.mxu0 0.0
    %1900 = vmatprep.subr.mxu0 0.0
    %1901 = vmatpush1.msra.mxu0 0.0
    %1902 = vmatprep.subr.mxu0 0.0
    %1903 = vmatpush1.msra.mxu0 0.0
    %1904 = vmatprep.subr.mxu0 0.0
    %1905 = vmatpush1.msra.mxu0 0.0
    %1906 = vmatprep.subr.mxu0 0.0
    %1907 = vmatpush1.msra.mxu0 0.0
    %1908 = vmatprep.subr.mxu0 0.0
    %1909 = vmatpush1.msra.mxu0 0.0
    %1910 = vmatprep.subr.mxu0 0.0
    %1911 = vmatpush1.msra.mxu0 0.0
    %1912 = vmatprep.mubr.f32.mxu0 0.0
    %1913 = vmatmul.mubr.f32.gmra.mrb[0].mxu0 %v1843
    %v1914 = vpop.f32.mrb[0].mxu0
    %v1915 = vadd.f32 0.0, %v1914
    %v1916 = vpop.f32.mrb[0].mxu0
    %1917 = vmatprep.mubr.f32.mxu0 0.0
    %1918 = vmatmul.mubr.f32.gmra.mrb[0].mxu0 %v1846
    %v1919 = vpop.f32.mrb[0].mxu0
    %v1920 = vadd.f32 0.0, %v1919
    %v1921 = vpop.f32.mrb[0].mxu0
    %1922 = vdwg.mxu0
    %v1923 = vadd.f32 %v1687, %v1915
    %v1924 = vadd.f32 %v1688, %v1920
    %v1925 = vlaneseq
    %v1926 = vshrl.u32 %v1925, 7
    %v1927 = vsub.s32 0, %v1926
    %v1928 = vrot.slane %v108, %v1927
    %v1929 = vadd.f32 %v1923, %v1928
    %v1930 = vadd.f32 %v1924, %v1928
    %v1931 = vadd.f32 %v68, %v1929
    %v1932 = vadd.f32 %v69, %v1930
    %v1933 = vsel %vm121, %v1931, 0.0
    %1934 = vadd.xlane.f32.xlu0 %v1933
    %v1935 = vpop.xlane.xlu0 %1934
    %v1936 = vsel %vm121, %v1932, 0.0
    %1937 = vadd.xlane.f32.xlu0 %v1936
    %v1938 = vpop.xlane.xlu0 %1937
    %v1939 = vrcp.pop 32.0
    %v1940 = vmul.f32 %v1935, %v1939
    %v1941 = vmul.f32 %v1938, %v1939
    %v1942 = vsub.f32 %v1931, %v1940
    %v1943 = vsub.f32 %v1932, %v1941
    %v1944 = vmul.f32 %v1942, %v1942
    %v1945 = vmul.f32 %v1943, %v1943
    %v1946 = vsel %vm121, %v1944, 0.0
    %1947 = vadd.xlane.f32.xlu0 %v1946
    %v1948 = vpop.xlane.xlu0 %1947
    %v1949 = vsel %vm121, %v1945, 0.0
    %1950 = vadd.xlane.f32.xlu0 %v1949
    %v1951 = vpop.xlane.xlu0 %1950
    %v1952 = vmul.f32 %v1948, %v1939
    %v1953 = vmul.f32 %v1951, %v1939
    %v1954 = vadd.f32 %v1952, 1e-05
    %v1955 = vadd.f32 %v1953, 1e-05
    %v1956 = vrsqrt.pop %v1954
    %v1957 = vrsqrt.pop %v1955
    %v1958 = vmul.f32 %v1942, %v1956
    %v1959 = vmul.f32 %v1943, %v1957
    %v1960 = vlaneseq
    %v1961 = vshrl.u32 %v1960, 7
    %v1962 = vsub.s32 0, %v1961
    %v1963 = vrot.slane %v111, %v1962
    %v1964 = vmul.f32 %v1958, %v1963
    %v1965 = vmul.f32 %v1959, %v1963
    %v1966 = vlaneseq
    %v1967 = vshrl.u32 %v1966, 7
    %v1968 = vsub.s32 0, %v1967
    %v1969 = vrot.slane %v112, %v1968
    %v1970 = vadd.f32 %v1964, %v1969
    %v1971 = vadd.f32 %v1965, %v1969
    %v1972 = vlaneseq
    %v1973 = vshrl.u32 %v1972, 7
    %v1974 = vsub.s32 0, %v1973
    %v1975 = vrot.slane %v106, %v1974
    %v1977 = vsel %vm121, %v1970, 0
    %v1980 = vsel %vm121, %v1971, 0
    %1982 = vmatprep.subr.mxu0 0.0
    %1983 = vmatpush1.msra.mxu0 %v88
    %1984 = vmatprep.subr.mxu0 0.0
    %1985 = vmatpush1.msra.mxu0 %v89
    %1986 = vmatprep.subr.mxu0 0.0
    %1987 = vmatpush1.msra.mxu0 %v90
    %1988 = vmatprep.subr.mxu0 0.0
    %1989 = vmatpush1.msra.mxu0 %v91
    %1990 = vmatprep.subr.mxu0 0.0
    %1991 = vmatpush1.msra.mxu0 0.0
    %1992 = vmatprep.subr.mxu0 0.0
    %1993 = vmatpush1.msra.mxu0 0.0
    %1994 = vmatprep.subr.mxu0 0.0
    %1995 = vmatpush1.msra.mxu0 0.0
    %1996 = vmatprep.subr.mxu0 0.0
    %1997 = vmatpush1.msra.mxu0 0.0
    %1998 = vmatprep.subr.mxu0 0.0
    %1999 = vmatpush1.msra.mxu0 0.0
    %2000 = vmatprep.subr.mxu0 0.0
    %2001 = vmatpush1.msra.mxu0 0.0
    %2002 = vmatprep.subr.mxu0 0.0
    %2003 = vmatpush1.msra.mxu0 0.0
    %2004 = vmatprep.subr.mxu0 0.0
    %2005 = vmatpush1.msra.mxu0 0.0
    %2006 = vmatprep.subr.mxu0 0.0
    %2007 = vmatpush1.msra.mxu0 0.0
    %2008 = vmatprep.subr.mxu0 0.0
    %2009 = vmatpush1.msra.mxu0 0.0
    %2010 = vmatprep.subr.mxu0 0.0
    %2011 = vmatpush1.msra.mxu0 0.0
    %2012 = vmatprep.subr.mxu0 0.0
    %2013 = vmatpush1.msra.mxu0 0.0
    %2014 = vmatprep.subr.mxu0 0.0
    %2015 = vmatpush1.msra.mxu0 0.0
    %2016 = vmatprep.subr.mxu0 0.0
    %2017 = vmatpush1.msra.mxu0 0.0
    %2018 = vmatprep.subr.mxu0 0.0
    %2019 = vmatpush1.msra.mxu0 0.0
    %2020 = vmatprep.subr.mxu0 0.0
    %2021 = vmatpush1.msra.mxu0 0.0
    %2022 = vmatprep.subr.mxu0 0.0
    %2023 = vmatpush1.msra.mxu0 0.0
    %2024 = vmatprep.subr.mxu0 0.0
    %2025 = vmatpush1.msra.mxu0 0.0
    %2026 = vmatprep.subr.mxu0 0.0
    %2027 = vmatpush1.msra.mxu0 0.0
    %2028 = vmatprep.subr.mxu0 0.0
    %2029 = vmatpush1.msra.mxu0 0.0
    %2030 = vmatprep.subr.mxu0 0.0
    %2031 = vmatpush1.msra.mxu0 0.0
    %2032 = vmatprep.subr.mxu0 0.0
    %2033 = vmatpush1.msra.mxu0 0.0
    %2034 = vmatprep.subr.mxu0 0.0
    %2035 = vmatpush1.msra.mxu0 0.0
    %2036 = vmatprep.subr.mxu0 0.0
    %2037 = vmatpush1.msra.mxu0 0.0
    %2038 = vmatprep.subr.mxu0 0.0
    %2039 = vmatpush1.msra.mxu0 0.0
    %2040 = vmatprep.subr.mxu0 0.0
    %2041 = vmatpush1.msra.mxu0 0.0
    %2042 = vmatprep.subr.mxu0 0.0
    %2043 = vmatpush1.msra.mxu0 0.0
    %2044 = vmatprep.subr.mxu0 0.0
    %2045 = vmatpush1.msra.mxu0 0.0
    %2046 = vmatprep.mubr.f32.mxu0 0.0
    %2047 = vmatmul.mubr.f32.gmra.mrb[0].mxu0 %v1977
    %v2048 = vpop.f32.mrb[0].mxu0
    %v2049 = vadd.f32 %v1975, %v2048
    %v2050 = vpop.f32.mrb[0].mxu0
    %2051 = vmatprep.mubr.f32.mxu0 0.0
    %2052 = vmatmul.mubr.f32.gmra.mrb[0].mxu0 %v1980
    %v2053 = vpop.f32.mrb[0].mxu0
    %v2054 = vadd.f32 %v1975, %v2053
    %v2055 = vpop.f32.mrb[0].mxu0
    %2056 = vdwg.mxu0
    %v2058 = vsel %vm291, %v2049, 0
    %v2061 = vsel %vm291, %v280, 0
    %2063 = vmatprep.subr.mxu0 0.0
    %2064 = vmatpush1.xpose.msra.mxu0 %v2061
    %2065 = vmatprep.subr.mxu0 0.0
    %2066 = vmatpush1.xpose.msra.mxu0 0.0
    %2067 = vmatprep.subr.mxu0 0.0
    %2068 = vmatpush1.xpose.msra.mxu0 0.0
    %2069 = vmatprep.subr.mxu0 0.0
    %2070 = vmatpush1.xpose.msra.mxu0 0.0
    %2071 = vmatprep.subr.mxu0 0.0
    %2072 = vmatpush1.xpose.msra.mxu0 0.0
    %2073 = vmatprep.subr.mxu0 0.0
    %2074 = vmatpush1.xpose.msra.mxu0 0.0
    %2075 = vmatprep.subr.mxu0 0.0
    %2076 = vmatpush1.xpose.msra.mxu0 0.0
    %2077 = vmatprep.subr.mxu0 0.0
    %2078 = vmatpush1.xpose.msra.mxu0 0.0
    %2079 = vmatprep.subr.mxu0 0.0
    %2080 = vmatpush1.xpose.msra.mxu0 0.0
    %2081 = vmatprep.subr.mxu0 0.0
    %2082 = vmatpush1.xpose.msra.mxu0 0.0
    %2083 = vmatprep.subr.mxu0 0.0
    %2084 = vmatpush1.xpose.msra.mxu0 0.0
    %2085 = vmatprep.subr.mxu0 0.0
    %2086 = vmatpush1.xpose.msra.mxu0 0.0
    %2087 = vmatprep.subr.mxu0 0.0
    %2088 = vmatpush1.xpose.msra.mxu0 0.0
    %2089 = vmatprep.subr.mxu0 0.0
    %2090 = vmatpush1.xpose.msra.mxu0 0.0
    %2091 = vmatprep.subr.mxu0 0.0
    %2092 = vmatpush1.xpose.msra.mxu0 0.0
    %2093 = vmatprep.subr.mxu0 0.0
    %2094 = vmatpush1.xpose.msra.mxu0 0.0
    %2095 = vmatprep.subr.mxu0 0.0
    %2096 = vmatpush1.xpose.msra.mxu0 0.0
    %2097 = vmatprep.subr.mxu0 0.0
    %2098 = vmatpush1.xpose.msra.mxu0 0.0
    %2099 = vmatprep.subr.mxu0 0.0
    %2100 = vmatpush1.xpose.msra.mxu0 0.0
    %2101 = vmatprep.subr.mxu0 0.0
    %2102 = vmatpush1.xpose.msra.mxu0 0.0
    %2103 = vmatprep.subr.mxu0 0.0
    %2104 = vmatpush1.xpose.msra.mxu0 0.0
    %2105 = vmatprep.subr.mxu0 0.0
    %2106 = vmatpush1.xpose.msra.mxu0 0.0
    %2107 = vmatprep.subr.mxu0 0.0
    %2108 = vmatpush1.xpose.msra.mxu0 0.0
    %2109 = vmatprep.subr.mxu0 0.0
    %2110 = vmatpush1.xpose.msra.mxu0 0.0
    %2111 = vmatprep.subr.mxu0 0.0
    %2112 = vmatpush1.xpose.msra.mxu0 0.0
    %2113 = vmatprep.subr.mxu0 0.0
    %2114 = vmatpush1.xpose.msra.mxu0 0.0
    %2115 = vmatprep.subr.mxu0 0.0
    %2116 = vmatpush1.xpose.msra.mxu0 0.0
    %2117 = vmatprep.subr.mxu0 0.0
    %2118 = vmatpush1.xpose.msra.mxu0 0.0
    %2119 = vmatprep.subr.mxu0 0.0
    %2120 = vmatpush1.xpose.msra.mxu0 0.0
    %2121 = vmatprep.subr.mxu0 0.0
    %2122 = vmatpush1.xpose.msra.mxu0 0.0
    %2123 = vmatprep.subr.mxu0 0.0
    %2124 = vmatpush1.xpose.msra.mxu0 0.0
    %2125 = vmatprep.subr.mxu0 0.0
    %2126 = vmatpush1.xpose.msra.mxu0 0.0
    %2127 = vmatprep.mubr.f32.mxu0 0.0
    %2128 = vmatmul.mubr.f32.gmra.mrb[0].mxu0 %v2058
    %v2129 = vpop.f32.mrb[0].mxu0
    %v2130 = vadd.f32 0.0, %v2129
    %v2131 = vpop.f32.mrb[0].mxu0
    %2132 = vdwg.mxu0
    %v2134 = vsel %vm291, %v2054, 0
    %v2137 = vsel %vm291, %v285, 0
    %2139 = vmatprep.subr.mxu0 0.0
    %2140 = vmatpush1.xpose.msra.mxu0 %v2137
    %2141 = vmatprep.subr.mxu0 0.0
    %2142 = vmatpush1.xpose.msra.mxu0 0.0
    %2143 = vmatprep.subr.mxu0 0.0
    %2144 = vmatpush1.xpose.msra.mxu0 0.0
    %2145 = vmatprep.subr.mxu0 0.0
    %2146 = vmatpush1.xpose.msra.mxu0 0.0
    %2147 = vmatprep.subr.mxu0 0.0
    %2148 = vmatpush1.xpose.msra.mxu0 0.0
    %2149 = vmatprep.subr.mxu0 0.0
    %2150 = vmatpush1.xpose.msra.mxu0 0.0
    %2151 = vmatprep.subr.mxu0 0.0
    %2152 = vmatpush1.xpose.msra.mxu0 0.0
    %2153 = vmatprep.subr.mxu0 0.0
    %2154 = vmatpush1.xpose.msra.mxu0 0.0
    %2155 = vmatprep.subr.mxu0 0.0
    %2156 = vmatpush1.xpose.msra.mxu0 0.0
    %2157 = vmatprep.subr.mxu0 0.0
    %2158 = vmatpush1.xpose.msra.mxu0 0.0
    %2159 = vmatprep.subr.mxu0 0.0
    %2160 = vmatpush1.xpose.msra.mxu0 0.0
    %2161 = vmatprep.subr.mxu0 0.0
    %2162 = vmatpush1.xpose.msra.mxu0 0.0
    %2163 = vmatprep.subr.mxu0 0.0
    %2164 = vmatpush1.xpose.msra.mxu0 0.0
    %2165 = vmatprep.subr.mxu0 0.0
    %2166 = vmatpush1.xpose.msra.mxu0 0.0
    %2167 = vmatprep.subr.mxu0 0.0
    %2168 = vmatpush1.xpose.msra.mxu0 0.0
    %2169 = vmatprep.subr.mxu0 0.0
    %2170 = vmatpush1.xpose.msra.mxu0 0.0
    %2171 = vmatprep.subr.mxu0 0.0
    %2172 = vmatpush1.xpose.msra.mxu0 0.0
    %2173 = vmatprep.subr.mxu0 0.0
    %2174 = vmatpush1.xpose.msra.mxu0 0.0
    %2175 = vmatprep.subr.mxu0 0.0
    %2176 = vmatpush1.xpose.msra.mxu0 0.0
    %2177 = vmatprep.subr.mxu0 0.0
    %2178 = vmatpush1.xpose.msra.mxu0 0.0
    %2179 = vmatprep.subr.mxu0 0.0
    %2180 = vmatpush1.xpose.msra.mxu0 0.0
    %2181 = vmatprep.subr.mxu0 0.0
    %2182 = vmatpush1.xpose.msra.mxu0 0.0
    %2183 = vmatprep.subr.mxu0 0.0
    %2184 = vmatpush1.xpose.msra.mxu0 0.0
    %2185 = vmatprep.subr.mxu0 0.0
    %2186 = vmatpush1.xpose.msra.mxu0 0.0
    %2187 = vmatprep.subr.mxu0 0.0
    %2188 = vmatpush1.xpose.msra.mxu0 0.0
    %2189 = vmatprep.subr.mxu0 0.0
    %2190 = vmatpush1.xpose.msra.mxu0 0.0
    %2191 = vmatprep.subr.mxu0 0.0
    %2192 = vmatpush1.xpose.msra.mxu0 0.0
    %2193 = vmatprep.subr.mxu0 0.0
    %2194 = vmatpush1.xpose.msra.mxu0 0.0
    %2195 = vmatprep.subr.mxu0 0.0
    %2196 = vmatpush1.xpose.msra.mxu0 0.0
    %2197 = vmatprep.subr.mxu0 0.0
    %2198 = vmatpush1.xpose.msra.mxu0 0.0
    %2199 = vmatprep.subr.mxu0 0.0
    %2200 = vmatpush1.xpose.msra.mxu0 0.0
    %2201 = vmatprep.subr.mxu0 0.0
    %2202 = vmatpush1.xpose.msra.mxu0 0.0
    %2203 = vmatprep.mubr.f32.mxu0 0.0
    %2204 = vmatmul.mubr.f32.gmra.mrb[0].mxu0 %v2134
    %v2205 = vpop.f32.mrb[0].mxu0
    %v2206 = vadd.f32 0.0, %v2205
    %v2207 = vpop.f32.mrb[0].mxu0
    %2208 = vdwg.mxu0
    %v2209 = vmul.f32 %v2130, 0.35355338
    %v2210 = vmul.f32 %v2206, 0.35355338
    %v2211 = vsel %vm78, 1, 0
    %v2212 = vsel %vm79, 1, 0
    %v2213 = vlaneseq
    %v2214 = vshrl.u32 %v2213, 7
    %v2215 = vsub.s32 0, %v2214
    %v2216 = vrot.slane %v2211, %v2215
    %v2217 = vlaneseq
    %v2218 = vshrl.u32 %v2217, 7
    %v2219 = vsub.s32 0, %v2218
    %v2220 = vrot.slane %v2212, %v2219
    %vm2221 = vcmp.eq.s32.totalorder %v2216, 1
    %vm2222 = vcmp.eq.s32.totalorder %v2220, 1
    %v2223 = vsel %vm2221, -inf, %v2209
    %v2224 = vsel %vm2222, -inf, %v2210
    %2225 = vrot.lane.b32.xlu0 %v2049, 120
    %v2226 = vpop.permute.xlu0 %2225
    %2227 = vrot.lane.b32.xlu0 %v280, 120
    %v2228 = vpop.permute.xlu0 %2227
    %v2229 = vsel %vm291, %v2226, 0
    %v2231 = vsel %vm291, %v2228, 0
    %2233 = vmatprep.subr.mxu0 0.0
    %2234 = vmatpush1.xpose.msra.mxu0 %v2231
    %2235 = vmatprep.subr.mxu0 0.0
    %2236 = vmatpush1.xpose.msra.mxu0 0.0
    %2237 = vmatprep.subr.mxu0 0.0
    %2238 = vmatpush1.xpose.msra.mxu0 0.0
    %2239 = vmatprep.subr.mxu0 0.0
    %2240 = vmatpush1.xpose.msra.mxu0 0.0
    %2241 = vmatprep.subr.mxu0 0.0
    %2242 = vmatpush1.xpose.msra.mxu0 0.0
    %2243 = vmatprep.subr.mxu0 0.0
    %2244 = vmatpush1.xpose.msra.mxu0 0.0
    %2245 = vmatprep.subr.mxu0 0.0
    %2246 = vmatpush1.xpose.msra.mxu0 0.0
    %2247 = vmatprep.subr.mxu0 0.0
    %2248 = vmatpush1.xpose.msra.mxu0 0.0
    %2249 = vmatprep.subr.mxu0 0.0
    %2250 = vmatpush1.xpose.msra.mxu0 0.0
    %2251 = vmatprep.subr.mxu0 0.0
    %2252 = vmatpush1.xpose.msra.mxu0 0.0
    %2253 = vmatprep.subr.mxu0 0.0
    %2254 = vmatpush1.xpose.msra.mxu0 0.0
    %2255 = vmatprep.subr.mxu0 0.0
    %2256 = vmatpush1.xpose.msra.mxu0 0.0
    %2257 = vmatprep.subr.mxu0 0.0
    %2258 = vmatpush1.xpose.msra.mxu0 0.0
    %2259 = vmatprep.subr.mxu0 0.0
    %2260 = vmatpush1.xpose.msra.mxu0 0.0
    %2261 = vmatprep.subr.mxu0 0.0
    %2262 = vmatpush1.xpose.msra.mxu0 0.0
    %2263 = vmatprep.subr.mxu0 0.0
    %2264 = vmatpush1.xpose.msra.mxu0 0.0
    %2265 = vmatprep.subr.mxu0 0.0
    %2266 = vmatpush1.xpose.msra.mxu0 0.0
    %2267 = vmatprep.subr.mxu0 0.0
    %2268 = vmatpush1.xpose.msra.mxu0 0.0
    %2269 = vmatprep.subr.mxu0 0.0
    %2270 = vmatpush1.xpose.msra.mxu0 0.0
    %2271 = vmatprep.subr.mxu0 0.0
    %2272 = vmatpush1.xpose.msra.mxu0 0.0
    %2273 = vmatprep.subr.mxu0 0.0
    %2274 = vmatpush1.xpose.msra.mxu0 0.0
    %2275 = vmatprep.subr.mxu0 0.0
    %2276 = vmatpush1.xpose.msra.mxu0 0.0
    %2277 = vmatprep.subr.mxu0 0.0
    %2278 = vmatpush1.xpose.msra.mxu0 0.0
    %2279 = vmatprep.subr.mxu0 0.0
    %2280 = vmatpush1.xpose.msra.mxu0 0.0
    %2281 = vmatprep.subr.mxu0 0.0
    %2282 = vmatpush1.xpose.msra.mxu0 0.0
    %2283 = vmatprep.subr.mxu0 0.0
    %2284 = vmatpush1.xpose.msra.mxu0 0.0
    %2285 = vmatprep.subr.mxu0 0.0
    %2286 = vmatpush1.xpose.msra.mxu0 0.0
    %2287 = vmatprep.subr.mxu0 0.0
    %2288 = vmatpush1.xpose.msra.mxu0 0.0
    %2289 = vmatprep.subr.mxu0 0.0
    %2290 = vmatpush1.xpose.msra.mxu0 0.0
    %2291 = vmatprep.subr.mxu0 0.0
    %2292 = vmatpush1.xpose.msra.mxu0 0.0
    %2293 = vmatprep.subr.mxu0 0.0
    %2294 = vmatpush1.xpose.msra.mxu0 0.0
    %2295 = vmatprep.subr.mxu0 0.0
    %2296 = vmatpush1.xpose.msra.mxu0 0.0
    %2297 = vmatprep.mubr.f32.mxu0 0.0
    %2298 = vmatmul.mubr.f32.gmra.mrb[0].mxu0 %v2229
    %v2299 = vpop.f32.mrb[0].mxu0
    %v2300 = vadd.f32 0.0, %v2299
    %v2301 = vpop.f32.mrb[0].mxu0
    %2302 = vdwg.mxu0
    %2303 = vrot.lane.b32.xlu0 %v2054, 120
    %v2304 = vpop.permute.xlu0 %2303
    %2305 = vrot.lane.b32.xlu0 %v285, 120
    %v2306 = vpop.permute.xlu0 %2305
    %v2307 = vsel %vm291, %v2304, 0
    %v2309 = vsel %vm291, %v2306, 0
    %2311 = vmatprep.subr.mxu0 0.0
    %2312 = vmatpush1.xpose.msra.mxu0 %v2309
    %2313 = vmatprep.subr.mxu0 0.0
    %2314 = vmatpush1.xpose.msra.mxu0 0.0
    %2315 = vmatprep.subr.mxu0 0.0
    %2316 = vmatpush1.xpose.msra.mxu0 0.0
    %2317 = vmatprep.subr.mxu0 0.0
    %2318 = vmatpush1.xpose.msra.mxu0 0.0
    %2319 = vmatprep.subr.mxu0 0.0
    %2320 = vmatpush1.xpose.msra.mxu0 0.0
    %2321 = vmatprep.subr.mxu0 0.0
    %2322 = vmatpush1.xpose.msra.mxu0 0.0
    %2323 = vmatprep.subr.mxu0 0.0
    %2324 = vmatpush1.xpose.msra.mxu0 0.0
    %2325 = vmatprep.subr.mxu0 0.0
    %2326 = vmatpush1.xpose.msra.mxu0 0.0
    %2327 = vmatprep.subr.mxu0 0.0
    %2328 = vmatpush1.xpose.msra.mxu0 0.0
    %2329 = vmatprep.subr.mxu0 0.0
    %2330 = vmatpush1.xpose.msra.mxu0 0.0
    %2331 = vmatprep.subr.mxu0 0.0
    %2332 = vmatpush1.xpose.msra.mxu0 0.0
    %2333 = vmatprep.subr.mxu0 0.0
    %2334 = vmatpush1.xpose.msra.mxu0 0.0
    %2335 = vmatprep.subr.mxu0 0.0
    %2336 = vmatpush1.xpose.msra.mxu0 0.0
    %2337 = vmatprep.subr.mxu0 0.0
    %2338 = vmatpush1.xpose.msra.mxu0 0.0
    %2339 = vmatprep.subr.mxu0 0.0
    %2340 = vmatpush1.xpose.msra.mxu0 0.0
    %2341 = vmatprep.subr.mxu0 0.0
    %2342 = vmatpush1.xpose.msra.mxu0 0.0
    %2343 = vmatprep.subr.mxu0 0.0
    %2344 = vmatpush1.xpose.msra.mxu0 0.0
    %2345 = vmatprep.subr.mxu0 0.0
    %2346 = vmatpush1.xpose.msra.mxu0 0.0
    %2347 = vmatprep.subr.mxu0 0.0
    %2348 = vmatpush1.xpose.msra.mxu0 0.0
    %2349 = vmatprep.subr.mxu0 0.0
    %2350 = vmatpush1.xpose.msra.mxu0 0.0
    %2351 = vmatprep.subr.mxu0 0.0
    %2352 = vmatpush1.xpose.msra.mxu0 0.0
    %2353 = vmatprep.subr.mxu0 0.0
    %2354 = vmatpush1.xpose.msra.mxu0 0.0
    %2355 = vmatprep.subr.mxu0 0.0
    %2356 = vmatpush1.xpose.msra.mxu0 0.0
    %2357 = vmatprep.subr.mxu0 0.0
    %2358 = vmatpush1.xpose.msra.mxu0 0.0
    %2359 = vmatprep.subr.mxu0 0.0
    %2360 = vmatpush1.xpose.msra.mxu0 0.0
    %2361 = vmatprep.subr.mxu0 0.0
    %2362 = vmatpush1.xpose.msra.mxu0 0.0
    %2363 = vmatprep.subr.mxu0 0.0
    %2364 = vmatpush1.xpose.msra.mxu0 0.0
    %2365 = vmatprep.subr.mxu0 0.0
    %2366 = vmatpush1.xpose.msra.mxu0 0.0
    %2367 = vmatprep.subr.mxu0 0.0
    %2368 = vmatpush1.xpose.msra.mxu0 0.0
    %2369 = vmatprep.subr.mxu0 0.0
    %2370 = vmatpush1.xpose.msra.mxu0 0.0
    %2371 = vmatprep.subr.mxu0 0.0
    %2372 = vmatpush1.xpose.msra.mxu0 0.0
    %2373 = vmatprep.subr.mxu0 0.0
    %2374 = vmatpush1.xpose.msra.mxu0 0.0
    %2375 = vmatprep.mubr.f32.mxu0 0.0
    %2376 = vmatmul.mubr.f32.gmra.mrb[0].mxu0 %v2307
    %v2377 = vpop.f32.mrb[0].mxu0
    %v2378 = vadd.f32 0.0, %v2377
    %v2379 = vpop.f32.mrb[0].mxu0
    %2380 = vdwg.mxu0
    %v2381 = vmul.f32 %v2300, 0.35355338
    %v2382 = vmul.f32 %v2378, 0.35355338
    %v2383 = vsel %vm2221, -inf, %v2381
    %v2384 = vsel %vm2222, -inf, %v2382
    %2385 = vrot.lane.b32.xlu0 %v2049, 112
    %v2386 = vpop.permute.xlu0 %2385
    %2387 = vrot.lane.b32.xlu0 %v280, 112
    %v2388 = vpop.permute.xlu0 %2387
    %v2389 = vsel %vm291, %v2386, 0
    %v2391 = vsel %vm291, %v2388, 0
    %2393 = vmatprep.subr.mxu0 0.0
    %2394 = vmatpush1.xpose.msra.mxu0 %v2391
    %2395 = vmatprep.subr.mxu0 0.0
    %2396 = vmatpush1.xpose.msra.mxu0 0.0
    %2397 = vmatprep.subr.mxu0 0.0
    %2398 = vmatpush1.xpose.msra.mxu0 0.0
    %2399 = vmatprep.subr.mxu0 0.0
    %2400 = vmatpush1.xpose.msra.mxu0 0.0
    %2401 = vmatprep.subr.mxu0 0.0
    %2402 = vmatpush1.xpose.msra.mxu0 0.0
    %2403 = vmatprep.subr.mxu0 0.0
    %2404 = vmatpush1.xpose.msra.mxu0 0.0
    %2405 = vmatprep.subr.mxu0 0.0
    %2406 = vmatpush1.xpose.msra.mxu0 0.0
    %2407 = vmatprep.subr.mxu0 0.0
    %2408 = vmatpush1.xpose.msra.mxu0 0.0
    %2409 = vmatprep.subr.mxu0 0.0
    %2410 = vmatpush1.xpose.msra.mxu0 0.0
    %2411 = vmatprep.subr.mxu0 0.0
    %2412 = vmatpush1.xpose.msra.mxu0 0.0
    %2413 = vmatprep.subr.mxu0 0.0
    %2414 = vmatpush1.xpose.msra.mxu0 0.0
    %2415 = vmatprep.subr.mxu0 0.0
    %2416 = vmatpush1.xpose.msra.mxu0 0.0
    %2417 = vmatprep.subr.mxu0 0.0
    %2418 = vmatpush1.xpose.msra.mxu0 0.0
    %2419 = vmatprep.subr.mxu0 0.0
    %2420 = vmatpush1.xpose.msra.mxu0 0.0
    %2421 = vmatprep.subr.mxu0 0.0
    %2422 = vmatpush1.xpose.msra.mxu0 0.0
    %2423 = vmatprep.subr.mxu0 0.0
    %2424 = vmatpush1.xpose.msra.mxu0 0.0
    %2425 = vmatprep.subr.mxu0 0.0
    %2426 = vmatpush1.xpose.msra.mxu0 0.0
    %2427 = vmatprep.subr.mxu0 0.0
    %2428 = vmatpush1.xpose.msra.mxu0 0.0
    %2429 = vmatprep.subr.mxu0 0.0
    %2430 = vmatpush1.xpose.msra.mxu0 0.0
    %2431 = vmatprep.subr.mxu0 0.0
    %2432 = vmatpush1.xpose.msra.mxu0 0.0
    %2433 = vmatprep.subr.mxu0 0.0
    %2434 = vmatpush1.xpose.msra.mxu0 0.0
    %2435 = vmatprep.subr.mxu0 0.0
    %2436 = vmatpush1.xpose.msra.mxu0 0.0
    %2437 = vmatprep.subr.mxu0 0.0
    %2438 = vmatpush1.xpose.msra.mxu0 0.0
    %2439 = vmatprep.subr.mxu0 0.0
    %2440 = vmatpush1.xpose.msra.mxu0 0.0
    %2441 = vmatprep.subr.mxu0 0.0
    %2442 = vmatpush1.xpose.msra.mxu0 0.0
    %2443 = vmatprep.subr.mxu0 0.0
    %2444 = vmatpush1.xpose.msra.mxu0 0.0
    %2445 = vmatprep.subr.mxu0 0.0
    %2446 = vmatpush1.xpose.msra.mxu0 0.0
    %2447 = vmatprep.subr.mxu0 0.0
    %2448 = vmatpush1.xpose.msra.mxu0 0.0
    %2449 = vmatprep.subr.mxu0 0.0
    %2450 = vmatpush1.xpose.msra.mxu0 0.0
    %2451 = vmatprep.subr.mxu0 0.0
    %2452 = vmatpush1.xpose.msra.mxu0 0.0
    %2453 = vmatprep.subr.mxu0 0.0
    %2454 = vmatpush1.xpose.msra.mxu0 0.0
    %2455 = vmatprep.subr.mxu0 0.0
    %2456 = vmatpush1.xpose.msra.mxu0 0.0
    %2457 = vmatprep.mubr.f32.mxu0 0.0
    %2458 = vmatmul.mubr.f32.gmra.mrb[0].mxu0 %v2389
    %v2459 = vpop.f32.mrb[0].mxu0
    %v2460 = vadd.f32 0.0, %v2459
    %v2461 = vpop.f32.mrb[0].mxu0
    %2462 = vdwg.mxu0
    %2463 = vrot.lane.b32.xlu0 %v2054, 112
    %v2464 = vpop.permute.xlu0 %2463
    %2465 = vrot.lane.b32.xlu0 %v285, 112
    %v2466 = vpop.permute.xlu0 %2465
    %v2467 = vsel %vm291, %v2464, 0
    %v2469 = vsel %vm291, %v2466, 0
    %2471 = vmatprep.subr.mxu0 0.0
    %2472 = vmatpush1.xpose.msra.mxu0 %v2469
    %2473 = vmatprep.subr.mxu0 0.0
    %2474 = vmatpush1.xpose.msra.mxu0 0.0
    %2475 = vmatprep.subr.mxu0 0.0
    %2476 = vmatpush1.xpose.msra.mxu0 0.0
    %2477 = vmatprep.subr.mxu0 0.0
    %2478 = vmatpush1.xpose.msra.mxu0 0.0
    %2479 = vmatprep.subr.mxu0 0.0
    %2480 = vmatpush1.xpose.msra.mxu0 0.0
    %2481 = vmatprep.subr.mxu0 0.0
    %2482 = vmatpush1.xpose.msra.mxu0 0.0
    %2483 = vmatprep.subr.mxu0 0.0
    %2484 = vmatpush1.xpose.msra.mxu0 0.0
    %2485 = vmatprep.subr.mxu0 0.0
    %2486 = vmatpush1.xpose.msra.mxu0 0.0
    %2487 = vmatprep.subr.mxu0 0.0
    %2488 = vmatpush1.xpose.msra.mxu0 0.0
    %2489 = vmatprep.subr.mxu0 0.0
    %2490 = vmatpush1.xpose.msra.mxu0 0.0
    %2491 = vmatprep.subr.mxu0 0.0
    %2492 = vmatpush1.xpose.msra.mxu0 0.0
    %2493 = vmatprep.subr.mxu0 0.0
    %2494 = vmatpush1.xpose.msra.mxu0 0.0
    %2495 = vmatprep.subr.mxu0 0.0
    %2496 = vmatpush1.xpose.msra.mxu0 0.0
    %2497 = vmatprep.subr.mxu0 0.0
    %2498 = vmatpush1.xpose.msra.mxu0 0.0
    %2499 = vmatprep.subr.mxu0 0.0
    %2500 = vmatpush1.xpose.msra.mxu0 0.0
    %2501 = vmatprep.subr.mxu0 0.0
    %2502 = vmatpush1.xpose.msra.mxu0 0.0
    %2503 = vmatprep.subr.mxu0 0.0
    %2504 = vmatpush1.xpose.msra.mxu0 0.0
    %2505 = vmatprep.subr.mxu0 0.0
    %2506 = vmatpush1.xpose.msra.mxu0 0.0
    %2507 = vmatprep.subr.mxu0 0.0
    %2508 = vmatpush1.xpose.msra.mxu0 0.0
    %2509 = vmatprep.subr.mxu0 0.0
    %2510 = vmatpush1.xpose.msra.mxu0 0.0
    %2511 = vmatprep.subr.mxu0 0.0
    %2512 = vmatpush1.xpose.msra.mxu0 0.0
    %2513 = vmatprep.subr.mxu0 0.0
    %2514 = vmatpush1.xpose.msra.mxu0 0.0
    %2515 = vmatprep.subr.mxu0 0.0
    %2516 = vmatpush1.xpose.msra.mxu0 0.0
    %2517 = vmatprep.subr.mxu0 0.0
    %2518 = vmatpush1.xpose.msra.mxu0 0.0
    %2519 = vmatprep.subr.mxu0 0.0
    %2520 = vmatpush1.xpose.msra.mxu0 0.0
    %2521 = vmatprep.subr.mxu0 0.0
    %2522 = vmatpush1.xpose.msra.mxu0 0.0
    %2523 = vmatprep.subr.mxu0 0.0
    %2524 = vmatpush1.xpose.msra.mxu0 0.0
    %2525 = vmatprep.subr.mxu0 0.0
    %2526 = vmatpush1.xpose.msra.mxu0 0.0
    %2527 = vmatprep.subr.mxu0 0.0
    %2528 = vmatpush1.xpose.msra.mxu0 0.0
    %2529 = vmatprep.subr.mxu0 0.0
    %2530 = vmatpush1.xpose.msra.mxu0 0.0
    %2531 = vmatprep.subr.mxu0 0.0
    %2532 = vmatpush1.xpose.msra.mxu0 0.0
    %2533 = vmatprep.subr.mxu0 0.0
    %2534 = vmatpush1.xpose.msra.mxu0 0.0
    %2535 = vmatprep.mubr.f32.mxu0 0.0
    %2536 = vmatmul.mubr.f32.gmra.mrb[0].mxu0 %v2467
    %v2537 = vpop.f32.mrb[0].mxu0
    %v2538 = vadd.f32 0.0, %v2537
    %v2539 = vpop.f32.mrb[0].mxu0
    %2540 = vdwg.mxu0
    %v2541 = vmul.f32 %v2460, 0.35355338
    %v2542 = vmul.f32 %v2538, 0.35355338
    %v2543 = vsel %vm2221, -inf, %v2541
    %v2544 = vsel %vm2222, -inf, %v2542
    %2545 = vrot.lane.b32.xlu0 %v2049, 104
    %v2546 = vpop.permute.xlu0 %2545
    %2547 = vrot.lane.b32.xlu0 %v280, 104
    %v2548 = vpop.permute.xlu0 %2547
    %v2549 = vsel %vm291, %v2546, 0
    %v2551 = vsel %vm291, %v2548, 0
    %2553 = vmatprep.subr.mxu0 0.0
    %2554 = vmatpush1.xpose.msra.mxu0 %v2551
    %2555 = vmatprep.subr.mxu0 0.0
    %2556 = vmatpush1.xpose.msra.mxu0 0.0
    %2557 = vmatprep.subr.mxu0 0.0
    %2558 = vmatpush1.xpose.msra.mxu0 0.0
    %2559 = vmatprep.subr.mxu0 0.0
    %2560 = vmatpush1.xpose.msra.mxu0 0.0
    %2561 = vmatprep.subr.mxu0 0.0
    %2562 = vmatpush1.xpose.msra.mxu0 0.0
    %2563 = vmatprep.subr.mxu0 0.0
    %2564 = vmatpush1.xpose.msra.mxu0 0.0
    %2565 = vmatprep.subr.mxu0 0.0
    %2566 = vmatpush1.xpose.msra.mxu0 0.0
    %2567 = vmatprep.subr.mxu0 0.0
    %2568 = vmatpush1.xpose.msra.mxu0 0.0
    %2569 = vmatprep.subr.mxu0 0.0
    %2570 = vmatpush1.xpose.msra.mxu0 0.0
    %2571 = vmatprep.subr.mxu0 0.0
    %2572 = vmatpush1.xpose.msra.mxu0 0.0
    %2573 = vmatprep.subr.mxu0 0.0
    %2574 = vmatpush1.xpose.msra.mxu0 0.0
    %2575 = vmatprep.subr.mxu0 0.0
    %2576 = vmatpush1.xpose.msra.mxu0 0.0
    %2577 = vmatprep.subr.mxu0 0.0
    %2578 = vmatpush1.xpose.msra.mxu0 0.0
    %2579 = vmatprep.subr.mxu0 0.0
    %2580 = vmatpush1.xpose.msra.mxu0 0.0
    %2581 = vmatprep.subr.mxu0 0.0
    %2582 = vmatpush1.xpose.msra.mxu0 0.0
    %2583 = vmatprep.subr.mxu0 0.0
    %2584 = vmatpush1.xpose.msra.mxu0 0.0
    %2585 = vmatprep.subr.mxu0 0.0
    %2586 = vmatpush1.xpose.msra.mxu0 0.0
    %2587 = vmatprep.subr.mxu0 0.0
    %2588 = vmatpush1.xpose.msra.mxu0 0.0
    %2589 = vmatprep.subr.mxu0 0.0
    %2590 = vmatpush1.xpose.msra.mxu0 0.0
    %2591 = vmatprep.subr.mxu0 0.0
    %2592 = vmatpush1.xpose.msra.mxu0 0.0
    %2593 = vmatprep.subr.mxu0 0.0
    %2594 = vmatpush1.xpose.msra.mxu0 0.0
    %2595 = vmatprep.subr.mxu0 0.0
    %2596 = vmatpush1.xpose.msra.mxu0 0.0
    %2597 = vmatprep.subr.mxu0 0.0
    %2598 = vmatpush1.xpose.msra.mxu0 0.0
    %2599 = vmatprep.subr.mxu0 0.0
    %2600 = vmatpush1.xpose.msra.mxu0 0.0
    %2601 = vmatprep.subr.mxu0 0.0
    %2602 = vmatpush1.xpose.msra.mxu0 0.0
    %2603 = vmatprep.subr.mxu0 0.0
    %2604 = vmatpush1.xpose.msra.mxu0 0.0
    %2605 = vmatprep.subr.mxu0 0.0
    %2606 = vmatpush1.xpose.msra.mxu0 0.0
    %2607 = vmatprep.subr.mxu0 0.0
    %2608 = vmatpush1.xpose.msra.mxu0 0.0
    %2609 = vmatprep.subr.mxu0 0.0
    %2610 = vmatpush1.xpose.msra.mxu0 0.0
    %2611 = vmatprep.subr.mxu0 0.0
    %2612 = vmatpush1.xpose.msra.mxu0 0.0
    %2613 = vmatprep.subr.mxu0 0.0
    %2614 = vmatpush1.xpose.msra.mxu0 0.0
    %2615 = vmatprep.subr.mxu0 0.0
    %2616 = vmatpush1.xpose.msra.mxu0 0.0
    %2617 = vmatprep.mubr.f32.mxu0 0.0
    %2618 = vmatmul.mubr.f32.gmra.mrb[0].mxu0 %v2549
    %v2619 = vpop.f32.mrb[0].mxu0
    %v2620 = vadd.f32 0.0, %v2619
    %v2621 = vpop.f32.mrb[0].mxu0
    %2622 = vdwg.mxu0
    %2623 = vrot.lane.b32.xlu0 %v2054, 104
    %v2624 = vpop.permute.xlu0 %2623
    %2625 = vrot.lane.b32.xlu0 %v285, 104
    %v2626 = vpop.permute.xlu0 %2625
    %v2627 = vsel %vm291, %v2624, 0
    %v2629 = vsel %vm291, %v2626, 0
    %2631 = vmatprep.subr.mxu0 0.0
    %2632 = vmatpush1.xpose.msra.mxu0 %v2629
    %2633 = vmatprep.subr.mxu0 0.0
    %2634 = vmatpush1.xpose.msra.mxu0 0.0
    %2635 = vmatprep.subr.mxu0 0.0
    %2636 = vmatpush1.xpose.msra.mxu0 0.0
    %2637 = vmatprep.subr.mxu0 0.0
    %2638 = vmatpush1.xpose.msra.mxu0 0.0
    %2639 = vmatprep.subr.mxu0 0.0
    %2640 = vmatpush1.xpose.msra.mxu0 0.0
    %2641 = vmatprep.subr.mxu0 0.0
    %2642 = vmatpush1.xpose.msra.mxu0 0.0
    %2643 = vmatprep.subr.mxu0 0.0
    %2644 = vmatpush1.xpose.msra.mxu0 0.0
    %2645 = vmatprep.subr.mxu0 0.0
    %2646 = vmatpush1.xpose.msra.mxu0 0.0
    %2647 = vmatprep.subr.mxu0 0.0
    %2648 = vmatpush1.xpose.msra.mxu0 0.0
    %2649 = vmatprep.subr.mxu0 0.0
    %2650 = vmatpush1.xpose.msra.mxu0 0.0
    %2651 = vmatprep.subr.mxu0 0.0
    %2652 = vmatpush1.xpose.msra.mxu0 0.0
    %2653 = vmatprep.subr.mxu0 0.0
    %2654 = vmatpush1.xpose.msra.mxu0 0.0
    %2655 = vmatprep.subr.mxu0 0.0
    %2656 = vmatpush1.xpose.msra.mxu0 0.0
    %2657 = vmatprep.subr.mxu0 0.0
    %2658 = vmatpush1.xpose.msra.mxu0 0.0
    %2659 = vmatprep.subr.mxu0 0.0
    %2660 = vmatpush1.xpose.msra.mxu0 0.0
    %2661 = vmatprep.subr.mxu0 0.0
    %2662 = vmatpush1.xpose.msra.mxu0 0.0
    %2663 = vmatprep.subr.mxu0 0.0
    %2664 = vmatpush1.xpose.msra.mxu0 0.0
    %2665 = vmatprep.subr.mxu0 0.0
    %2666 = vmatpush1.xpose.msra.mxu0 0.0
    %2667 = vmatprep.subr.mxu0 0.0
    %2668 = vmatpush1.xpose.msra.mxu0 0.0
    %2669 = vmatprep.subr.mxu0 0.0
    %2670 = vmatpush1.xpose.msra.mxu0 0.0
    %2671 = vmatprep.subr.mxu0 0.0
    %2672 = vmatpush1.xpose.msra.mxu0 0.0
    %2673 = vmatprep.subr.mxu0 0.0
    %2674 = vmatpush1.xpose.msra.mxu0 0.0
    %2675 = vmatprep.subr.mxu0 0.0
    %2676 = vmatpush1.xpose.msra.mxu0 0.0
    %2677 = vmatprep.subr.mxu0 0.0
    %2678 = vmatpush1.xpose.msra.mxu0 0.0
    %2679 = vmatprep.subr.mxu0 0.0
    %2680 = vmatpush1.xpose.msra.mxu0 0.0
    %2681 = vmatprep.subr.mxu0 0.0
    %2682 = vmatpush1.xpose.msra.mxu0 0.0
    %2683 = vmatprep.subr.mxu0 0.0
    %2684 = vmatpush1.xpose.msra.mxu0 0.0
    %2685 = vmatprep.subr.mxu0 0.0
    %2686 = vmatpush1.xpose.msra.mxu0 0.0
    %2687 = vmatprep.subr.mxu0 0.0
    %2688 = vmatpush1.xpose.msra.mxu0 0.0
    %2689 = vmatprep.subr.mxu0 0.0
    %2690 = vmatpush1.xpose.msra.mxu0 0.0
    %2691 = vmatprep.subr.mxu0 0.0
    %2692 = vmatpush1.xpose.msra.mxu0 0.0
    %2693 = vmatprep.subr.mxu0 0.0
    %2694 = vmatpush1.xpose.msra.mxu0 0.0
    %2695 = vmatprep.mubr.f32.mxu0 0.0
    %2696 = vmatmul.mubr.f32.gmra.mrb[0].mxu0 %v2627
    %v2697 = vpop.f32.mrb[0].mxu0
    %v2698 = vadd.f32 0.0, %v2697
    %v2699 = vpop.f32.mrb[0].mxu0
    %2700 = vdwg.mxu0
    %v2701 = vmul.f32 %v2620, 0.35355338
    %v2702 = vmul.f32 %v2698, 0.35355338
    %v2703 = vsel %vm2221, -inf, %v2701
    %v2704 = vsel %vm2222, -inf, %v2702
    %v2705 = vmax.f32 %v2223, %v2383
    %v2706 = vmax.f32 %v2224, %v2384
    %v2707 = vmax.f32 %v2705, %v2543
    %v2708 = vmax.f32 %v2706, %v2544
    %v2709 = vmax.f32 %v2707, %v2703
    %v2710 = vmax.f32 %v2708, %v2704
    %v2711 = vsub.f32 %v2223, %v2709
    %v2712 = vsub.f32 %v2224, %v2710
    %v2713 = vmul.f32 %v2711, 1.442695
    %v2714 = vpow.pop %v2713
    %v2715 = vmul.f32 %v2712, 1.442695
    %v2716 = vpow.pop %v2715
    %v2717 = vsub.f32 %v2383, %v2709
    %v2718 = vsub.f32 %v2384, %v2710
    %v2719 = vmul.f32 %v2717, 1.442695
    %v2720 = vpow.pop %v2719
    %v2721 = vmul.f32 %v2718, 1.442695
    %v2722 = vpow.pop %v2721
    %v2723 = vsub.f32 %v2543, %v2709
    %v2724 = vsub.f32 %v2544, %v2710
    %v2725 = vmul.f32 %v2723, 1.442695
    %v2726 = vpow.pop %v2725
    %v2727 = vmul.f32 %v2724, 1.442695
    %v2728 = vpow.pop %v2727
    %v2729 = vsub.f32 %v2703, %v2709
    %v2730 = vsub.f32 %v2704, %v2710
    %v2731 = vmul.f32 %v2729, 1.442695
    %v2732 = vpow.pop %v2731
    %v2733 = vmul.f32 %v2730, 1.442695
    %v2734 = vpow.pop %v2733
    %v2735 = vadd.f32 %v2714, %v2720
    %v2736 = vadd.f32 %v2716, %v2722
    %v2737 = vadd.f32 %v2735, %v2726
    %v2738 = vadd.f32 %v2736, %v2728
    %v2739 = vadd.f32 %v2737, %v2732
    %v2740 = vadd.f32 %v2738, %v2734
    %v2741 = vrcp.pop %v2739
    %v2742 = vrcp.pop %v2740
    %v2743 = vmul.f32 %v2714, %v2741
    %v2744 = vmul.f32 %v2716, %v2742
    %v2745 = vmul.f32 %v2720, %v2741
    %v2746 = vmul.f32 %v2722, %v2742
    %v2747 = vmul.f32 %v2726, %v2741
    %v2748 = vmul.f32 %v2728, %v2742
    %v2749 = vmul.f32 %v2732, %v2741
    %v2750 = vmul.f32 %v2734, %v2742
    %2751 = vrot.lane.b32.xlu0 %v280, 96
    %v2752 = vpop.permute.xlu0 %2751
    %v2755 = vsel %vm291, %v2743, 0
    %2757 = vmatprep.subr.mxu0 0.0
    %2758 = vmatpush1.msra.mxu0 %v2752
    %2759 = vmatprep.subr.mxu0 0.0
    %2760 = vmatpush1.msra.mxu0 0.0
    %2761 = vmatprep.subr.mxu0 0.0
    %2762 = vmatpush1.msra.mxu0 0.0
    %2763 = vmatprep.subr.mxu0 0.0
    %2764 = vmatpush1.msra.mxu0 0.0
    %2765 = vmatprep.subr.mxu0 0.0
    %2766 = vmatpush1.msra.mxu0 0.0
    %2767 = vmatprep.subr.mxu0 0.0
    %2768 = vmatpush1.msra.mxu0 0.0
    %2769 = vmatprep.subr.mxu0 0.0
    %2770 = vmatpush1.msra.mxu0 0.0
    %2771 = vmatprep.subr.mxu0 0.0
    %2772 = vmatpush1.msra.mxu0 0.0
    %2773 = vmatprep.subr.mxu0 0.0
    %2774 = vmatpush1.msra.mxu0 0.0
    %2775 = vmatprep.subr.mxu0 0.0
    %2776 = vmatpush1.msra.mxu0 0.0
    %2777 = vmatprep.subr.mxu0 0.0
    %2778 = vmatpush1.msra.mxu0 0.0
    %2779 = vmatprep.subr.mxu0 0.0
    %2780 = vmatpush1.msra.mxu0 0.0
    %2781 = vmatprep.subr.mxu0 0.0
    %2782 = vmatpush1.msra.mxu0 0.0
    %2783 = vmatprep.subr.mxu0 0.0
    %2784 = vmatpush1.msra.mxu0 0.0
    %2785 = vmatprep.subr.mxu0 0.0
    %2786 = vmatpush1.msra.mxu0 0.0
    %2787 = vmatprep.subr.mxu0 0.0
    %2788 = vmatpush1.msra.mxu0 0.0
    %2789 = vmatprep.subr.mxu0 0.0
    %2790 = vmatpush1.msra.mxu0 0.0
    %2791 = vmatprep.subr.mxu0 0.0
    %2792 = vmatpush1.msra.mxu0 0.0
    %2793 = vmatprep.subr.mxu0 0.0
    %2794 = vmatpush1.msra.mxu0 0.0
    %2795 = vmatprep.subr.mxu0 0.0
    %2796 = vmatpush1.msra.mxu0 0.0
    %2797 = vmatprep.subr.mxu0 0.0
    %2798 = vmatpush1.msra.mxu0 0.0
    %2799 = vmatprep.subr.mxu0 0.0
    %2800 = vmatpush1.msra.mxu0 0.0
    %2801 = vmatprep.subr.mxu0 0.0
    %2802 = vmatpush1.msra.mxu0 0.0
    %2803 = vmatprep.subr.mxu0 0.0
    %2804 = vmatpush1.msra.mxu0 0.0
    %2805 = vmatprep.subr.mxu0 0.0
    %2806 = vmatpush1.msra.mxu0 0.0
    %2807 = vmatprep.subr.mxu0 0.0
    %2808 = vmatpush1.msra.mxu0 0.0
    %2809 = vmatprep.subr.mxu0 0.0
    %2810 = vmatpush1.msra.mxu0 0.0
    %2811 = vmatprep.subr.mxu0 0.0
    %2812 = vmatpush1.msra.mxu0 0.0
    %2813 = vmatprep.subr.mxu0 0.0
    %2814 = vmatpush1.msra.mxu0 0.0
    %2815 = vmatprep.subr.mxu0 0.0
    %2816 = vmatpush1.msra.mxu0 0.0
    %2817 = vmatprep.subr.mxu0 0.0
    %2818 = vmatpush1.msra.mxu0 0.0
    %2819 = vmatprep.subr.mxu0 0.0
    %2820 = vmatpush1.msra.mxu0 0.0
    %2821 = vmatprep.mubr.f32.mxu0 0.0
    %2822 = vmatmul.mubr.f32.gmra.mrb[0].mxu0 %v2755
    %v2823 = vpop.f32.mrb[0].mxu0
    %v2824 = vadd.f32 0.0, %v2823
    %v2825 = vpop.f32.mrb[0].mxu0
    %2826 = vdwg.mxu0
    %2827 = vrot.lane.b32.xlu0 %v285, 96
    %v2828 = vpop.permute.xlu0 %2827
    %v2831 = vsel %vm291, %v2744, 0
    %2833 = vmatprep.subr.mxu0 0.0
    %2834 = vmatpush1.msra.mxu0 %v2828
    %2835 = vmatprep.subr.mxu0 0.0
    %2836 = vmatpush1.msra.mxu0 0.0
    %2837 = vmatprep.subr.mxu0 0.0
    %2838 = vmatpush1.msra.mxu0 0.0
    %2839 = vmatprep.subr.mxu0 0.0
    %2840 = vmatpush1.msra.mxu0 0.0
    %2841 = vmatprep.subr.mxu0 0.0
    %2842 = vmatpush1.msra.mxu0 0.0
    %2843 = vmatprep.subr.mxu0 0.0
    %2844 = vmatpush1.msra.mxu0 0.0
    %2845 = vmatprep.subr.mxu0 0.0
    %2846 = vmatpush1.msra.mxu0 0.0
    %2847 = vmatprep.subr.mxu0 0.0
    %2848 = vmatpush1.msra.mxu0 0.0
    %2849 = vmatprep.subr.mxu0 0.0
    %2850 = vmatpush1.msra.mxu0 0.0
    %2851 = vmatprep.subr.mxu0 0.0
    %2852 = vmatpush1.msra.mxu0 0.0
    %2853 = vmatprep.subr.mxu0 0.0
    %2854 = vmatpush1.msra.mxu0 0.0
    %2855 = vmatprep.subr.mxu0 0.0
    %2856 = vmatpush1.msra.mxu0 0.0
    %2857 = vmatprep.subr.mxu0 0.0
    %2858 = vmatpush1.msra.mxu0 0.0
    %2859 = vmatprep.subr.mxu0 0.0
    %2860 = vmatpush1.msra.mxu0 0.0
    %2861 = vmatprep.subr.mxu0 0.0
    %2862 = vmatpush1.msra.mxu0 0.0
    %2863 = vmatprep.subr.mxu0 0.0
    %2864 = vmatpush1.msra.mxu0 0.0
    %2865 = vmatprep.subr.mxu0 0.0
    %2866 = vmatpush1.msra.mxu0 0.0
    %2867 = vmatprep.subr.mxu0 0.0
    %2868 = vmatpush1.msra.mxu0 0.0
    %2869 = vmatprep.subr.mxu0 0.0
    %2870 = vmatpush1.msra.mxu0 0.0
    %2871 = vmatprep.subr.mxu0 0.0
    %2872 = vmatpush1.msra.mxu0 0.0
    %2873 = vmatprep.subr.mxu0 0.0
    %2874 = vmatpush1.msra.mxu0 0.0
    %2875 = vmatprep.subr.mxu0 0.0
    %2876 = vmatpush1.msra.mxu0 0.0
    %2877 = vmatprep.subr.mxu0 0.0
    %2878 = vmatpush1.msra.mxu0 0.0
    %2879 = vmatprep.subr.mxu0 0.0
    %2880 = vmatpush1.msra.mxu0 0.0
    %2881 = vmatprep.subr.mxu0 0.0
    %2882 = vmatpush1.msra.mxu0 0.0
    %2883 = vmatprep.subr.mxu0 0.0
    %2884 = vmatpush1.msra.mxu0 0.0
    %2885 = vmatprep.subr.mxu0 0.0
    %2886 = vmatpush1.msra.mxu0 0.0
    %2887 = vmatprep.subr.mxu0 0.0
    %2888 = vmatpush1.msra.mxu0 0.0
    %2889 = vmatprep.subr.mxu0 0.0
    %2890 = vmatpush1.msra.mxu0 0.0
    %2891 = vmatprep.subr.mxu0 0.0
    %2892 = vmatpush1.msra.mxu0 0.0
    %2893 = vmatprep.subr.mxu0 0.0
    %2894 = vmatpush1.msra.mxu0 0.0
    %2895 = vmatprep.subr.mxu0 0.0
    %2896 = vmatpush1.msra.mxu0 0.0
    %2897 = vmatprep.mubr.f32.mxu0 0.0
    %2898 = vmatmul.mubr.f32.gmra.mrb[0].mxu0 %v2831
    %v2899 = vpop.f32.mrb[0].mxu0
    %v2900 = vadd.f32 0.0, %v2899
    %v2901 = vpop.f32.mrb[0].mxu0
    %2902 = vdwg.mxu0
    %v2903 = vld [vmem:[#allocation7 + $0x80] sm:$0xff]
    %2904 = vrot.lane.b32.xlu0 %v280, 88
    %v2905 = vpop.permute.xlu0 %2904
    %v2908 = vsel %vm291, %v2745, 0
    %2910 = vmatprep.subr.mxu0 0.0
    %2911 = vmatpush1.msra.mxu0 %v2905
    %2912 = vmatprep.subr.mxu0 0.0
    %2913 = vmatpush1.msra.mxu0 0.0
    %2914 = vmatprep.subr.mxu0 0.0
    %2915 = vmatpush1.msra.mxu0 0.0
    %2916 = vmatprep.subr.mxu0 0.0
    %2917 = vmatpush1.msra.mxu0 0.0
    %2918 = vmatprep.subr.mxu0 0.0
    %2919 = vmatpush1.msra.mxu0 0.0
    %2920 = vmatprep.subr.mxu0 0.0
    %2921 = vmatpush1.msra.mxu0 0.0
    %2922 = vmatprep.subr.mxu0 0.0
    %2923 = vmatpush1.msra.mxu0 0.0
    %2924 = vmatprep.subr.mxu0 0.0
    %2925 = vmatpush1.msra.mxu0 0.0
    %2926 = vmatprep.subr.mxu0 0.0
    %2927 = vmatpush1.msra.mxu0 0.0
    %2928 = vmatprep.subr.mxu0 0.0
    %2929 = vmatpush1.msra.mxu0 0.0
    %2930 = vmatprep.subr.mxu0 0.0
    %2931 = vmatpush1.msra.mxu0 0.0
    %2932 = vmatprep.subr.mxu0 0.0
    %2933 = vmatpush1.msra.mxu0 0.0
    %2934 = vmatprep.subr.mxu0 0.0
    %2935 = vmatpush1.msra.mxu0 0.0
    %2936 = vmatprep.subr.mxu0 0.0
    %2937 = vmatpush1.msra.mxu0 0.0
    %2938 = vmatprep.subr.mxu0 0.0
    %2939 = vmatpush1.msra.mxu0 0.0
    %2940 = vmatprep.subr.mxu0 0.0
    %2941 = vmatpush1.msra.mxu0 0.0
    %2942 = vmatprep.subr.mxu0 0.0
    %2943 = vmatpush1.msra.mxu0 0.0
    %2944 = vmatprep.subr.mxu0 0.0
    %2945 = vmatpush1.msra.mxu0 0.0
    %2946 = vmatprep.subr.mxu0 0.0
    %2947 = vmatpush1.msra.mxu0 0.0
    %2948 = vmatprep.subr.mxu0 0.0
    %2949 = vmatpush1.msra.mxu0 0.0
    %2950 = vmatprep.subr.mxu0 0.0
    %2951 = vmatpush1.msra.mxu0 0.0
    %2952 = vmatprep.subr.mxu0 0.0
    %2953 = vmatpush1.msra.mxu0 0.0
    %2954 = vmatprep.subr.mxu0 0.0
    %2955 = vmatpush1.msra.mxu0 0.0
    %2956 = vmatprep.subr.mxu0 0.0
    %2957 = vmatpush1.msra.mxu0 0.0
    %2958 = vmatprep.subr.mxu0 0.0
    %2959 = vmatpush1.msra.mxu0 0.0
    %2960 = vmatprep.subr.mxu0 0.0
    %2961 = vmatpush1.msra.mxu0 0.0
    %2962 = vmatprep.subr.mxu0 0.0
    %2963 = vmatpush1.msra.mxu0 0.0
    %2964 = vmatprep.subr.mxu0 0.0
    %2965 = vmatpush1.msra.mxu0 0.0
    %2966 = vmatprep.subr.mxu0 0.0
    %2967 = vmatpush1.msra.mxu0 0.0
    %2968 = vmatprep.subr.mxu0 0.0
    %2969 = vmatpush1.msra.mxu0 0.0
    %2970 = vmatprep.subr.mxu0 0.0
    %2971 = vmatpush1.msra.mxu0 0.0
    %2972 = vmatprep.subr.mxu0 0.0
    %2973 = vmatpush1.msra.mxu0 0.0
    %2974 = vmatprep.mubr.f32.mxu0 0.0
    %2975 = vmatmul.mubr.f32.gmra.mrb[0].mxu0 %v2908
    %v2976 = vpop.f32.mrb[0].mxu0
    %v2977 = vadd.f32 0.0, %v2976
    %v2978 = vpop.f32.mrb[0].mxu0
    %2979 = vdwg.mxu0
    %2980 = vrot.lane.b32.xlu0 %v285, 88
    %v2981 = vpop.permute.xlu0 %2980
    %v2984 = vsel %vm291, %v2746, 0
    %2986 = vmatprep.subr.mxu0 0.0
    %2987 = vmatpush1.msra.mxu0 %v2981
    %2988 = vmatprep.subr.mxu0 0.0
    %2989 = vmatpush1.msra.mxu0 0.0
    %2990 = vmatprep.subr.mxu0 0.0
    %2991 = vmatpush1.msra.mxu0 0.0
    %2992 = vmatprep.subr.mxu0 0.0
    %2993 = vmatpush1.msra.mxu0 0.0
    %2994 = vmatprep.subr.mxu0 0.0
    %2995 = vmatpush1.msra.mxu0 0.0
    %2996 = vmatprep.subr.mxu0 0.0
    %2997 = vmatpush1.msra.mxu0 0.0
    %2998 = vmatprep.subr.mxu0 0.0
    %2999 = vmatpush1.msra.mxu0 0.0
    %3000 = vmatprep.subr.mxu0 0.0
    %3001 = vmatpush1.msra.mxu0 0.0
    %3002 = vmatprep.subr.mxu0 0.0
    %3003 = vmatpush1.msra.mxu0 0.0
    %3004 = vmatprep.subr.mxu0 0.0
    %3005 = vmatpush1.msra.mxu0 0.0
    %3006 = vmatprep.subr.mxu0 0.0
    %3007 = vmatpush1.msra.mxu0 0.0
    %3008 = vmatprep.subr.mxu0 0.0
    %3009 = vmatpush1.msra.mxu0 0.0
    %3010 = vmatprep.subr.mxu0 0.0
    %3011 = vmatpush1.msra.mxu0 0.0
    %3012 = vmatprep.subr.mxu0 0.0
    %3013 = vmatpush1.msra.mxu0 0.0
    %3014 = vmatprep.subr.mxu0 0.0
    %3015 = vmatpush1.msra.mxu0 0.0
    %3016 = vmatprep.subr.mxu0 0.0
    %3017 = vmatpush1.msra.mxu0 0.0
    %3018 = vmatprep.subr.mxu0 0.0
    %3019 = vmatpush1.msra.mxu0 0.0
    %3020 = vmatprep.subr.mxu0 0.0
    %3021 = vmatpush1.msra.mxu0 0.0
    %3022 = vmatprep.subr.mxu0 0.0
    %3023 = vmatpush1.msra.mxu0 0.0
    %3024 = vmatprep.subr.mxu0 0.0
    %3025 = vmatpush1.msra.mxu0 0.0
    %3026 = vmatprep.subr.mxu0 0.0
    %3027 = vmatpush1.msra.mxu0 0.0
    %3028 = vmatprep.subr.mxu0 0.0
    %3029 = vmatpush1.msra.mxu0 0.0
    %3030 = vmatprep.subr.mxu0 0.0
    %3031 = vmatpush1.msra.mxu0 0.0
    %3032 = vmatprep.subr.mxu0 0.0
    %3033 = vmatpush1.msra.mxu0 0.0
    %3034 = vmatprep.subr.mxu0 0.0
    %3035 = vmatpush1.msra.mxu0 0.0
    %3036 = vmatprep.subr.mxu0 0.0
    %3037 = vmatpush1.msra.mxu0 0.0
    %3038 = vmatprep.subr.mxu0 0.0
    %3039 = vmatpush1.msra.mxu0 0.0
    %3040 = vmatprep.subr.mxu0 0.0
    %3041 = vmatpush1.msra.mxu0 0.0
    %3042 = vmatprep.subr.mxu0 0.0
    %3043 = vmatpush1.msra.mxu0 0.0
    %3044 = vmatprep.subr.mxu0 0.0
    %3045 = vmatpush1.msra.mxu0 0.0
    %3046 = vmatprep.subr.mxu0 0.0
    %3047 = vmatpush1.msra.mxu0 0.0
    %3048 = vmatprep.subr.mxu0 0.0
    %3049 = vmatpush1.msra.mxu0 0.0
    %3050 = vmatprep.mubr.f32.mxu0 0.0
    %3051 = vmatmul.mubr.f32.gmra.mrb[0].mxu0 %v2984
    %v3052 = vpop.f32.mrb[0].mxu0
    %v3053 = vadd.f32 0.0, %v3052
    %v3054 = vpop.f32.mrb[0].mxu0
    %3055 = vdwg.mxu0
    %v3056 = vld [vmem:[#allocation7 + $0x88] sm:$0xff]
    %v3058 = vsel %vm291, %v2977, 0
    %v3061 = vsel %vm291, %v3053, 0
    %3063 = vmatprep.subr.mxu0 0.0
    %3064 = vmatpush1.msra.mxu0 %v3056
    %3065 = vmatprep.subr.mxu0 0.0
    %3066 = vmatpush1.msra.mxu0 0.0
    %3067 = vmatprep.subr.mxu0 0.0
    %3068 = vmatpush1.msra.mxu0 0.0
    %3069 = vmatprep.subr.mxu0 0.0
    %3070 = vmatpush1.msra.mxu0 0.0
    %3071 = vmatprep.subr.mxu0 0.0
    %3072 = vmatpush1.msra.mxu0 0.0
    %3073 = vmatprep.subr.mxu0 0.0
    %3074 = vmatpush1.msra.mxu0 0.0
    %3075 = vmatprep.subr.mxu0 0.0
    %3076 = vmatpush1.msra.mxu0 0.0
    %3077 = vmatprep.subr.mxu0 0.0
    %3078 = vmatpush1.msra.mxu0 0.0
    %3079 = vmatprep.subr.mxu0 0.0
    %3080 = vmatpush1.msra.mxu0 0.0
    %3081 = vmatprep.subr.mxu0 0.0
    %3082 = vmatpush1.msra.mxu0 0.0
    %3083 = vmatprep.subr.mxu0 0.0
    %3084 = vmatpush1.msra.mxu0 0.0
    %3085 = vmatprep.subr.mxu0 0.0
    %3086 = vmatpush1.msra.mxu0 0.0
    %3087 = vmatprep.subr.mxu0 0.0
    %3088 = vmatpush1.msra.mxu0 0.0
    %3089 = vmatprep.subr.mxu0 0.0
    %3090 = vmatpush1.msra.mxu0 0.0
    %3091 = vmatprep.subr.mxu0 0.0
    %3092 = vmatpush1.msra.mxu0 0.0
    %3093 = vmatprep.subr.mxu0 0.0
    %3094 = vmatpush1.msra.mxu0 0.0
    %3095 = vmatprep.subr.mxu0 0.0
    %3096 = vmatpush1.msra.mxu0 0.0
    %3097 = vmatprep.subr.mxu0 0.0
    %3098 = vmatpush1.msra.mxu0 0.0
    %3099 = vmatprep.subr.mxu0 0.0
    %3100 = vmatpush1.msra.mxu0 0.0
    %3101 = vmatprep.subr.mxu0 0.0
    %3102 = vmatpush1.msra.mxu0 0.0
    %3103 = vmatprep.subr.mxu0 0.0
    %3104 = vmatpush1.msra.mxu0 0.0
    %3105 = vmatprep.subr.mxu0 0.0
    %3106 = vmatpush1.msra.mxu0 0.0
    %3107 = vmatprep.subr.mxu0 0.0
    %3108 = vmatpush1.msra.mxu0 0.0
    %3109 = vmatprep.subr.mxu0 0.0
    %3110 = vmatpush1.msra.mxu0 0.0
    %3111 = vmatprep.subr.mxu0 0.0
    %3112 = vmatpush1.msra.mxu0 0.0
    %3113 = vmatprep.subr.mxu0 0.0
    %3114 = vmatpush1.msra.mxu0 0.0
    %3115 = vmatprep.subr.mxu0 0.0
    %3116 = vmatpush1.msra.mxu0 0.0
    %3117 = vmatprep.subr.mxu0 0.0
    %3118 = vmatpush1.msra.mxu0 0.0
    %3119 = vmatprep.subr.mxu0 0.0
    %3120 = vmatpush1.msra.mxu0 0.0
    %3121 = vmatprep.subr.mxu0 0.0
    %3122 = vmatpush1.msra.mxu0 0.0
    %3123 = vmatprep.subr.mxu0 0.0
    %3124 = vmatpush1.msra.mxu0 0.0
    %3125 = vmatprep.subr.mxu0 0.0
    %3126 = vmatpush1.msra.mxu0 0.0
    %3127 = vmatprep.mubr.f32.mxu0 0.0
    %3128 = vmatmul.mubr.f32.gmra.mrb[0].mxu0 %v3058
    %v3129 = vpop.f32.mrb[0].mxu0
    %v3130 = vadd.f32 0.0, %v3129
    %v3131 = vpop.f32.mrb[0].mxu0
    %3132 = vmatprep.mubr.f32.mxu0 0.0
    %3133 = vmatmul.mubr.f32.gmra.mrb[0].mxu0 %v3061
    %v3134 = vpop.f32.mrb[0].mxu0
    %v3135 = vadd.f32 0.0, %v3134
    %v3136 = vpop.f32.mrb[0].mxu0
    %3137 = vdwg.mxu0
    %v3139 = vsel %vm291, %v2824, 0
    %v3142 = vsel %vm291, %v2900, 0
    %3144 = vmatprep.subr.mxu0 0.0
    %3145 = vmatpush1.msra.mxu0 %v2903
    %3146 = vmatprep.subr.mxu0 0.0
    %3147 = vmatpush1.msra.mxu0 0.0
    %3148 = vmatprep.subr.mxu0 0.0
    %3149 = vmatpush1.msra.mxu0 0.0
    %3150 = vmatprep.subr.mxu0 0.0
    %3151 = vmatpush1.msra.mxu0 0.0
    %3152 = vmatprep.subr.mxu0 0.0
    %3153 = vmatpush1.msra.mxu0 0.0
    %3154 = vmatprep.subr.mxu0 0.0
    %3155 = vmatpush1.msra.mxu0 0.0
    %3156 = vmatprep.subr.mxu0 0.0
    %3157 = vmatpush1.msra.mxu0 0.0
    %3158 = vmatprep.subr.mxu0 0.0
    %3159 = vmatpush1.msra.mxu0 0.0
    %3160 = vmatprep.subr.mxu0 0.0
    %3161 = vmatpush1.msra.mxu0 0.0
    %3162 = vmatprep.subr.mxu0 0.0
    %3163 = vmatpush1.msra.mxu0 0.0
    %3164 = vmatprep.subr.mxu0 0.0
    %3165 = vmatpush1.msra.mxu0 0.0
    %3166 = vmatprep.subr.mxu0 0.0
    %3167 = vmatpush1.msra.mxu0 0.0
    %3168 = vmatprep.subr.mxu0 0.0
    %3169 = vmatpush1.msra.mxu0 0.0
    %3170 = vmatprep.subr.mxu0 0.0
    %3171 = vmatpush1.msra.mxu0 0.0
    %3172 = vmatprep.subr.mxu0 0.0
    %3173 = vmatpush1.msra.mxu0 0.0
    %3174 = vmatprep.subr.mxu0 0.0
    %3175 = vmatpush1.msra.mxu0 0.0
    %3176 = vmatprep.subr.mxu0 0.0
    %3177 = vmatpush1.msra.mxu0 0.0
    %3178 = vmatprep.subr.mxu0 0.0
    %3179 = vmatpush1.msra.mxu0 0.0
    %3180 = vmatprep.subr.mxu0 0.0
    %3181 = vmatpush1.msra.mxu0 0.0
    %3182 = vmatprep.subr.mxu0 0.0
    %3183 = vmatpush1.msra.mxu0 0.0
    %3184 = vmatprep.subr.mxu0 0.0
    %3185 = vmatpush1.msra.mxu0 0.0
    %3186 = vmatprep.subr.mxu0 0.0
    %3187 = vmatpush1.msra.mxu0 0.0
    %3188 = vmatprep.subr.mxu0 0.0
    %3189 = vmatpush1.msra.mxu0 0.0
    %3190 = vmatprep.subr.mxu0 0.0
    %3191 = vmatpush1.msra.mxu0 0.0
    %3192 = vmatprep.subr.mxu0 0.0
    %3193 = vmatpush1.msra.mxu0 0.0
    %3194 = vmatprep.subr.mxu0 0.0
    %3195 = vmatpush1.msra.mxu0 0.0
    %3196 = vmatprep.subr.mxu0 0.0
    %3197 = vmatpush1.msra.mxu0 0.0
    %3198 = vmatprep.subr.mxu0 0.0
    %3199 = vmatpush1.msra.mxu0 0.0
    %3200 = vmatprep.subr.mxu0 0.0
    %3201 = vmatpush1.msra.mxu0 0.0
    %3202 = vmatprep.subr.mxu0 0.0
    %3203 = vmatpush1.msra.mxu0 0.0
    %3204 = vmatprep.subr.mxu0 0.0
    %3205 = vmatpush1.msra.mxu0 0.0
    %3206 = vmatprep.subr.mxu0 0.0
    %3207 = vmatpush1.msra.mxu0 0.0
    %3208 = vmatprep.mubr.f32.mxu0 0.0
    %3209 = vmatmul.mubr.f32.gmra.mrb[0].mxu0 %v3139
    %v3210 = vpop.f32.mrb[0].mxu0
    %v3211 = vadd.f32 %v3130, %v3210
    %v3212 = vpop.f32.mrb[0].mxu0
    %3213 = vmatprep.mubr.f32.mxu0 0.0
    %3214 = vmatmul.mubr.f32.gmra.mrb[0].mxu0 %v3142
    %v3215 = vpop.f32.mrb[0].mxu0
    %v3216 = vadd.f32 %v3135, %v3215
    %v3217 = vpop.f32.mrb[0].mxu0
    %3218 = vdwg.mxu0
    %3219 = vrot.lane.b32.xlu0 %v280, 80
    %v3220 = vpop.permute.xlu0 %3219
    %v3223 = vsel %vm291, %v2747, 0
    %3225 = vmatprep.subr.mxu0 0.0
    %3226 = vmatpush1.msra.mxu0 %v3220
    %3227 = vmatprep.subr.mxu0 0.0
    %3228 = vmatpush1.msra.mxu0 0.0
    %3229 = vmatprep.subr.mxu0 0.0
    %3230 = vmatpush1.msra.mxu0 0.0
    %3231 = vmatprep.subr.mxu0 0.0
    %3232 = vmatpush1.msra.mxu0 0.0
    %3233 = vmatprep.subr.mxu0 0.0
    %3234 = vmatpush1.msra.mxu0 0.0
    %3235 = vmatprep.subr.mxu0 0.0
    %3236 = vmatpush1.msra.mxu0 0.0
    %3237 = vmatprep.subr.mxu0 0.0
    %3238 = vmatpush1.msra.mxu0 0.0
    %3239 = vmatprep.subr.mxu0 0.0
    %3240 = vmatpush1.msra.mxu0 0.0
    %3241 = vmatprep.subr.mxu0 0.0
    %3242 = vmatpush1.msra.mxu0 0.0
    %3243 = vmatprep.subr.mxu0 0.0
    %3244 = vmatpush1.msra.mxu0 0.0
    %3245 = vmatprep.subr.mxu0 0.0
    %3246 = vmatpush1.msra.mxu0 0.0
    %3247 = vmatprep.subr.mxu0 0.0
    %3248 = vmatpush1.msra.mxu0 0.0
    %3249 = vmatprep.subr.mxu0 0.0
    %3250 = vmatpush1.msra.mxu0 0.0
    %3251 = vmatprep.subr.mxu0 0.0
    %3252 = vmatpush1.msra.mxu0 0.0
    %3253 = vmatprep.subr.mxu0 0.0
    %3254 = vmatpush1.msra.mxu0 0.0
    %3255 = vmatprep.subr.mxu0 0.0
    %3256 = vmatpush1.msra.mxu0 0.0
    %3257 = vmatprep.subr.mxu0 0.0
    %3258 = vmatpush1.msra.mxu0 0.0
    %3259 = vmatprep.subr.mxu0 0.0
    %3260 = vmatpush1.msra.mxu0 0.0
    %3261 = vmatprep.subr.mxu0 0.0
    %3262 = vmatpush1.msra.mxu0 0.0
    %3263 = vmatprep.subr.mxu0 0.0
    %3264 = vmatpush1.msra.mxu0 0.0
    %3265 = vmatprep.subr.mxu0 0.0
    %3266 = vmatpush1.msra.mxu0 0.0
    %3267 = vmatprep.subr.mxu0 0.0
    %3268 = vmatpush1.msra.mxu0 0.0
    %3269 = vmatprep.subr.mxu0 0.0
    %3270 = vmatpush1.msra.mxu0 0.0
    %3271 = vmatprep.subr.mxu0 0.0
    %3272 = vmatpush1.msra.mxu0 0.0
    %3273 = vmatprep.subr.mxu0 0.0
    %3274 = vmatpush1.msra.mxu0 0.0
    %3275 = vmatprep.subr.mxu0 0.0
    %3276 = vmatpush1.msra.mxu0 0.0
    %3277 = vmatprep.subr.mxu0 0.0
    %3278 = vmatpush1.msra.mxu0 0.0
    %3279 = vmatprep.subr.mxu0 0.0
    %3280 = vmatpush1.msra.mxu0 0.0
    %3281 = vmatprep.subr.mxu0 0.0
    %3282 = vmatpush1.msra.mxu0 0.0
    %3283 = vmatprep.subr.mxu0 0.0
    %3284 = vmatpush1.msra.mxu0 0.0
    %3285 = vmatprep.subr.mxu0 0.0
    %3286 = vmatpush1.msra.mxu0 0.0
    %3287 = vmatprep.subr.mxu0 0.0
    %3288 = vmatpush1.msra.mxu0 0.0
    %3289 = vmatprep.mubr.f32.mxu0 0.0
    %3290 = vmatmul.mubr.f32.gmra.mrb[0].mxu0 %v3223
    %v3291 = vpop.f32.mrb[0].mxu0
    %v3292 = vadd.f32 0.0, %v3291
    %v3293 = vpop.f32.mrb[0].mxu0
    %3294 = vdwg.mxu0
    %3295 = vrot.lane.b32.xlu0 %v285, 80
    %v3296 = vpop.permute.xlu0 %3295
    %v3299 = vsel %vm291, %v2748, 0
    %3301 = vmatprep.subr.mxu0 0.0
    %3302 = vmatpush1.msra.mxu0 %v3296
    %3303 = vmatprep.subr.mxu0 0.0
    %3304 = vmatpush1.msra.mxu0 0.0
    %3305 = vmatprep.subr.mxu0 0.0
    %3306 = vmatpush1.msra.mxu0 0.0
    %3307 = vmatprep.subr.mxu0 0.0
    %3308 = vmatpush1.msra.mxu0 0.0
    %3309 = vmatprep.subr.mxu0 0.0
    %3310 = vmatpush1.msra.mxu0 0.0
    %3311 = vmatprep.subr.mxu0 0.0
    %3312 = vmatpush1.msra.mxu0 0.0
    %3313 = vmatprep.subr.mxu0 0.0
    %3314 = vmatpush1.msra.mxu0 0.0
    %3315 = vmatprep.subr.mxu0 0.0
    %3316 = vmatpush1.msra.mxu0 0.0
    %3317 = vmatprep.subr.mxu0 0.0
    %3318 = vmatpush1.msra.mxu0 0.0
    %3319 = vmatprep.subr.mxu0 0.0
    %3320 = vmatpush1.msra.mxu0 0.0
    %3321 = vmatprep.subr.mxu0 0.0
    %3322 = vmatpush1.msra.mxu0 0.0
    %3323 = vmatprep.subr.mxu0 0.0
    %3324 = vmatpush1.msra.mxu0 0.0
    %3325 = vmatprep.subr.mxu0 0.0
    %3326 = vmatpush1.msra.mxu0 0.0
    %3327 = vmatprep.subr.mxu0 0.0
    %3328 = vmatpush1.msra.mxu0 0.0
    %3329 = vmatprep.subr.mxu0 0.0
    %3330 = vmatpush1.msra.mxu0 0.0
    %3331 = vmatprep.subr.mxu0 0.0
    %3332 = vmatpush1.msra.mxu0 0.0
    %3333 = vmatprep.subr.mxu0 0.0
    %3334 = vmatpush1.msra.mxu0 0.0
    %3335 = vmatprep.subr.mxu0 0.0
    %3336 = vmatpush1.msra.mxu0 0.0
    %3337 = vmatprep.subr.mxu0 0.0
    %3338 = vmatpush1.msra.mxu0 0.0
    %3339 = vmatprep.subr.mxu0 0.0
    %3340 = vmatpush1.msra.mxu0 0.0
    %3341 = vmatprep.subr.mxu0 0.0
    %3342 = vmatpush1.msra.mxu0 0.0
    %3343 = vmatprep.subr.mxu0 0.0
    %3344 = vmatpush1.msra.mxu0 0.0
    %3345 = vmatprep.subr.mxu0 0.0
    %3346 = vmatpush1.msra.mxu0 0.0
    %3347 = vmatprep.subr.mxu0 0.0
    %3348 = vmatpush1.msra.mxu0 0.0
    %3349 = vmatprep.subr.mxu0 0.0
    %3350 = vmatpush1.msra.mxu0 0.0
    %3351 = vmatprep.subr.mxu0 0.0
    %3352 = vmatpush1.msra.mxu0 0.0
    %3353 = vmatprep.subr.mxu0 0.0
    %3354 = vmatpush1.msra.mxu0 0.0
    %3355 = vmatprep.subr.mxu0 0.0
    %3356 = vmatpush1.msra.mxu0 0.0
    %3357 = vmatprep.subr.mxu0 0.0
    %3358 = vmatpush1.msra.mxu0 0.0
    %3359 = vmatprep.subr.mxu0 0.0
    %3360 = vmatpush1.msra.mxu0 0.0
    %3361 = vmatprep.subr.mxu0 0.0
    %3362 = vmatpush1.msra.mxu0 0.0
    %3363 = vmatprep.subr.mxu0 0.0
    %3364 = vmatpush1.msra.mxu0 0.0
    %3365 = vmatprep.mubr.f32.mxu0 0.0
    %3366 = vmatmul.mubr.f32.gmra.mrb[0].mxu0 %v3299
    %v3367 = vpop.f32.mrb[0].mxu0
    %v3368 = vadd.f32 0.0, %v3367
    %v3369 = vpop.f32.mrb[0].mxu0
    %3370 = vdwg.mxu0
    %v3371 = vld [vmem:[#allocation7 + $0x90] sm:$0xff]
    %v3373 = vsel %vm291, %v3292, 0
    %v3376 = vsel %vm291, %v3368, 0
    %3378 = vmatprep.subr.mxu0 0.0
    %3379 = vmatpush1.msra.mxu0 %v3371
    %3380 = vmatprep.subr.mxu0 0.0
    %3381 = vmatpush1.msra.mxu0 0.0
    %3382 = vmatprep.subr.mxu0 0.0
    %3383 = vmatpush1.msra.mxu0 0.0
    %3384 = vmatprep.subr.mxu0 0.0
    %3385 = vmatpush1.msra.mxu0 0.0
    %3386 = vmatprep.subr.mxu0 0.0
    %3387 = vmatpush1.msra.mxu0 0.0
    %3388 = vmatprep.subr.mxu0 0.0
    %3389 = vmatpush1.msra.mxu0 0.0
    %3390 = vmatprep.subr.mxu0 0.0
    %3391 = vmatpush1.msra.mxu0 0.0
    %3392 = vmatprep.subr.mxu0 0.0
    %3393 = vmatpush1.msra.mxu0 0.0
    %3394 = vmatprep.subr.mxu0 0.0
    %3395 = vmatpush1.msra.mxu0 0.0
    %3396 = vmatprep.subr.mxu0 0.0
    %3397 = vmatpush1.msra.mxu0 0.0
    %3398 = vmatprep.subr.mxu0 0.0
    %3399 = vmatpush1.msra.mxu0 0.0
    %3400 = vmatprep.subr.mxu0 0.0
    %3401 = vmatpush1.msra.mxu0 0.0
    %3402 = vmatprep.subr.mxu0 0.0
    %3403 = vmatpush1.msra.mxu0 0.0
    %3404 = vmatprep.subr.mxu0 0.0
    %3405 = vmatpush1.msra.mxu0 0.0
    %3406 = vmatprep.subr.mxu0 0.0
    %3407 = vmatpush1.msra.mxu0 0.0
    %3408 = vmatprep.subr.mxu0 0.0
    %3409 = vmatpush1.msra.mxu0 0.0
    %3410 = vmatprep.subr.mxu0 0.0
    %3411 = vmatpush1.msra.mxu0 0.0
    %3412 = vmatprep.subr.mxu0 0.0
    %3413 = vmatpush1.msra.mxu0 0.0
    %3414 = vmatprep.subr.mxu0 0.0
    %3415 = vmatpush1.msra.mxu0 0.0
    %3416 = vmatprep.subr.mxu0 0.0
    %3417 = vmatpush1.msra.mxu0 0.0
    %3418 = vmatprep.subr.mxu0 0.0
    %3419 = vmatpush1.msra.mxu0 0.0
    %3420 = vmatprep.subr.mxu0 0.0
    %3421 = vmatpush1.msra.mxu0 0.0
    %3422 = vmatprep.subr.mxu0 0.0
    %3423 = vmatpush1.msra.mxu0 0.0
    %3424 = vmatprep.subr.mxu0 0.0
    %3425 = vmatpush1.msra.mxu0 0.0
    %3426 = vmatprep.subr.mxu0 0.0
    %3427 = vmatpush1.msra.mxu0 0.0
    %3428 = vmatprep.subr.mxu0 0.0
    %3429 = vmatpush1.msra.mxu0 0.0
    %3430 = vmatprep.subr.mxu0 0.0
    %3431 = vmatpush1.msra.mxu0 0.0
    %3432 = vmatprep.subr.mxu0 0.0
    %3433 = vmatpush1.msra.mxu0 0.0
    %3434 = vmatprep.subr.mxu0 0.0
    %3435 = vmatpush1.msra.mxu0 0.0
    %3436 = vmatprep.subr.mxu0 0.0
    %3437 = vmatpush1.msra.mxu0 0.0
    %3438 = vmatprep.subr.mxu0 0.0
    %3439 = vmatpush1.msra.mxu0 0.0
    %3440 = vmatprep.subr.mxu0 0.0
    %3441 = vmatpush1.msra.mxu0 0.0
    %3442 = vmatprep.mubr.f32.mxu0 0.0
    %3443 = vmatmul.mubr.f32.gmra.mrb[0].mxu0 %v3373
    %v3444 = vpop.f32.mrb[0].mxu0
    %v3445 = vadd.f32 0.0, %v3444
    %v3446 = vpop.f32.mrb[0].mxu0
    %3447 = vmatprep.mubr.f32.mxu0 0.0
    %3448 = vmatmul.mubr.f32.gmra.mrb[0].mxu0 %v3376
    %v3449 = vpop.f32.mrb[0].mxu0
    %v3450 = vadd.f32 0.0, %v3449
    %v3451 = vpop.f32.mrb[0].mxu0
    %3452 = vdwg.mxu0
    %v3453 = vadd.f32 %v3211, %v3445
    %v3454 = vadd.f32 %v3216, %v3450
    %3455 = vrot.lane.b32.xlu0 %v280, 72
    %v3456 = vpop.permute.xlu0 %3455
    %v3459 = vsel %vm291, %v2749, 0
    %3461 = vmatprep.subr.mxu0 0.0
    %3462 = vmatpush1.msra.mxu0 %v3456
    %3463 = vmatprep.subr.mxu0 0.0
    %3464 = vmatpush1.msra.mxu0 0.0
    %3465 = vmatprep.subr.mxu0 0.0
    %3466 = vmatpush1.msra.mxu0 0.0
    %3467 = vmatprep.subr.mxu0 0.0
    %3468 = vmatpush1.msra.mxu0 0.0
    %3469 = vmatprep.subr.mxu0 0.0
    %3470 = vmatpush1.msra.mxu0 0.0
    %3471 = vmatprep.subr.mxu0 0.0
    %3472 = vmatpush1.msra.mxu0 0.0
    %3473 = vmatprep.subr.mxu0 0.0
    %3474 = vmatpush1.msra.mxu0 0.0
    %3475 = vmatprep.subr.mxu0 0.0
    %3476 = vmatpush1.msra.mxu0 0.0
    %3477 = vmatprep.subr.mxu0 0.0
    %3478 = vmatpush1.msra.mxu0 0.0
    %3479 = vmatprep.subr.mxu0 0.0
    %3480 = vmatpush1.msra.mxu0 0.0
    %3481 = vmatprep.subr.mxu0 0.0
    %3482 = vmatpush1.msra.mxu0 0.0
    %3483 = vmatprep.subr.mxu0 0.0
    %3484 = vmatpush1.msra.mxu0 0.0
    %3485 = vmatprep.subr.mxu0 0.0
    %3486 = vmatpush1.msra.mxu0 0.0
    %3487 = vmatprep.subr.mxu0 0.0
    %3488 = vmatpush1.msra.mxu0 0.0
    %3489 = vmatprep.subr.mxu0 0.0
    %3490 = vmatpush1.msra.mxu0 0.0
    %3491 = vmatprep.subr.mxu0 0.0
    %3492 = vmatpush1.msra.mxu0 0.0
    %3493 = vmatprep.subr.mxu0 0.0
    %3494 = vmatpush1.msra.mxu0 0.0
    %3495 = vmatprep.subr.mxu0 0.0
    %3496 = vmatpush1.msra.mxu0 0.0
    %3497 = vmatprep.subr.mxu0 0.0
    %3498 = vmatpush1.msra.mxu0 0.0
    %3499 = vmatprep.subr.mxu0 0.0
    %3500 = vmatpush1.msra.mxu0 0.0
    %3501 = vmatprep.subr.mxu0 0.0
    %3502 = vmatpush1.msra.mxu0 0.0
    %3503 = vmatprep.subr.mxu0 0.0
    %3504 = vmatpush1.msra.mxu0 0.0
    %3505 = vmatprep.subr.mxu0 0.0
    %3506 = vmatpush1.msra.mxu0 0.0
    %3507 = vmatprep.subr.mxu0 0.0
    %3508 = vmatpush1.msra.mxu0 0.0
    %3509 = vmatprep.subr.mxu0 0.0
    %3510 = vmatpush1.msra.mxu0 0.0
    %3511 = vmatprep.subr.mxu0 0.0
    %3512 = vmatpush1.msra.mxu0 0.0
    %3513 = vmatprep.subr.mxu0 0.0
    %3514 = vmatpush1.msra.mxu0 0.0
    %3515 = vmatprep.subr.mxu0 0.0
    %3516 = vmatpush1.msra.mxu0 0.0
    %3517 = vmatprep.subr.mxu0 0.0
    %3518 = vmatpush1.msra.mxu0 0.0
    %3519 = vmatprep.subr.mxu0 0.0
    %3520 = vmatpush1.msra.mxu0 0.0
    %3521 = vmatprep.subr.mxu0 0.0
    %3522 = vmatpush1.msra.mxu0 0.0
    %3523 = vmatprep.subr.mxu0 0.0
    %3524 = vmatpush1.msra.mxu0 0.0
    %3525 = vmatprep.mubr.f32.mxu0 0.0
    %3526 = vmatmul.mubr.f32.gmra.mrb[0].mxu0 %v3459
    %v3527 = vpop.f32.mrb[0].mxu0
    %v3528 = vadd.f32 0.0, %v3527
    %v3529 = vpop.f32.mrb[0].mxu0
    %3530 = vdwg.mxu0
    %3531 = vrot.lane.b32.xlu0 %v285, 72
    %v3532 = vpop.permute.xlu0 %3531
    %v3535 = vsel %vm291, %v2750, 0
    %3537 = vmatprep.subr.mxu0 0.0
    %3538 = vmatpush1.msra.mxu0 %v3532
    %3539 = vmatprep.subr.mxu0 0.0
    %3540 = vmatpush1.msra.mxu0 0.0
    %3541 = vmatprep.subr.mxu0 0.0
    %3542 = vmatpush1.msra.mxu0 0.0
    %3543 = vmatprep.subr.mxu0 0.0
    %3544 = vmatpush1.msra.mxu0 0.0
    %3545 = vmatprep.subr.mxu0 0.0
    %3546 = vmatpush1.msra.mxu0 0.0
    %3547 = vmatprep.subr.mxu0 0.0
    %3548 = vmatpush1.msra.mxu0 0.0
    %3549 = vmatprep.subr.mxu0 0.0
    %3550 = vmatpush1.msra.mxu0 0.0
    %3551 = vmatprep.subr.mxu0 0.0
    %3552 = vmatpush1.msra.mxu0 0.0
    %3553 = vmatprep.subr.mxu0 0.0
    %3554 = vmatpush1.msra.mxu0 0.0
    %3555 = vmatprep.subr.mxu0 0.0
    %3556 = vmatpush1.msra.mxu0 0.0
    %3557 = vmatprep.subr.mxu0 0.0
    %3558 = vmatpush1.msra.mxu0 0.0
    %3559 = vmatprep.subr.mxu0 0.0
    %3560 = vmatpush1.msra.mxu0 0.0
    %3561 = vmatprep.subr.mxu0 0.0
    %3562 = vmatpush1.msra.mxu0 0.0
    %3563 = vmatprep.subr.mxu0 0.0
    %3564 = vmatpush1.msra.mxu0 0.0
    %3565 = vmatprep.subr.mxu0 0.0
    %3566 = vmatpush1.msra.mxu0 0.0
    %3567 = vmatprep.subr.mxu0 0.0
    %3568 = vmatpush1.msra.mxu0 0.0
    %3569 = vmatprep.subr.mxu0 0.0
    %3570 = vmatpush1.msra.mxu0 0.0
    %3571 = vmatprep.subr.mxu0 0.0
    %3572 = vmatpush1.msra.mxu0 0.0
    %3573 = vmatprep.subr.mxu0 0.0
    %3574 = vmatpush1.msra.mxu0 0.0
    %3575 = vmatprep.subr.mxu0 0.0
    %3576 = vmatpush1.msra.mxu0 0.0
    %3577 = vmatprep.subr.mxu0 0.0
    %3578 = vmatpush1.msra.mxu0 0.0
    %3579 = vmatprep.subr.mxu0 0.0
    %3580 = vmatpush1.msra.mxu0 0.0
    %3581 = vmatprep.subr.mxu0 0.0
    %3582 = vmatpush1.msra.mxu0 0.0
    %3583 = vmatprep.subr.mxu0 0.0
    %3584 = vmatpush1.msra.mxu0 0.0
    %3585 = vmatprep.subr.mxu0 0.0
    %3586 = vmatpush1.msra.mxu0 0.0
    %3587 = vmatprep.subr.mxu0 0.0
    %3588 = vmatpush1.msra.mxu0 0.0
    %3589 = vmatprep.subr.mxu0 0.0
    %3590 = vmatpush1.msra.mxu0 0.0
    %3591 = vmatprep.subr.mxu0 0.0
    %3592 = vmatpush1.msra.mxu0 0.0
    %3593 = vmatprep.subr.mxu0 0.0
    %3594 = vmatpush1.msra.mxu0 0.0
    %3595 = vmatprep.subr.mxu0 0.0
    %3596 = vmatpush1.msra.mxu0 0.0
    %3597 = vmatprep.subr.mxu0 0.0
    %3598 = vmatpush1.msra.mxu0 0.0
    %3599 = vmatprep.subr.mxu0 0.0
    %3600 = vmatpush1.msra.mxu0 0.0
    %3601 = vmatprep.mubr.f32.mxu0 0.0
    %3602 = vmatmul.mubr.f32.gmra.mrb[0].mxu0 %v3535
    %v3603 = vpop.f32.mrb[0].mxu0
    %v3604 = vadd.f32 0.0, %v3603
    %v3605 = vpop.f32.mrb[0].mxu0
    %3606 = vdwg.mxu0
    %v3607 = vld [vmem:[#allocation7 + $0x98] sm:$0xff]
    %v3609 = vsel %vm291, %v3528, 0
    %v3612 = vsel %vm291, %v3604, 0
    %3614 = vmatprep.subr.mxu0 0.0
    %3615 = vmatpush1.msra.mxu0 %v3607
    %3616 = vmatprep.subr.mxu0 0.0
    %3617 = vmatpush1.msra.mxu0 0.0
    %3618 = vmatprep.subr.mxu0 0.0
    %3619 = vmatpush1.msra.mxu0 0.0
    %3620 = vmatprep.subr.mxu0 0.0
    %3621 = vmatpush1.msra.mxu0 0.0
    %3622 = vmatprep.subr.mxu0 0.0
    %3623 = vmatpush1.msra.mxu0 0.0
    %3624 = vmatprep.subr.mxu0 0.0
    %3625 = vmatpush1.msra.mxu0 0.0
    %3626 = vmatprep.subr.mxu0 0.0
    %3627 = vmatpush1.msra.mxu0 0.0
    %3628 = vmatprep.subr.mxu0 0.0
    %3629 = vmatpush1.msra.mxu0 0.0
    %3630 = vmatprep.subr.mxu0 0.0
    %3631 = vmatpush1.msra.mxu0 0.0
    %3632 = vmatprep.subr.mxu0 0.0
    %3633 = vmatpush1.msra.mxu0 0.0
    %3634 = vmatprep.subr.mxu0 0.0
    %3635 = vmatpush1.msra.mxu0 0.0
    %3636 = vmatprep.subr.mxu0 0.0
    %3637 = vmatpush1.msra.mxu0 0.0
    %3638 = vmatprep.subr.mxu0 0.0
    %3639 = vmatpush1.msra.mxu0 0.0
    %3640 = vmatprep.subr.mxu0 0.0
    %3641 = vmatpush1.msra.mxu0 0.0
    %3642 = vmatprep.subr.mxu0 0.0
    %3643 = vmatpush1.msra.mxu0 0.0
    %3644 = vmatprep.subr.mxu0 0.0
    %3645 = vmatpush1.msra.mxu0 0.0
    %3646 = vmatprep.subr.mxu0 0.0
    %3647 = vmatpush1.msra.mxu0 0.0
    %3648 = vmatprep.subr.mxu0 0.0
    %3649 = vmatpush1.msra.mxu0 0.0
    %3650 = vmatprep.subr.mxu0 0.0
    %3651 = vmatpush1.msra.mxu0 0.0
    %3652 = vmatprep.subr.mxu0 0.0
    %3653 = vmatpush1.msra.mxu0 0.0
    %3654 = vmatprep.subr.mxu0 0.0
    %3655 = vmatpush1.msra.mxu0 0.0
    %3656 = vmatprep.subr.mxu0 0.0
    %3657 = vmatpush1.msra.mxu0 0.0
    %3658 = vmatprep.subr.mxu0 0.0
    %3659 = vmatpush1.msra.mxu0 0.0
    %3660 = vmatprep.subr.mxu0 0.0
    %3661 = vmatpush1.msra.mxu0 0.0
    %3662 = vmatprep.subr.mxu0 0.0
    %3663 = vmatpush1.msra.mxu0 0.0
    %3664 = vmatprep.subr.mxu0 0.0
    %3665 = vmatpush1.msra.mxu0 0.0
    %3666 = vmatprep.subr.mxu0 0.0
    %3667 = vmatpush1.msra.mxu0 0.0
    %3668 = vmatprep.subr.mxu0 0.0
    %3669 = vmatpush1.msra.mxu0 0.0
    %3670 = vmatprep.subr.mxu0 0.0
    %3671 = vmatpush1.msra.mxu0 0.0
    %3672 = vmatprep.subr.mxu0 0.0
    %3673 = vmatpush1.msra.mxu0 0.0
    %3674 = vmatprep.subr.mxu0 0.0
    %3675 = vmatpush1.msra.mxu0 0.0
    %3676 = vmatprep.subr.mxu0 0.0
    %3677 = vmatpush1.msra.mxu0 0.0
    %3678 = vmatprep.mubr.f32.mxu0 0.0
    %3679 = vmatmul.mubr.f32.gmra.mrb[0].mxu0 %v3609
    %v3680 = vpop.f32.mrb[0].mxu0
    %v3681 = vadd.f32 0.0, %v3680
    %v3682 = vpop.f32.mrb[0].mxu0
    %3683 = vmatprep.mubr.f32.mxu0 0.0
    %3684 = vmatmul.mubr.f32.gmra.mrb[0].mxu0 %v3612
    %v3685 = vpop.f32.mrb[0].mxu0
    %v3686 = vadd.f32 0.0, %v3685
    %v3687 = vpop.f32.mrb[0].mxu0
    %3688 = vdwg.mxu0
    %v3689 = vadd.f32 %v3453, %v3681
    %v3690 = vadd.f32 %v3454, %v3686
    %v3691 = vlaneseq
    %v3692 = vshrl.u32 %v3691, 7
    %v3693 = vsub.s32 0, %v3692
    %v3694 = vrot.slane %v109, %v3693
    %v3695 = vadd.f32 %v3689, %v3694
    %v3696 = vadd.f32 %v3690, %v3694
    %v3697 = vadd.f32 %v1970, %v3695
    %v3698 = vadd.f32 %v1971, %v3696
    %v3699 = vsel %vm121, %v3697, 0.0
    %3700 = vadd.xlane.f32.xlu0 %v3699
    %v3701 = vpop.xlane.xlu0 %3700
    %v3702 = vsel %vm121, %v3698, 0.0
    %3703 = vadd.xlane.f32.xlu0 %v3702
    %v3704 = vpop.xlane.xlu0 %3703
    %v3705 = vmul.f32 %v3701, %v1939
    %v3706 = vmul.f32 %v3704, %v1939
    %v3707 = vsub.f32 %v3697, %v3705
    %v3708 = vsub.f32 %v3698, %v3706
    %v3709 = vmul.f32 %v3707, %v3707
    %v3710 = vmul.f32 %v3708, %v3708
    %v3711 = vsel %vm121, %v3709, 0.0
    %3712 = vadd.xlane.f32.xlu0 %v3711
    %v3713 = vpop.xlane.xlu0 %3712
    %v3714 = vsel %vm121, %v3710, 0.0
    %3715 = vadd.xlane.f32.xlu0 %v3714
    %v3716 = vpop.xlane.xlu0 %3715
    %v3717 = vmul.f32 %v3713, %v1939
    %v3718 = vmul.f32 %v3716, %v1939
    %v3719 = vadd.f32 %v3717, 1e-05
    %v3720 = vadd.f32 %v3718, 1e-05
    %v3721 = vrsqrt.pop %v3719
    %v3722 = vrsqrt.pop %v3720
    %v3723 = vmul.f32 %v3707, %v3721
    %v3724 = vmul.f32 %v3708, %v3722
    %v3725 = vlaneseq
    %v3726 = vshrl.u32 %v3725, 7
    %v3727 = vsub.s32 0, %v3726
    %v3728 = vrot.slane %v113, %v3727
    %v3729 = vmul.f32 %v3723, %v3728
    %v3730 = vmul.f32 %v3724, %v3728
    %v3731 = vlaneseq
    %v3732 = vshrl.u32 %v3731, 7
    %v3733 = vsub.s32 0, %v3732
    %v3734 = vrot.slane %v114, %v3733
    %v3735 = vadd.f32 %v3729, %v3734
    %v3736 = vadd.f32 %v3730, %v3734
    %3737 = vst.msk [vmem:[#allocation9] sm:$0xff] %vm291, %v2743
    %3738 = vst.msk [vmem:[#allocation9 + $0x8] sm:$0xff] %vm291, %v2745
    %3739 = vst.msk [vmem:[#allocation9 + $0x10] sm:$0xff] %vm291, %v2747
    %3740 = vst.msk [vmem:[#allocation9 + $0x18] sm:$0xff] %vm291, %v2749
    %3741 = vst.msk [vmem:[#allocation9 + $0x20] sm:$0xff] %vm291, %v2744
    %3742 = vst.msk [vmem:[#allocation9 + $0x28] sm:$0xff] %vm291, %v2746
    %3743 = vst.msk [vmem:[#allocation9 + $0x30] sm:$0xff] %vm291, %v2748
    %3744 = vst.msk [vmem:[#allocation9 + $0x38] sm:$0xff] %vm291, %v2750
    %v3745 = vlaneseq
    %v3746 = vshrl.u32 %v3745, 7
    %v3747 = vsub.s32 0, %v3746
    %v3748 = vrot.slane %v107, %v3747
    %v3750 = vsel %vm121, %v3735, 0
    %v3753 = vsel %vm121, %v3736, 0
    %3755 = vmatprep.subr.mxu0 0.0
    %3756 = vmatpush1.msra.mxu0 %v92
    %3757 = vmatprep.subr.mxu0 0.0
    %3758 = vmatpush1.msra.mxu0 %v93
    %3759 = vmatprep.subr.mxu0 0.0
    %3760 = vmatpush1.msra.mxu0 %v94
    %3761 = vmatprep.subr.mxu0 0.0
    %3762 = vmatpush1.msra.mxu0 %v95
    %3763 = vmatprep.subr.mxu0 0.0
    %3764 = vmatpush1.msra.mxu0 0.0
    %3765 = vmatprep.subr.mxu0 0.0
    %3766 = vmatpush1.msra.mxu0 0.0
    %3767 = vmatprep.subr.mxu0 0.0
    %3768 = vmatpush1.msra.mxu0 0.0
    %3769 = vmatprep.subr.mxu0 0.0
    %3770 = vmatpush1.msra.mxu0 0.0
    %3771 = vmatprep.subr.mxu0 0.0
    %3772 = vmatpush1.msra.mxu0 0.0
    %3773 = vmatprep.subr.mxu0 0.0
    %3774 = vmatpush1.msra.mxu0 0.0
    %3775 = vmatprep.subr.mxu0 0.0
    %3776 = vmatpush1.msra.mxu0 0.0
    %3777 = vmatprep.subr.mxu0 0.0
    %3778 = vmatpush1.msra.mxu0 0.0
    %3779 = vmatprep.subr.mxu0 0.0
    %3780 = vmatpush1.msra.mxu0 0.0
    %3781 = vmatprep.subr.mxu0 0.0
    %3782 = vmatpush1.msra.mxu0 0.0
    %3783 = vmatprep.subr.mxu0 0.0
    %3784 = vmatpush1.msra.mxu0 0.0
    %3785 = vmatprep.subr.mxu0 0.0
    %3786 = vmatpush1.msra.mxu0 0.0
    %3787 = vmatprep.subr.mxu0 0.0
    %3788 = vmatpush1.msra.mxu0 0.0
    %3789 = vmatprep.subr.mxu0 0.0
    %3790 = vmatpush1.msra.mxu0 0.0
    %3791 = vmatprep.subr.mxu0 0.0
    %3792 = vmatpush1.msra.mxu0 0.0
    %3793 = vmatprep.subr.mxu0 0.0
    %3794 = vmatpush1.msra.mxu0 0.0
    %3795 = vmatprep.subr.mxu0 0.0
    %3796 = vmatpush1.msra.mxu0 0.0
    %3797 = vmatprep.subr.mxu0 0.0
    %3798 = vmatpush1.msra.mxu0 0.0
    %3799 = vmatprep.subr.mxu0 0.0
    %3800 = vmatpush1.msra.mxu0 0.0
    %3801 = vmatprep.subr.mxu0 0.0
    %3802 = vmatpush1.msra.mxu0 0.0
    %3803 = vmatprep.subr.mxu0 0.0
    %3804 = vmatpush1.msra.mxu0 0.0
    %3805 = vmatprep.subr.mxu0 0.0
    %3806 = vmatpush1.msra.mxu0 0.0
    %3807 = vmatprep.subr.mxu0 0.0
    %3808 = vmatpush1.msra.mxu0 0.0
    %3809 = vmatprep.subr.mxu0 0.0
    %3810 = vmatpush1.msra.mxu0 0.0
    %3811 = vmatprep.subr.mxu0 0.0
    %3812 = vmatpush1.msra.mxu0 0.0
    %3813 = vmatprep.subr.mxu0 0.0
    %3814 = vmatpush1.msra.mxu0 0.0
    %3815 = vmatprep.subr.mxu0 0.0
    %3816 = vmatpush1.msra.mxu0 0.0
    %3817 = vmatprep.subr.mxu0 0.0
    %3818 = vmatpush1.msra.mxu0 0.0
    %3819 = vmatprep.mubr.f32.mxu0 0.0
    %3820 = vmatmul.mubr.f32.gmra.mrb[0].mxu0 %v3750
    %v3821 = vpop.f32.mrb[0].mxu0
    %v3822 = vadd.f32 %v3748, %v3821
    %v3823 = vpop.f32.mrb[0].mxu0
    %3824 = vmatprep.mubr.f32.mxu0 0.0
    %3825 = vmatmul.mubr.f32.gmra.mrb[0].mxu0 %v3753
    %v3826 = vpop.f32.mrb[0].mxu0
    %v3827 = vadd.f32 %v3748, %v3826
    %v3828 = vpop.f32.mrb[0].mxu0
    %3829 = vdwg.mxu0
    %v3830 = vmax.f32 %v3822, 0.0
    %v3831 = vmax.f32 %v3827, 0.0
    %v3832 = vlaneseq
    %v3833 = vshrl.u32 %v3832, 7
    %v3834 = vsub.s32 0, %v3833
    %v3835 = vrot.slane %v110, %v3834
    %vm3836 = vcmask 523264
    %v3838 = vsel %vm3836, %v3830, 0
    %v3841 = vsel %vm3836, %v3831, 0
    %3843 = vmatprep.subr.mxu0 0.0
    %3844 = vmatpush1.msra.mxu0 %v96
    %3845 = vmatprep.subr.mxu0 0.0
    %3846 = vmatpush1.msra.mxu0 %v97
    %3847 = vmatprep.subr.mxu0 0.0
    %3848 = vmatpush1.msra.mxu0 %v98
    %3849 = vmatprep.subr.mxu0 0.0
    %3850 = vmatpush1.msra.mxu0 %v99
    %3851 = vmatprep.subr.mxu0 0.0
    %3852 = vmatpush1.msra.mxu0 %v100
    %3853 = vmatprep.subr.mxu0 0.0
    %3854 = vmatpush1.msra.mxu0 %v101
    %3855 = vmatprep.subr.mxu0 0.0
    %3856 = vmatpush1.msra.mxu0 %v102
    %3857 = vmatprep.subr.mxu0 0.0
    %3858 = vmatpush1.msra.mxu0 %v103
    %3859 = vmatprep.subr.mxu0 0.0
    %3860 = vmatpush1.msra.mxu0 0.0
    %3861 = vmatprep.subr.mxu0 0.0
    %3862 = vmatpush1.msra.mxu0 0.0
    %3863 = vmatprep.subr.mxu0 0.0
    %3864 = vmatpush1.msra.mxu0 0.0
    %3865 = vmatprep.subr.mxu0 0.0
    %3866 = vmatpush1.msra.mxu0 0.0
    %3867 = vmatprep.subr.mxu0 0.0
    %3868 = vmatpush1.msra.mxu0 0.0
    %3869 = vmatprep.subr.mxu0 0.0
    %3870 = vmatpush1.msra.mxu0 0.0
    %3871 = vmatprep.subr.mxu0 0.0
    %3872 = vmatpush1.msra.mxu0 0.0
    %3873 = vmatprep.subr.mxu0 0.0
    %3874 = vmatpush1.msra.mxu0 0.0
    %3875 = vmatprep.subr.mxu0 0.0
    %3876 = vmatpush1.msra.mxu0 0.0
    %3877 = vmatprep.subr.mxu0 0.0
    %3878 = vmatpush1.msra.mxu0 0.0
    %3879 = vmatprep.subr.mxu0 0.0
    %3880 = vmatpush1.msra.mxu0 0.0
    %3881 = vmatprep.subr.mxu0 0.0
    %3882 = vmatpush1.msra.mxu0 0.0
    %3883 = vmatprep.subr.mxu0 0.0
    %3884 = vmatpush1.msra.mxu0 0.0
    %3885 = vmatprep.subr.mxu0 0.0
    %3886 = vmatpush1.msra.mxu0 0.0
    %3887 = vmatprep.subr.mxu0 0.0
    %3888 = vmatpush1.msra.mxu0 0.0
    %3889 = vmatprep.subr.mxu0 0.0
    %3890 = vmatpush1.msra.mxu0 0.0
    %3891 = vmatprep.subr.mxu0 0.0
    %3892 = vmatpush1.msra.mxu0 0.0
    %3893 = vmatprep.subr.mxu0 0.0
    %3894 = vmatpush1.msra.mxu0 0.0
    %3895 = vmatprep.subr.mxu0 0.0
    %3896 = vmatpush1.msra.mxu0 0.0
    %3897 = vmatprep.subr.mxu0 0.0
    %3898 = vmatpush1.msra.mxu0 0.0
    %3899 = vmatprep.subr.mxu0 0.0
    %3900 = vmatpush1.msra.mxu0 0.0
    %3901 = vmatprep.subr.mxu0 0.0
    %3902 = vmatpush1.msra.mxu0 0.0
    %3903 = vmatprep.subr.mxu0 0.0
    %3904 = vmatpush1.msra.mxu0 0.0
    %3905 = vmatprep.subr.mxu0 0.0
    %3906 = vmatpush1.msra.mxu0 0.0
    %3907 = vmatprep.mubr.f32.mxu0 0.0
    %3908 = vmatmul.mubr.f32.gmra.mrb[0].mxu0 %v3838
    %v3909 = vpop.f32.mrb[0].mxu0
    %v3910 = vadd.f32 %v3835, %v3909
    %v3911 = vpop.f32.mrb[0].mxu0
    %3912 = vmatprep.mubr.f32.mxu0 0.0
    %3913 = vmatmul.mubr.f32.gmra.mrb[0].mxu0 %v3841
    %v3914 = vpop.f32.mrb[0].mxu0
    %v3915 = vadd.f32 %v3835, %v3914
    %v3916 = vpop.f32.mrb[0].mxu0
    %3917 = vdwg.mxu0
    %v3918 = vadd.f32 %v3735, %v3910
    %v3919 = vadd.f32 %v3736, %v3915
    %v3920 = vsel %vm121, %v3918, 0.0
    %3921 = vadd.xlane.f32.xlu0 %v3920
    %v3922 = vpop.xlane.xlu0 %3921
    %v3923 = vsel %vm121, %v3919, 0.0
    %3924 = vadd.xlane.f32.xlu0 %v3923
    %v3925 = vpop.xlane.xlu0 %3924
    %v3926 = vmul.f32 %v3922, %v1939
    %v3927 = vmul.f32 %v3925, %v1939
    %v3928 = vsub.f32 %v3918, %v3926
    %v3929 = vsub.f32 %v3919, %v3927
    %v3930 = vmul.f32 %v3928, %v3928
    %v3931 = vmul.f32 %v3929, %v3929
    %v3932 = vsel %vm121, %v3930, 0.0
    %3933 = vadd.xlane.f32.xlu0 %v3932
    %v3934 = vpop.xlane.xlu0 %3933
    %v3935 = vsel %vm121, %v3931, 0.0
    %3936 = vadd.xlane.f32.xlu0 %v3935
    %v3937 = vpop.xlane.xlu0 %3936
    %v3938 = vmul.f32 %v3934, %v1939
    %v3939 = vmul.f32 %v3937, %v1939
    %v3940 = vadd.f32 %v3938, 1e-05
    %v3941 = vadd.f32 %v3939, 1e-05
    %v3942 = vrsqrt.pop %v3940
    %v3943 = vrsqrt.pop %v3941
    %v3944 = vmul.f32 %v3928, %v3942
    %v3945 = vmul.f32 %v3929, %v3943
    %v3946 = vlaneseq
    %v3947 = vshrl.u32 %v3946, 7
    %v3948 = vsub.s32 0, %v3947
    %v3949 = vrot.slane %v115, %v3948
    %v3950 = vmul.f32 %v3944, %v3949
    %v3951 = vmul.f32 %v3945, %v3949
    %v3952 = vlaneseq
    %v3953 = vshrl.u32 %v3952, 7
    %v3954 = vsub.s32 0, %v3953
    %v3955 = vrot.slane %v116, %v3954
    %v3956 = vadd.f32 %v3950, %v3955
    %v3957 = vadd.f32 %v3951, %v3955
    %3958 = vst.msk [vmem:[#allocation8] sm:$0xff] %vm121, %v3956
    %3959 = vst.msk [vmem:[#allocation8 + $0x8] sm:$0xff] %vm121, %v3957
    // Predicated region
    $region38: #{decoder_layer.1} parent=1 // pred_check
      _
    $region39: #{decoder_layer.1} parent=1 // pred_check_branch
      %3961 = sbr.rel (0) target = $region41
    $region40: #{decoder_layer.1} parent=1 // pred_region
      %s3963 = ssub.s32 256, 256
      %3964 = vsyncadd [#allocation4], %s3963
      %s3965 = sshll.u32 [#allocation8], 4
      %s3966 = int_to_ptr.vmem [resolvable:$true] %s3965
      %3971 = dma.vmem_to_hbm [thread:$0]  %s3966, 256, %s6, [#allocation4], 128, 128, 8
    $region41: #{decoder_layer.1} parent=1 // pred_fallthru
      _
    // Predicated region
    $region42: #{decoder_layer.1} parent=1 // pred_check
      _
    $region43: #{decoder_layer.1} parent=1 // pred_check_branch
      %3973 = sbr.rel (0) target = $region45
    $region44: #{decoder_layer.1} parent=1 // pred_region
      %s3975 = ssub.s32 1024, 1024
      %3976 = vsyncadd [#allocation10], %s3975
      %s3977 = sshll.u32 [#allocation9], 4
      %s3978 = int_to_ptr.vmem [resolvable:$true] %s3977
      %3983 = dma.vmem_to_hbm [thread:$0]  %s3978, 1024, %s7, [#allocation10], 128, 128, 8
    $region45: #{decoder_layer.1} parent=1 // pred_fallthru
      _
    // Predicated region
    $region46: #{decoder_layer.1} parent=1 // pred_check
      _
    $region47: #{decoder_layer.1} parent=1 // pred_check_branch
      %3985 = sbr.rel (0) target = $region49
    $region48: #{decoder_layer.1} parent=1 // pred_region
      %3986 = dma.done [#allocation4], 256
    $region49: #{decoder_layer.1} parent=1 // pred_fallthru
      _
    // Predicated region
    $region50: #{decoder_layer.1} parent=1 // pred_check
      _
    $region51: #{decoder_layer.1} parent=1 // pred_check_branch
      %3988 = sbr.rel (0) target = $region53
    $region52: #{decoder_layer.1} parent=1 // pred_region
      %3989 = dma.done [#allocation10], 1024
    $region53: #{decoder_layer.1} parent=1 // pred_fallthru
      _
    %3990 = vsyncpa [#allocation3], 1
    %3991 = vsyncpa [#allocation6], 1
    %3992 = vsyncpa [#allocation4], 1
    %3993 = vsyncpa [#allocation10], 1

</llo_original>
